<compile_context>
chip_gen: v5e
topology: v5e:2x2
jax: 0.10.0
libtpu: 0.0.40
codegen_flags: <defaults>
</compile_context>

<pallas_src>
import jax
import jax.numpy as jnp
import numpy as np
from jax.experimental import pallas as pl
from jax.experimental.pallas import tpu as pltpu


# ----------------------------------------------------------------------------
# Pallas kernel: out = relu(a @ w.T + bias)
#   a: (TM, K) bf16 activations       (K in lanes)
#   w: (TC, K) bf16 lane-dense weight (K in lanes -> NT contraction on the MXU)
#   accumulation in f32 via preferred_element_type
# ----------------------------------------------------------------------------
def _nt_linear_bias_relu_kernel(a_ref, w_ref, b_ref, o_ref):
    acc = jax.lax.dot_general(
        a_ref[...], w_ref[...],
        dimension_numbers=(((1,), (1,)), ((), ())),     # contract last dims (NT)
        preferred_element_type=jnp.float32)             # (TM, TC) f32
    acc = acc + b_ref[...]
    o_ref[...] = jnp.maximum(acc, 0.0).astype(o_ref.dtype)


def linear_nt_bias_relu(a, w, bias, *, tm=64, tc=1024):
    """relu(a @ w.T + bias) with w kept in the PyTorch (out, in) layout.

    a:    (R, K)  bf16 activations
    w:    (C, K)  bf16 weight, lane-dense (K is the minor/lane dim)
    bias: (C,)    f32
    Rows are tiled in blocks of `tm`; columns only if C > `tc` (C = 54 here, so
    a single column tile).  K is never tiled: the whole 22500-long contraction
    is one MXU call per block, and the weight block index is constant across
    the row axis so it is DMA'd once.
    """
    R, K = a.shape
    C, K2 = w.shape
    assert K == K2, (K, K2)
    bias2d = bias.reshape(1, C).astype(jnp.float32)

    tm_eff = min(tm, R)
    tc_eff = min(tc, C)
    grid = (pl.cdiv(R, tm_eff), pl.cdiv(C, tc_eff))

    return pl.pallas_call(
        _nt_linear_bias_relu_kernel,
        out_shape=jax.ShapeDtypeStruct((R, C), jnp.float32),
        grid_spec=pltpu.PrefetchScalarGridSpec(
            num_scalar_prefetch=0,
            grid=grid,
            in_specs=[
                pl.BlockSpec((tm_eff, K), lambda i, j: (i, 0)),    # LHS row tile
                pl.BlockSpec((tc_eff, K), lambda i, j: (j, 0)),    # lane-dense W tile
                pl.BlockSpec((1, tc_eff), lambda i, j: (0, j)),    # bias tile
            ],
            out_specs=pl.BlockSpec((tm_eff, tc_eff), lambda i, j: (i, j)),
        ),
        compiler_params=pltpu.CompilerParams(
            dimension_semantics=("parallel", "parallel")),
    )(a, w, bias2d)


# ----------------------------------------------------------------------------
# Forward pass of LN_grating
# ----------------------------------------------------------------------------
def ln_grating_forward(x, params):
    N, H, W = x.shape
    # F.avg_pool2d(x, 4): non-overlapping 4x4 mean; with flatten + bf16 cast it
    # fuses into a single mem-bound XLA pass whose output is 16x smaller than
    # the input (see TODO at top for why it is not pulled into the kernel).
    pooled = x.reshape(N, H // 4, 4, W // 4, 4).mean(axis=(2, 4))
    flat = pooled.reshape(N, -1).astype(jnp.bfloat16)        # torch.flatten(x, 1)
    return linear_nt_bias_relu(flat, params["fc_w_bf16"], params["fc_b"])


# ----------------------------------------------------------------------------
# Deterministic parameter init (PyTorch nn.Linear default init)
# ----------------------------------------------------------------------------
def init_params(key):
    in_f, out_f = 150 * 150, 54
    kw, kb = jax.random.split(key)
    bound = 1.0 / np.sqrt(in_f)
    w = jax.random.uniform(kw, (out_f, in_f), jnp.float32, -bound, bound)
    b = jax.random.uniform(kb, (out_f,), jnp.float32, -bound, bound)
    return {
        "fc_w": w,                            # f32 reference copy, (out, in) layout
        "fc_w_bf16": w.astype(jnp.bfloat16),  # lane-dense kernel weight (NO transpose)
        "fc_b": b,                            # f32 bias
    }


# ----------------------------------------------------------------------------
# Pure-JAX f32 reference for the correctness check
# ----------------------------------------------------------------------------
def reference_forward(x, p):
    N, H, W = x.shape
    pooled = x.reshape(N, H // 4, 4, W // 4, 4).mean(axis=(2, 4))
    flat = pooled.reshape(N, -1)
    y = jnp.dot(flat, p["fc_w"].T,
                precision=jax.lax.Precision.HIGHEST) + p["fc_b"]
    return jax.nn.relu(y)


if __name__ == "__main__":
    key = jax.random.PRNGKey(0)
    kx, kp = jax.random.split(key)

    # fc.in_features = 150*150 forces 600x600 images (avg_pool2d(4) -> 150x150);
    # batch kept small (N=2).
    x = jax.random.normal(kx, (2, 600, 600), jnp.float32)
    params = init_params(kp)

    fwd = jax.jit(ln_grating_forward)
    out = jax.block_until_ready(fwd(x, params))
    assert out.shape == (2, 54), out.shape
    assert bool(jnp.all(jnp.isfinite(out)))
    assert bool(jnp.all(out >= 0.0))             # ReLU

    ref = jax.block_until_ready(jax.jit(reference_forward)(x, params))
    rel_err = float(jnp.max(jnp.abs(out - ref)) / (jnp.max(jnp.abs(ref)) + 1e-6))
    assert rel_err < 2e-2, f"mismatch vs reference: rel-max-err={rel_err}"

    print("KERNEL_OK")
</pallas_src>

<mosaic_0001>
module attributes {stable_mosaic.version = 11 : i64} {
  func.func @_nt_linear_bias_relu_kernel(%arg0: i32, %arg1: i32, %arg2: memref<2x22500xbf16, #tpu.memory_space<vmem>>, %arg3: memref<54x22500xbf16, #tpu.memory_space<vmem>>, %arg4: memref<1x54xf32, #tpu.memory_space<vmem>>, %arg5: memref<2x54xf32, #tpu.memory_space<vmem>>) attributes {dimension_semantics = [#tpu.dimension_semantics<parallel>, #tpu.dimension_semantics<parallel>], iteration_bounds = array<i64: 1, 1>, scalar_prefetch = 0 : i64, scratch_operands = 0 : i64, tpu.core_type = #tpu.core_type<tc>, window_params = [{transform_indices = @transform_0, window_bounds = array<i64: 2, 22500>}, {transform_indices = @transform_1, window_bounds = array<i64: 54, 22500>}, {transform_indices = @transform_2, window_bounds = array<i64: 1, 54>}, {transform_indices = @transform_3, window_bounds = array<i64: 2, 54>}]} {
    %c0 = arith.constant 0 : index
    %c0_0 = arith.constant 0 : index
    %0 = vector.load %arg2[%c0, %c0_0] : memref<2x22500xbf16, #tpu.memory_space<vmem>>, vector<2x22500xbf16>
    %c0_1 = arith.constant 0 : index
    %c0_2 = arith.constant 0 : index
    %1 = vector.load %arg3[%c0_1, %c0_2] : memref<54x22500xbf16, #tpu.memory_space<vmem>>, vector<54x22500xbf16>
    %cst = arith.constant dense<0.000000e+00> : vector<2x54xf32>
    %2 = tpu.matmul %0, %1, %cst {dimension_numbers = #tpu.dot_dimension_numbers<[1], [1], [0], [0], [0, 0, 1, 0], [], []>} : vector<2x22500xbf16>, vector<54x22500xbf16>, vector<2x54xf32> -> vector<2x54xf32>
    %c0_3 = arith.constant 0 : index
    %c0_4 = arith.constant 0 : index
    %3 = vector.load %arg4[%c0_3, %c0_4] : memref<1x54xf32, #tpu.memory_space<vmem>>, vector<1x54xf32>
    %4 = vector.broadcast %3 : vector<1x54xf32> to vector<2x54xf32>
    %5 = arith.addf %2, %4 : vector<2x54xf32>
    %cst_5 = arith.constant 0.000000e+00 : f32
    %6 = vector.broadcast %cst_5 : f32 to vector<2x54xf32>
    %7 = arith.maximumf %5, %6 : vector<2x54xf32>
    %c0_6 = arith.constant 0 : index
    %c0_7 = arith.constant 0 : index
    %8 = vector.load %arg5[%c0_6, %c0_7] : memref<2x54xf32, #tpu.memory_space<vmem>>, vector<2x54xf32>
    tpu.vector_store %arg5[%c0_6, %c0_7], %7 {strides = array<i32>} : memref<2x54xf32, #tpu.memory_space<vmem>>, vector<2x54xf32>,
    return
  }
  func.func @transform_0(%arg0: i32, %arg1: i32) -> (i32, i32) {
    %c0_i32 = arith.constant 0 : i32
    %c0_i32_0 = arith.constant 0 : i32
    return %arg0, %c0_i32 : i32, i32
  }
  func.func @transform_1(%arg0: i32, %arg1: i32) -> (i32, i32) {
    %c0_i32 = arith.constant 0 : i32
    %c0_i32_0 = arith.constant 0 : i32
    return %arg1, %c0_i32 : i32, i32
  }
  func.func @transform_2(%arg0: i32, %arg1: i32) -> (i32, i32) {
    %c0_i32 = arith.constant 0 : i32
    %c0_i32_0 = arith.constant 0 : i32
    return %c0_i32, %arg1 : i32, i32
  }
  func.func @transform_3(%arg0: i32, %arg1: i32) -> (i32, i32) {
    %c0_i32 = arith.constant 0 : i32
    return %arg0, %arg1 : i32, i32
  }
}

</mosaic_0001>

<llo_original>
// kernel: ln_grating_forward.1
$region0: #{ln_grating_forward.1}
  #allocation0 [shape = 'u32[]', space=smem, size = 0x4, offset = 0x4, fixed_abs, tag = 'smem constant byte address 0x4 - core index']
  #allocation1 [shape = 'u32[72,128]{1,0:T(1,128)}', space=vmem, size = 0x9000, scoped, tag = 'internal scratch']
  %s0 = inlined_call_operand.vmem [shape: bf16[2,22500], index: 0, kind: input, shape index: {}]
  %s1 = inlined_call_operand.vmem [shape: bf16[54,22500], index: 1, kind: input, shape index: {}]
  %s2 = inlined_call_operand.vmem [shape: f32[1,54], index: 2, kind: input, shape index: {}]
  %s3 = inlined_call_operand.hbm [shape: f32[2,54], index: 3, kind: output, shape index: {}]
  %s4 = sld [smem:[#allocation0]]
  $region22: #{ln_grating_forward.1} parent=0
    _
  %s6 = ssub.s32 1, %s4
  %s7 = scalar_select 0, %s6, %s4
  $region1: #{ln_grating_forward.1} parent=0
    #allocation2 [shape = 'u8[1024]{0}', space=vmem, size = 0x400, scoped, tag = 'output window, operand 0, single buffered']
    #allocation3 [shape = 's32[1]{0}', space=sflag, size = 0x4, scoped, tag = 'scoped memory for ln_grating_forward.1']
    %8 = vsyncpa [#allocation3], 0
    // Predicated region
    $region2: #{ln_grating_forward.1} parent=1 // pred_check
      _
    $region3: #{ln_grating_forward.1} parent=1 // pred_check_branch
      %10 = sbr.rel (0) target = $region5
    $region4: #{ln_grating_forward.1} parent=1 // pred_region
      _
    $region5: #{ln_grating_forward.1} parent=1 // pred_fallthru
      _
    // Predicated region
    $region6: #{ln_grating_forward.1} parent=1 // pred_check
      _
    $region7: #{ln_grating_forward.1} parent=1 // pred_check_branch
      %12 = sbr.rel (0) target = $region9
    $region8: #{ln_grating_forward.1} parent=1 // pred_region
      _
    $region9: #{ln_grating_forward.1} parent=1 // pred_fallthru
      _
    // Predicated region
    $region10: #{ln_grating_forward.1} parent=1 // pred_check
      _
    $region11: #{ln_grating_forward.1} parent=1 // pred_check_branch
      %14 = sbr.rel (0) target = $region13
    $region12: #{ln_grating_forward.1} parent=1 // pred_region
      _
    $region13: #{ln_grating_forward.1} parent=1 // pred_fallthru
      _
    %v16 = vld [vmem:[%s0] sm:$0xff]
    %v17 = vld [vmem:[%s0 + $0x8] sm:$0xff]
    %v18 = vld [vmem:[%s0 + $0x10] sm:$0xff]
    %v19 = vld [vmem:[%s0 + $0x18] sm:$0xff]
    %v20 = vld [vmem:[%s0 + $0x20] sm:$0xff]
    %v21 = vld [vmem:[%s0 + $0x28] sm:$0xff]
    %v22 = vld [vmem:[%s0 + $0x30] sm:$0xff]
    %v23 = vld [vmem:[%s0 + $0x38] sm:$0xff]
    %v24 = vld [vmem:[%s0 + $0x40] sm:$0xff]
    %v25 = vld [vmem:[%s0 + $0x48] sm:$0xff]
    %v26 = vld [vmem:[%s0 + $0x50] sm:$0xff]
    %v27 = vld [vmem:[%s0 + $0x58] sm:$0xff]
    %v28 = vld [vmem:[%s0 + $0x60] sm:$0xff]
    %v29 = vld [vmem:[%s0 + $0x68] sm:$0xff]
    %v30 = vld [vmem:[%s0 + $0x70] sm:$0xff]
    %v31 = vld [vmem:[%s0 + $0x78] sm:$0xff]
    %v32 = vld [vmem:[%s0 + $0x80] sm:$0xff]
    %v33 = vld [vmem:[%s0 + $0x88] sm:$0xff]
    %v34 = vld [vmem:[%s0 + $0x90] sm:$0xff]
    %v35 = vld [vmem:[%s0 + $0x98] sm:$0xff]
    %v36 = vld [vmem:[%s0 + $0xa0] sm:$0xff]
    %v37 = vld [vmem:[%s0 + $0xa8] sm:$0xff]
    %v38 = vld [vmem:[%s1] sm:$0xff]
    %v39 = vld [vmem:[%s1 + $0x8] sm:$0xff]
    %v40 = vld [vmem:[%s1 + $0x10] sm:$0xff]
    %v41 = vld [vmem:[%s1 + $0x18] sm:$0xff]
    %v42 = vld [vmem:[%s1 + $0x20] sm:$0xff]
    %v43 = vld [vmem:[%s1 + $0x28] sm:$0xff]
    %v44 = vld [vmem:[%s1 + $0x30] sm:$0xff]
    %v45 = vld [vmem:[%s1 + $0x38] sm:$0xff]
    %v46 = vld [vmem:[%s1 + $0x40] sm:$0xff]
    %v47 = vld [vmem:[%s1 + $0x48] sm:$0xff]
    %v48 = vld [vmem:[%s1 + $0x50] sm:$0xff]
    %v49 = vld [vmem:[%s1 + $0x58] sm:$0xff]
    %v50 = vld [vmem:[%s1 + $0x60] sm:$0xff]
    %v51 = vld [vmem:[%s1 + $0x68] sm:$0xff]
    %v52 = vld [vmem:[%s1 + $0x70] sm:$0xff]
    %v53 = vld [vmem:[%s1 + $0x78] sm:$0xff]
    %v54 = vld [vmem:[%s1 + $0x80] sm:$0xff]
    %v55 = vld [vmem:[%s1 + $0x88] sm:$0xff]
    %v56 = vld [vmem:[%s1 + $0x90] sm:$0xff]
    %v57 = vld [vmem:[%s1 + $0x98] sm:$0xff]
    %v58 = vld [vmem:[%s1 + $0xa0] sm:$0xff]
    %v59 = vld [vmem:[%s1 + $0xa8] sm:$0xff]
    %v60 = vld [vmem:[%s1 + $0xb0] sm:$0xff]
    %v61 = vld [vmem:[%s1 + $0xb8] sm:$0xff]
    %v62 = vld [vmem:[%s1 + $0xc0] sm:$0xff]
    %v63 = vld [vmem:[%s1 + $0xc8] sm:$0xff]
    %v64 = vld [vmem:[%s1 + $0xd0] sm:$0xff]
    %v65 = vld [vmem:[%s1 + $0xd8] sm:$0xff]
    %v66 = vld [vmem:[%s1 + $0xe0] sm:$0xff]
    %v67 = vld [vmem:[%s1 + $0xe8] sm:$0xff]
    %v68 = vld [vmem:[%s1 + $0xf0] sm:$0xff]
    %v69 = vld [vmem:[%s1 + $0xf8] sm:$0xff]
    %v70 = vld [vmem:[%s1 + $0x100] sm:$0xff]
    %v71 = vld [vmem:[%s1 + $0x108] sm:$0xff]
    %v72 = vld [vmem:[%s1 + $0x110] sm:$0xff]
    %v73 = vld [vmem:[%s1 + $0x118] sm:$0xff]
    %v74 = vld [vmem:[%s1 + $0x120] sm:$0xff]
    %v75 = vld [vmem:[%s1 + $0x128] sm:$0xff]
    %v76 = vld [vmem:[%s1 + $0x130] sm:$0xff]
    %v77 = vld [vmem:[%s1 + $0x138] sm:$0xff]
    %v78 = vld [vmem:[%s1 + $0x140] sm:$0xff]
    %v79 = vld [vmem:[%s1 + $0x148] sm:$0xff]
    %v80 = vld [vmem:[%s1 + $0x150] sm:$0xff]
    %v81 = vld [vmem:[%s1 + $0x158] sm:$0xff]
    %v82 = vld [vmem:[%s1 + $0x160] sm:$0xff]
    %v83 = vld [vmem:[%s1 + $0x168] sm:$0xff]
    %v84 = vld [vmem:[%s1 + $0x170] sm:$0xff]
    %v85 = vld [vmem:[%s1 + $0x178] sm:$0xff]
    %v86 = vld [vmem:[%s1 + $0x180] sm:$0xff]
    %v87 = vld [vmem:[%s1 + $0x188] sm:$0xff]
    %v88 = vld [vmem:[%s1 + $0x190] sm:$0xff]
    %v89 = vld [vmem:[%s1 + $0x198] sm:$0xff]
    %v90 = vld [vmem:[%s1 + $0x1a0] sm:$0xff]
    %v91 = vld [vmem:[%s1 + $0x1a8] sm:$0xff]
    %v92 = vld [vmem:[%s1 + $0x1b0] sm:$0xff]
    %v93 = vld [vmem:[%s1 + $0x1b8] sm:$0xff]
    %v94 = vld [vmem:[%s1 + $0x1c0] sm:$0xff]
    %v95 = vld [vmem:[%s1 + $0x1c8] sm:$0xff]
    %v96 = vld [vmem:[%s1 + $0x1d0] sm:$0xff]
    %v97 = vld [vmem:[%s1 + $0x1d8] sm:$0xff]
    %v98 = vld [vmem:[%s1 + $0x1e0] sm:$0xff]
    %v99 = vld [vmem:[%s1 + $0x1e8] sm:$0xff]
    %v100 = vld [vmem:[%s1 + $0x1f0] sm:$0xff]
    %v101 = vld [vmem:[%s1 + $0x1f8] sm:$0xff]
    %v102 = vld [vmem:[%s1 + $0x200] sm:$0xff]
    %v103 = vld [vmem:[%s1 + $0x208] sm:$0xff]
    %v104 = vld [vmem:[%s1 + $0x210] sm:$0xff]
    %v105 = vld [vmem:[%s1 + $0x218] sm:$0xff]
    %v106 = vld [vmem:[%s1 + $0x220] sm:$0xff]
    %v107 = vld [vmem:[%s1 + $0x228] sm:$0xff]
    %v108 = vld [vmem:[%s1 + $0x230] sm:$0xff]
    %v109 = vld [vmem:[%s1 + $0x238] sm:$0xff]
    %v110 = vld [vmem:[%s1 + $0x240] sm:$0xff]
    %v111 = vld [vmem:[%s1 + $0x248] sm:$0xff]
    %v112 = vld [vmem:[%s1 + $0x250] sm:$0xff]
    %v113 = vld [vmem:[%s1 + $0x258] sm:$0xff]
    %v114 = vld [vmem:[%s1 + $0x260] sm:$0xff]
    %v115 = vld [vmem:[%s1 + $0x268] sm:$0xff]
    %v116 = vld [vmem:[%s1 + $0x270] sm:$0xff]
    %v117 = vld [vmem:[%s1 + $0x278] sm:$0xff]
    %v118 = vld [vmem:[%s1 + $0x280] sm:$0xff]
    %v119 = vld [vmem:[%s1 + $0x288] sm:$0xff]
    %v120 = vld [vmem:[%s1 + $0x290] sm:$0xff]
    %v121 = vld [vmem:[%s1 + $0x298] sm:$0xff]
    %v122 = vld [vmem:[%s1 + $0x2a0] sm:$0xff]
    %v123 = vld [vmem:[%s1 + $0x2a8] sm:$0xff]
    %v124 = vld [vmem:[%s1 + $0x2b0] sm:$0xff]
    %v125 = vld [vmem:[%s1 + $0x2b8] sm:$0xff]
    %v126 = vld [vmem:[%s1 + $0x2c0] sm:$0xff]
    %v127 = vld [vmem:[%s1 + $0x2c8] sm:$0xff]
    %v128 = vld [vmem:[%s1 + $0x2d0] sm:$0xff]
    %v129 = vld [vmem:[%s1 + $0x2d8] sm:$0xff]
    %v130 = vld [vmem:[%s1 + $0x2e0] sm:$0xff]
    %v131 = vld [vmem:[%s1 + $0x2e8] sm:$0xff]
    %v132 = vld [vmem:[%s1 + $0x2f0] sm:$0xff]
    %v133 = vld [vmem:[%s1 + $0x2f8] sm:$0xff]
    %v134 = vld [vmem:[%s1 + $0x300] sm:$0xff]
    %v135 = vld [vmem:[%s1 + $0x308] sm:$0xff]
    %v136 = vld [vmem:[%s1 + $0x310] sm:$0xff]
    %v137 = vld [vmem:[%s1 + $0x318] sm:$0xff]
    %v138 = vld [vmem:[%s1 + $0x320] sm:$0xff]
    %v139 = vld [vmem:[%s1 + $0x328] sm:$0xff]
    %v140 = vld [vmem:[%s1 + $0x330] sm:$0xff]
    %v141 = vld [vmem:[%s1 + $0x338] sm:$0xff]
    %v142 = vld [vmem:[%s1 + $0x340] sm:$0xff]
    %v143 = vld [vmem:[%s1 + $0x348] sm:$0xff]
    %v144 = vld [vmem:[%s1 + $0x350] sm:$0xff]
    %v145 = vld [vmem:[%s1 + $0x358] sm:$0xff]
    %v146 = vld [vmem:[%s1 + $0x360] sm:$0xff]
    %v147 = vld [vmem:[%s1 + $0x368] sm:$0xff]
    %v148 = vld [vmem:[%s1 + $0x370] sm:$0xff]
    %v149 = vld [vmem:[%s1 + $0x378] sm:$0xff]
    %v150 = vld [vmem:[%s1 + $0x380] sm:$0xff]
    %v151 = vld [vmem:[%s1 + $0x388] sm:$0xff]
    %v152 = vld [vmem:[%s1 + $0x390] sm:$0xff]
    %v153 = vld [vmem:[%s1 + $0x398] sm:$0xff]
    %v154 = vld [vmem:[%s1 + $0x3a0] sm:$0xff]
    %v155 = vld [vmem:[%s1 + $0x3a8] sm:$0xff]
    %v156 = vld [vmem:[%s1 + $0x3b0] sm:$0xff]
    %v157 = vld [vmem:[%s1 + $0x3b8] sm:$0xff]
    %v158 = vld [vmem:[%s1 + $0x3c0] sm:$0xff]
    %v159 = vld [vmem:[%s1 + $0x3c8] sm:$0xff]
    %v160 = vld [vmem:[%s1 + $0x3d0] sm:$0xff]
    %v161 = vld [vmem:[%s1 + $0x3d8] sm:$0xff]
    %v162 = vld [vmem:[%s1 + $0x3e0] sm:$0xff]
    %v163 = vld [vmem:[%s1 + $0x3e8] sm:$0xff]
    %v164 = vld [vmem:[%s1 + $0x3f0] sm:$0xff]
    %v165 = vld [vmem:[%s1 + $0x3f8] sm:$0xff]
    %v166 = vld [vmem:[%s1 + $0x400] sm:$0xff]
    %v167 = vld [vmem:[%s1 + $0x408] sm:$0xff]
    %v168 = vld [vmem:[%s1 + $0x410] sm:$0xff]
    %v169 = vld [vmem:[%s1 + $0x418] sm:$0xff]
    %v170 = vld [vmem:[%s1 + $0x420] sm:$0xff]
    %v171 = vld [vmem:[%s1 + $0x428] sm:$0xff]
    %v172 = vld [vmem:[%s1 + $0x430] sm:$0xff]
    %v173 = vld [vmem:[%s1 + $0x438] sm:$0xff]
    %v174 = vld [vmem:[%s1 + $0x440] sm:$0xff]
    %v175 = vld [vmem:[%s1 + $0x448] sm:$0xff]
    %v176 = vld [vmem:[%s1 + $0x450] sm:$0xff]
    %v177 = vld [vmem:[%s1 + $0x458] sm:$0xff]
    %v178 = vld [vmem:[%s1 + $0x460] sm:$0xff]
    %v179 = vld [vmem:[%s1 + $0x468] sm:$0xff]
    %v180 = vld [vmem:[%s1 + $0x470] sm:$0xff]
    %v181 = vld [vmem:[%s1 + $0x478] sm:$0xff]
    %v182 = vld [vmem:[%s1 + $0x480] sm:$0xff]
    %v183 = vld [vmem:[%s1 + $0x488] sm:$0xff]
    %v184 = vld [vmem:[%s1 + $0x490] sm:$0xff]
    %v185 = vld [vmem:[%s1 + $0x498] sm:$0xff]
    %v186 = vld [vmem:[%s1 + $0x4a0] sm:$0xff]
    %v187 = vld [vmem:[%s1 + $0x4a8] sm:$0xff]
    %v188 = vld [vmem:[%s1 + $0x4b0] sm:$0xff]
    %v189 = vld [vmem:[%s1 + $0x4b8] sm:$0xff]
    %v190 = vld [vmem:[%s1 + $0x4c0] sm:$0xff]
    %v191 = vld [vmem:[%s1 + $0x4c8] sm:$0xff]
    %v192 = vld [vmem:[%s1 + $0x4d0] sm:$0xff]
    %v193 = vld [vmem:[%s1 + $0x4d8] sm:$0xff]
    %v194 = vld [vmem:[%s1 + $0x4e0] sm:$0xff]
    %v195 = vld [vmem:[%s1 + $0x4e8] sm:$0xff]
    %v196 = vld [vmem:[%s1 + $0x4f0] sm:$0xff]
    %v197 = vld [vmem:[%s1 + $0x4f8] sm:$0xff]
    %v198 = vld [vmem:[%s1 + $0x500] sm:$0xff]
    %v199 = vld [vmem:[%s1 + $0x508] sm:$0xff]
    %v200 = vld [vmem:[%s1 + $0x510] sm:$0xff]
    %v201 = vld [vmem:[%s1 + $0x518] sm:$0xff]
    %v202 = vld [vmem:[%s1 + $0x520] sm:$0xff]
    %v203 = vld [vmem:[%s1 + $0x528] sm:$0xff]
    %v204 = vld [vmem:[%s1 + $0x530] sm:$0xff]
    %v205 = vld [vmem:[%s1 + $0x538] sm:$0xff]
    %v206 = vld [vmem:[%s1 + $0x540] sm:$0xff]
    %v207 = vld [vmem:[%s1 + $0x548] sm:$0xff]
    %v208 = vld [vmem:[%s1 + $0x550] sm:$0xff]
    %v209 = vld [vmem:[%s1 + $0x558] sm:$0xff]
    %v210 = vld [vmem:[%s1 + $0x560] sm:$0xff]
    %v211 = vld [vmem:[%s1 + $0x568] sm:$0xff]
    %v212 = vld [vmem:[%s1 + $0x570] sm:$0xff]
    %v213 = vld [vmem:[%s1 + $0x578] sm:$0xff]
    %v214 = vld [vmem:[%s1 + $0x580] sm:$0xff]
    %v215 = vld [vmem:[%s1 + $0x588] sm:$0xff]
    %v216 = vld [vmem:[%s1 + $0x590] sm:$0xff]
    %v217 = vld [vmem:[%s1 + $0x598] sm:$0xff]
    %v218 = vld [vmem:[%s1 + $0x5a0] sm:$0xff]
    %v219 = vld [vmem:[%s1 + $0x5a8] sm:$0xff]
    %v220 = vld [vmem:[%s1 + $0x5b0] sm:$0xff]
    %v221 = vld [vmem:[%s1 + $0x5b8] sm:$0xff]
    %v222 = vld [vmem:[%s1 + $0x5c0] sm:$0xff]
    %v223 = vld [vmem:[%s1 + $0x5c8] sm:$0xff]
    %v224 = vld [vmem:[%s1 + $0x5d0] sm:$0xff]
    %v225 = vld [vmem:[%s1 + $0x5d8] sm:$0xff]
    %v226 = vld [vmem:[%s1 + $0x5e0] sm:$0xff]
    %v227 = vld [vmem:[%s1 + $0x5e8] sm:$0xff]
    %v228 = vld [vmem:[%s1 + $0x5f0] sm:$0xff]
    %v229 = vld [vmem:[%s1 + $0x5f8] sm:$0xff]
    %v230 = vld [vmem:[%s1 + $0x600] sm:$0xff]
    %v231 = vld [vmem:[%s1 + $0x608] sm:$0xff]
    %v232 = vld [vmem:[%s1 + $0x610] sm:$0xff]
    %v233 = vld [vmem:[%s1 + $0x618] sm:$0xff]
    %v234 = vld [vmem:[%s1 + $0x620] sm:$0xff]
    %v235 = vld [vmem:[%s1 + $0x628] sm:$0xff]
    %v236 = vld [vmem:[%s1 + $0x630] sm:$0xff]
    %v237 = vld [vmem:[%s1 + $0x638] sm:$0xff]
    %v238 = vld [vmem:[%s1 + $0x640] sm:$0xff]
    %v239 = vld [vmem:[%s1 + $0x648] sm:$0xff]
    %v240 = vld [vmem:[%s1 + $0x650] sm:$0xff]
    %v241 = vld [vmem:[%s1 + $0x658] sm:$0xff]
    %v242 = vld [vmem:[%s1 + $0x660] sm:$0xff]
    %v243 = vld [vmem:[%s1 + $0x668] sm:$0xff]
    %v244 = vld [vmem:[%s1 + $0x670] sm:$0xff]
    %v245 = vld [vmem:[%s1 + $0x678] sm:$0xff]
    %v246 = vld [vmem:[%s1 + $0x680] sm:$0xff]
    %v247 = vld [vmem:[%s1 + $0x688] sm:$0xff]
    %v248 = vld [vmem:[%s1 + $0x690] sm:$0xff]
    %v249 = vld [vmem:[%s1 + $0x698] sm:$0xff]
    %v250 = vld [vmem:[%s1 + $0x6a0] sm:$0xff]
    %v251 = vld [vmem:[%s1 + $0x6a8] sm:$0xff]
    %v252 = vld [vmem:[%s1 + $0x6b0] sm:$0xff]
    %v253 = vld [vmem:[%s1 + $0x6b8] sm:$0xff]
    %v254 = vld [vmem:[%s1 + $0x6c0] sm:$0xff]
    %v255 = vld [vmem:[%s1 + $0x6c8] sm:$0xff]
    %v256 = vld [vmem:[%s1 + $0x6d0] sm:$0xff]
    %v257 = vld [vmem:[%s1 + $0x6d8] sm:$0xff]
    %v258 = vld [vmem:[%s1 + $0x6e0] sm:$0xff]
    %v259 = vld [vmem:[%s1 + $0x6e8] sm:$0xff]
    %v260 = vld [vmem:[%s1 + $0x6f0] sm:$0xff]
    %v261 = vld [vmem:[%s1 + $0x6f8] sm:$0xff]
    %v262 = vld [vmem:[%s1 + $0x700] sm:$0xff]
    %v263 = vld [vmem:[%s1 + $0x708] sm:$0xff]
    %v264 = vld [vmem:[%s1 + $0x710] sm:$0xff]
    %v265 = vld [vmem:[%s1 + $0x718] sm:$0xff]
    %v266 = vld [vmem:[%s1 + $0x720] sm:$0xff]
    %v267 = vld [vmem:[%s1 + $0x728] sm:$0xff]
    %v268 = vld [vmem:[%s1 + $0x730] sm:$0xff]
    %v269 = vld [vmem:[%s1 + $0x738] sm:$0xff]
    %v270 = vld [vmem:[%s1 + $0x740] sm:$0xff]
    %v271 = vld [vmem:[%s1 + $0x748] sm:$0xff]
    %v272 = vld [vmem:[%s1 + $0x750] sm:$0xff]
    %v273 = vld [vmem:[%s1 + $0x758] sm:$0xff]
    %v274 = vld [vmem:[%s1 + $0x760] sm:$0xff]
    %v275 = vld [vmem:[%s1 + $0x768] sm:$0xff]
    %v276 = vld [vmem:[%s1 + $0x770] sm:$0xff]
    %v277 = vld [vmem:[%s1 + $0x778] sm:$0xff]
    %v278 = vld [vmem:[%s1 + $0x780] sm:$0xff]
    %v279 = vld [vmem:[%s1 + $0x788] sm:$0xff]
    %v280 = vld [vmem:[%s1 + $0x790] sm:$0xff]
    %v281 = vld [vmem:[%s1 + $0x798] sm:$0xff]
    %v282 = vld [vmem:[%s1 + $0x7a0] sm:$0xff]
    %v283 = vld [vmem:[%s1 + $0x7a8] sm:$0xff]
    %v284 = vld [vmem:[%s1 + $0x7b0] sm:$0xff]
    %v285 = vld [vmem:[%s1 + $0x7b8] sm:$0xff]
    %v286 = vld [vmem:[%s1 + $0x7c0] sm:$0xff]
    %v287 = vld [vmem:[%s1 + $0x7c8] sm:$0xff]
    %v288 = vld [vmem:[%s1 + $0x7d0] sm:$0xff]
    %v289 = vld [vmem:[%s1 + $0x7d8] sm:$0xff]
    %v290 = vld [vmem:[%s1 + $0x7e0] sm:$0xff]
    %v291 = vld [vmem:[%s1 + $0x7e8] sm:$0xff]
    %v292 = vld [vmem:[%s1 + $0x7f0] sm:$0xff]
    %v293 = vld [vmem:[%s1 + $0x7f8] sm:$0xff]
    %v294 = vld [vmem:[%s1 + $0x800] sm:$0xff]
    %v295 = vld [vmem:[%s1 + $0x808] sm:$0xff]
    %v296 = vld [vmem:[%s1 + $0x810] sm:$0xff]
    %v297 = vld [vmem:[%s1 + $0x818] sm:$0xff]
    %v298 = vld [vmem:[%s1 + $0x820] sm:$0xff]
    %v299 = vld [vmem:[%s1 + $0x828] sm:$0xff]
    %v300 = vld [vmem:[%s1 + $0x830] sm:$0xff]
    %v301 = vld [vmem:[%s1 + $0x838] sm:$0xff]
    %v302 = vld [vmem:[%s1 + $0x840] sm:$0xff]
    %v303 = vld [vmem:[%s1 + $0x848] sm:$0xff]
    %v304 = vld [vmem:[%s1 + $0x850] sm:$0xff]
    %v305 = vld [vmem:[%s1 + $0x858] sm:$0xff]
    %v306 = vld [vmem:[%s1 + $0x860] sm:$0xff]
    %v307 = vld [vmem:[%s1 + $0x868] sm:$0xff]
    %v308 = vld [vmem:[%s1 + $0x870] sm:$0xff]
    %v309 = vld [vmem:[%s1 + $0x878] sm:$0xff]
    %v310 = vld [vmem:[%s1 + $0x880] sm:$0xff]
    %v311 = vld [vmem:[%s1 + $0x888] sm:$0xff]
    %v312 = vld [vmem:[%s1 + $0x890] sm:$0xff]
    %v313 = vld [vmem:[%s1 + $0x898] sm:$0xff]
    %v314 = vld [vmem:[%s1 + $0x8a0] sm:$0xff]
    %v315 = vld [vmem:[%s1 + $0x8a8] sm:$0xff]
    %v316 = vld [vmem:[%s1 + $0x8b0] sm:$0xff]
    %v317 = vld [vmem:[%s1 + $0x8b8] sm:$0xff]
    %v318 = vld [vmem:[%s1 + $0x8c0] sm:$0xff]
    %v319 = vld [vmem:[%s1 + $0x8c8] sm:$0xff]
    %v320 = vld [vmem:[%s1 + $0x8d0] sm:$0xff]
    %v321 = vld [vmem:[%s1 + $0x8d8] sm:$0xff]
    %v322 = vld [vmem:[%s1 + $0x8e0] sm:$0xff]
    %v323 = vld [vmem:[%s1 + $0x8e8] sm:$0xff]
    %v324 = vld [vmem:[%s1 + $0x8f0] sm:$0xff]
    %v325 = vld [vmem:[%s1 + $0x8f8] sm:$0xff]
    %v326 = vld [vmem:[%s1 + $0x900] sm:$0xff]
    %v327 = vld [vmem:[%s1 + $0x908] sm:$0xff]
    %v328 = vld [vmem:[%s1 + $0x910] sm:$0xff]
    %v329 = vld [vmem:[%s1 + $0x918] sm:$0xff]
    %v330 = vld [vmem:[%s1 + $0x920] sm:$0xff]
    %v331 = vld [vmem:[%s1 + $0x928] sm:$0xff]
    %v332 = vld [vmem:[%s1 + $0x930] sm:$0xff]
    %v333 = vld [vmem:[%s1 + $0x938] sm:$0xff]
    %v334 = vld [vmem:[%s1 + $0x940] sm:$0xff]
    %v335 = vld [vmem:[%s1 + $0x948] sm:$0xff]
    %v336 = vld [vmem:[%s1 + $0x950] sm:$0xff]
    %v337 = vld [vmem:[%s1 + $0x958] sm:$0xff]
    %v338 = vld [vmem:[%s1 + $0x960] sm:$0xff]
    %v339 = vld [vmem:[%s1 + $0x968] sm:$0xff]
    %v340 = vld [vmem:[%s1 + $0x970] sm:$0xff]
    %v341 = vld [vmem:[%s1 + $0x978] sm:$0xff]
    %v342 = vld [vmem:[%s1 + $0x980] sm:$0xff]
    %v343 = vld [vmem:[%s1 + $0x988] sm:$0xff]
    %v344 = vld [vmem:[%s1 + $0x990] sm:$0xff]
    %v345 = vld [vmem:[%s1 + $0x998] sm:$0xff]
    %v346 = vld [vmem:[%s1 + $0x9a0] sm:$0xff]
    %v347 = vld [vmem:[%s1 + $0x9a8] sm:$0xff]
    %v348 = vld [vmem:[%s1 + $0x9b0] sm:$0xff]
    %v349 = vld [vmem:[%s1 + $0x9b8] sm:$0xff]
    %v350 = vld [vmem:[%s1 + $0x9c0] sm:$0xff]
    %v351 = vld [vmem:[%s1 + $0x9c8] sm:$0xff]
    %v352 = vld [vmem:[%s1 + $0x9d0] sm:$0xff]
    %v353 = vld [vmem:[%s1 + $0x9d8] sm:$0xff]
    %v354 = vld [vmem:[%s1 + $0x9e0] sm:$0xff]
    %v355 = vld [vmem:[%s1 + $0x9e8] sm:$0xff]
    %v356 = vld [vmem:[%s1 + $0x9f0] sm:$0xff]
    %v357 = vld [vmem:[%s1 + $0x9f8] sm:$0xff]
    %v358 = vld [vmem:[%s1 + $0xa00] sm:$0xff]
    %v359 = vld [vmem:[%s1 + $0xa08] sm:$0xff]
    %v360 = vld [vmem:[%s1 + $0xa10] sm:$0xff]
    %v361 = vld [vmem:[%s1 + $0xa18] sm:$0xff]
    %v362 = vld [vmem:[%s1 + $0xa20] sm:$0xff]
    %v363 = vld [vmem:[%s1 + $0xa28] sm:$0xff]
    %v364 = vld [vmem:[%s1 + $0xa30] sm:$0xff]
    %v365 = vld [vmem:[%s1 + $0xa38] sm:$0xff]
    %v366 = vld [vmem:[%s1 + $0xa40] sm:$0xff]
    %v367 = vld [vmem:[%s1 + $0xa48] sm:$0xff]
    %v368 = vld [vmem:[%s1 + $0xa50] sm:$0xff]
    %v369 = vld [vmem:[%s1 + $0xa58] sm:$0xff]
    %v370 = vld [vmem:[%s1 + $0xa60] sm:$0xff]
    %v371 = vld [vmem:[%s1 + $0xa68] sm:$0xff]
    %v372 = vld [vmem:[%s1 + $0xa70] sm:$0xff]
    %v373 = vld [vmem:[%s1 + $0xa78] sm:$0xff]
    %v374 = vld [vmem:[%s1 + $0xa80] sm:$0xff]
    %v375 = vld [vmem:[%s1 + $0xa88] sm:$0xff]
    %v376 = vld [vmem:[%s1 + $0xa90] sm:$0xff]
    %v377 = vld [vmem:[%s1 + $0xa98] sm:$0xff]
    %v378 = vld [vmem:[%s1 + $0xaa0] sm:$0xff]
    %v379 = vld [vmem:[%s1 + $0xaa8] sm:$0xff]
    %v380 = vld [vmem:[%s1 + $0xab0] sm:$0xff]
    %v381 = vld [vmem:[%s1 + $0xab8] sm:$0xff]
    %v382 = vld [vmem:[%s1 + $0xac0] sm:$0xff]
    %v383 = vld [vmem:[%s1 + $0xac8] sm:$0xff]
    %v384 = vld [vmem:[%s1 + $0xad0] sm:$0xff]
    %v385 = vld [vmem:[%s1 + $0xad8] sm:$0xff]
    %v386 = vld [vmem:[%s1 + $0xae0] sm:$0xff]
    %v387 = vld [vmem:[%s1 + $0xae8] sm:$0xff]
    %v388 = vld [vmem:[%s1 + $0xaf0] sm:$0xff]
    %v389 = vld [vmem:[%s1 + $0xaf8] sm:$0xff]
    %v390 = vld [vmem:[%s1 + $0xb00] sm:$0xff]
    %v391 = vld [vmem:[%s1 + $0xb08] sm:$0xff]
    %v392 = vld [vmem:[%s1 + $0xb10] sm:$0xff]
    %v393 = vld [vmem:[%s1 + $0xb18] sm:$0xff]
    %v394 = vld [vmem:[%s1 + $0xb20] sm:$0xff]
    %v395 = vld [vmem:[%s1 + $0xb28] sm:$0xff]
    %v396 = vld [vmem:[%s1 + $0xb30] sm:$0xff]
    %v397 = vld [vmem:[%s1 + $0xb38] sm:$0xff]
    %v398 = vld [vmem:[%s1 + $0xb40] sm:$0xff]
    %v399 = vld [vmem:[%s1 + $0xb48] sm:$0xff]
    %v400 = vld [vmem:[%s1 + $0xb50] sm:$0xff]
    %v401 = vld [vmem:[%s1 + $0xb58] sm:$0xff]
    %v402 = vld [vmem:[%s1 + $0xb60] sm:$0xff]
    %v403 = vld [vmem:[%s1 + $0xb68] sm:$0xff]
    %v404 = vld [vmem:[%s1 + $0xb70] sm:$0xff]
    %v405 = vld [vmem:[%s1 + $0xb78] sm:$0xff]
    %v406 = vld [vmem:[%s1 + $0xb80] sm:$0xff]
    %v407 = vld [vmem:[%s1 + $0xb88] sm:$0xff]
    %v408 = vld [vmem:[%s1 + $0xb90] sm:$0xff]
    %v409 = vld [vmem:[%s1 + $0xb98] sm:$0xff]
    %v410 = vld [vmem:[%s1 + $0xba0] sm:$0xff]
    %v411 = vld [vmem:[%s1 + $0xba8] sm:$0xff]
    %v412 = vld [vmem:[%s1 + $0xbb0] sm:$0xff]
    %v413 = vld [vmem:[%s1 + $0xbb8] sm:$0xff]
    %v414 = vld [vmem:[%s1 + $0xbc0] sm:$0xff]
    %v415 = vld [vmem:[%s1 + $0xbc8] sm:$0xff]
    %v416 = vld [vmem:[%s1 + $0xbd0] sm:$0xff]
    %v417 = vld [vmem:[%s1 + $0xbd8] sm:$0xff]
    %v418 = vld [vmem:[%s1 + $0xbe0] sm:$0xff]
    %v419 = vld [vmem:[%s1 + $0xbe8] sm:$0xff]
    %v420 = vld [vmem:[%s1 + $0xbf0] sm:$0xff]
    %v421 = vld [vmem:[%s1 + $0xbf8] sm:$0xff]
    %v422 = vld [vmem:[%s1 + $0xc00] sm:$0xff]
    %v423 = vld [vmem:[%s1 + $0xc08] sm:$0xff]
    %v424 = vld [vmem:[%s1 + $0xc10] sm:$0xff]
    %v425 = vld [vmem:[%s1 + $0xc18] sm:$0xff]
    %v426 = vld [vmem:[%s1 + $0xc20] sm:$0xff]
    %v427 = vld [vmem:[%s1 + $0xc28] sm:$0xff]
    %v428 = vld [vmem:[%s1 + $0xc30] sm:$0xff]
    %v429 = vld [vmem:[%s1 + $0xc38] sm:$0xff]
    %v430 = vld [vmem:[%s1 + $0xc40] sm:$0xff]
    %v431 = vld [vmem:[%s1 + $0xc48] sm:$0xff]
    %v432 = vld [vmem:[%s1 + $0xc50] sm:$0xff]
    %v433 = vld [vmem:[%s1 + $0xc58] sm:$0xff]
    %v434 = vld [vmem:[%s1 + $0xc60] sm:$0xff]
    %v435 = vld [vmem:[%s1 + $0xc68] sm:$0xff]
    %v436 = vld [vmem:[%s1 + $0xc70] sm:$0xff]
    %v437 = vld [vmem:[%s1 + $0xc78] sm:$0xff]
    %v438 = vld [vmem:[%s1 + $0xc80] sm:$0xff]
    %v439 = vld [vmem:[%s1 + $0xc88] sm:$0xff]
    %v440 = vld [vmem:[%s1 + $0xc90] sm:$0xff]
    %v441 = vld [vmem:[%s1 + $0xc98] sm:$0xff]
    %v442 = vld [vmem:[%s1 + $0xca0] sm:$0xff]
    %v443 = vld [vmem:[%s1 + $0xca8] sm:$0xff]
    %v444 = vld [vmem:[%s1 + $0xcb0] sm:$0xff]
    %v445 = vld [vmem:[%s1 + $0xcb8] sm:$0xff]
    %v446 = vld [vmem:[%s1 + $0xcc0] sm:$0xff]
    %v447 = vld [vmem:[%s1 + $0xcc8] sm:$0xff]
    %v448 = vld [vmem:[%s1 + $0xcd0] sm:$0xff]
    %v449 = vld [vmem:[%s1 + $0xcd8] sm:$0xff]
    %v450 = vld [vmem:[%s1 + $0xce0] sm:$0xff]
    %v451 = vld [vmem:[%s1 + $0xce8] sm:$0xff]
    %v452 = vld [vmem:[%s1 + $0xcf0] sm:$0xff]
    %v453 = vld [vmem:[%s1 + $0xcf8] sm:$0xff]
    %v454 = vld [vmem:[%s1 + $0xd00] sm:$0xff]
    %v455 = vld [vmem:[%s1 + $0xd08] sm:$0xff]
    %v456 = vld [vmem:[%s1 + $0xd10] sm:$0xff]
    %v457 = vld [vmem:[%s1 + $0xd18] sm:$0xff]
    %v458 = vld [vmem:[%s1 + $0xd20] sm:$0xff]
    %v459 = vld [vmem:[%s1 + $0xd28] sm:$0xff]
    %v460 = vld [vmem:[%s1 + $0xd30] sm:$0xff]
    %v461 = vld [vmem:[%s1 + $0xd38] sm:$0xff]
    %v462 = vld [vmem:[%s1 + $0xd40] sm:$0xff]
    %v463 = vld [vmem:[%s1 + $0xd48] sm:$0xff]
    %v464 = vld [vmem:[%s1 + $0xd50] sm:$0xff]
    %v465 = vld [vmem:[%s1 + $0xd58] sm:$0xff]
    %v466 = vld [vmem:[%s1 + $0xd60] sm:$0xff]
    %v467 = vld [vmem:[%s1 + $0xd68] sm:$0xff]
    %v468 = vld [vmem:[%s1 + $0xd70] sm:$0xff]
    %v469 = vld [vmem:[%s1 + $0xd78] sm:$0xff]
    %v470 = vld [vmem:[%s1 + $0xd80] sm:$0xff]
    %v471 = vld [vmem:[%s1 + $0xd88] sm:$0xff]
    %v472 = vld [vmem:[%s1 + $0xd90] sm:$0xff]
    %v473 = vld [vmem:[%s1 + $0xd98] sm:$0xff]
    %v474 = vld [vmem:[%s1 + $0xda0] sm:$0xff]
    %v475 = vld [vmem:[%s1 + $0xda8] sm:$0xff]
    %v476 = vld [vmem:[%s1 + $0xdb0] sm:$0xff]
    %v477 = vld [vmem:[%s1 + $0xdb8] sm:$0xff]
    %v478 = vld [vmem:[%s1 + $0xdc0] sm:$0xff]
    %v479 = vld [vmem:[%s1 + $0xdc8] sm:$0xff]
    %v480 = vld [vmem:[%s1 + $0xdd0] sm:$0xff]
    %v481 = vld [vmem:[%s1 + $0xdd8] sm:$0xff]
    %v482 = vld [vmem:[%s1 + $0xde0] sm:$0xff]
    %v483 = vld [vmem:[%s1 + $0xde8] sm:$0xff]
    %v484 = vld [vmem:[%s1 + $0xdf0] sm:$0xff]
    %v485 = vld [vmem:[%s1 + $0xdf8] sm:$0xff]
    %v486 = vld [vmem:[%s1 + $0xe00] sm:$0xff]
    %v487 = vld [vmem:[%s1 + $0xe08] sm:$0xff]
    %v488 = vld [vmem:[%s1 + $0xe10] sm:$0xff]
    %v489 = vld [vmem:[%s1 + $0xe18] sm:$0xff]
    %v490 = vld [vmem:[%s1 + $0xe20] sm:$0xff]
    %v491 = vld [vmem:[%s1 + $0xe28] sm:$0xff]
    %v492 = vld [vmem:[%s1 + $0xe30] sm:$0xff]
    %v493 = vld [vmem:[%s1 + $0xe38] sm:$0xff]
    %v494 = vld [vmem:[%s1 + $0xe40] sm:$0xff]
    %v495 = vld [vmem:[%s1 + $0xe48] sm:$0xff]
    %v496 = vld [vmem:[%s1 + $0xe50] sm:$0xff]
    %v497 = vld [vmem:[%s1 + $0xe58] sm:$0xff]
    %v498 = vld [vmem:[%s1 + $0xe60] sm:$0xff]
    %v499 = vld [vmem:[%s1 + $0xe68] sm:$0xff]
    %v500 = vld [vmem:[%s1 + $0xe70] sm:$0xff]
    %v501 = vld [vmem:[%s1 + $0xe78] sm:$0xff]
    %v502 = vld [vmem:[%s1 + $0xe80] sm:$0xff]
    %v503 = vld [vmem:[%s1 + $0xe88] sm:$0xff]
    %v504 = vld [vmem:[%s1 + $0xe90] sm:$0xff]
    %v505 = vld [vmem:[%s1 + $0xe98] sm:$0xff]
    %v506 = vld [vmem:[%s1 + $0xea0] sm:$0xff]
    %v507 = vld [vmem:[%s1 + $0xea8] sm:$0xff]
    %v508 = vld [vmem:[%s1 + $0xeb0] sm:$0xff]
    %v509 = vld [vmem:[%s1 + $0xeb8] sm:$0xff]
    %v510 = vld [vmem:[%s1 + $0xec0] sm:$0xff]
    %v511 = vld [vmem:[%s1 + $0xec8] sm:$0xff]
    %v512 = vld [vmem:[%s1 + $0xed0] sm:$0xff]
    %v513 = vld [vmem:[%s1 + $0xed8] sm:$0xff]
    %v514 = vld [vmem:[%s1 + $0xee0] sm:$0xff]
    %v515 = vld [vmem:[%s1 + $0xee8] sm:$0xff]
    %v516 = vld [vmem:[%s1 + $0xef0] sm:$0xff]
    %v517 = vld [vmem:[%s1 + $0xef8] sm:$0xff]
    %v518 = vld [vmem:[%s1 + $0xf00] sm:$0xff]
    %v519 = vld [vmem:[%s1 + $0xf08] sm:$0xff]
    %v520 = vld [vmem:[%s1 + $0xf10] sm:$0xff]
    %v521 = vld [vmem:[%s1 + $0xf18] sm:$0xff]
    %v522 = vld [vmem:[%s1 + $0xf20] sm:$0xff]
    %v523 = vld [vmem:[%s1 + $0xf28] sm:$0xff]
    %v524 = vld [vmem:[%s1 + $0xf30] sm:$0xff]
    %v525 = vld [vmem:[%s1 + $0xf38] sm:$0xff]
    %v526 = vld [vmem:[%s1 + $0xf40] sm:$0xff]
    %v527 = vld [vmem:[%s1 + $0xf48] sm:$0xff]
    %v528 = vld [vmem:[%s1 + $0xf50] sm:$0xff]
    %v529 = vld [vmem:[%s1 + $0xf58] sm:$0xff]
    %v530 = vld [vmem:[%s1 + $0xf60] sm:$0xff]
    %v531 = vld [vmem:[%s1 + $0xf68] sm:$0xff]
    %v532 = vld [vmem:[%s1 + $0xf70] sm:$0xff]
    %v533 = vld [vmem:[%s1 + $0xf78] sm:$0xff]
    %v534 = vld [vmem:[%s1 + $0xf80] sm:$0xff]
    %v535 = vld [vmem:[%s1 + $0xf88] sm:$0xff]
    %v536 = vld [vmem:[%s1 + $0xf90] sm:$0xff]
    %v537 = vld [vmem:[%s1 + $0xf98] sm:$0xff]
    %v538 = vld [vmem:[%s1 + $0xfa0] sm:$0xff]
    %v539 = vld [vmem:[%s1 + $0xfa8] sm:$0xff]
    %v540 = vld [vmem:[%s1 + $0xfb0] sm:$0xff]
    %v541 = vld [vmem:[%s1 + $0xfb8] sm:$0xff]
    %v542 = vld [vmem:[%s1 + $0xfc0] sm:$0xff]
    %v543 = vld [vmem:[%s1 + $0xfc8] sm:$0xff]
    %v544 = vld [vmem:[%s1 + $0xfd0] sm:$0xff]
    %v545 = vld [vmem:[%s1 + $0xfd8] sm:$0xff]
    %v546 = vld [vmem:[%s1 + $0xfe0] sm:$0xff]
    %v547 = vld [vmem:[%s1 + $0xfe8] sm:$0xff]
    %v548 = vld [vmem:[%s1 + $0xff0] sm:$0xff]
    %v549 = vld [vmem:[%s1 + $0xff8] sm:$0xff]
    %v550 = vld [vmem:[%s1 + $0x1000] sm:$0xff]
    %v551 = vld [vmem:[%s1 + $0x1008] sm:$0xff]
    %v552 = vld [vmem:[%s1 + $0x1010] sm:$0xff]
    %v553 = vld [vmem:[%s1 + $0x1018] sm:$0xff]
    %v554 = vld [vmem:[%s1 + $0x1020] sm:$0xff]
    %v555 = vld [vmem:[%s1 + $0x1028] sm:$0xff]
    %v556 = vld [vmem:[%s1 + $0x1030] sm:$0xff]
    %v557 = vld [vmem:[%s1 + $0x1038] sm:$0xff]
    %v558 = vld [vmem:[%s1 + $0x1040] sm:$0xff]
    %v559 = vld [vmem:[%s1 + $0x1048] sm:$0xff]
    %v560 = vld [vmem:[%s1 + $0x1050] sm:$0xff]
    %v561 = vld [vmem:[%s1 + $0x1058] sm:$0xff]
    %v562 = vld [vmem:[%s1 + $0x1060] sm:$0xff]
    %v563 = vld [vmem:[%s1 + $0x1068] sm:$0xff]
    %v564 = vld [vmem:[%s1 + $0x1070] sm:$0xff]
    %v565 = vld [vmem:[%s1 + $0x1078] sm:$0xff]
    %v566 = vld [vmem:[%s1 + $0x1080] sm:$0x77]
    %v567 = vld [vmem:[%s1 + $0x1088] sm:$0x77]
    %v568 = vld [vmem:[%s1 + $0x1090] sm:$0x77]
    %v569 = vld [vmem:[%s1 + $0x1098] sm:$0x77]
    %v570 = vld [vmem:[%s1 + $0x10a0] sm:$0x77]
    %v571 = vld [vmem:[%s1 + $0x10a8] sm:$0x77]
    %v572 = vld [vmem:[%s1 + $0x10b0] sm:$0x77]
    %v573 = vld [vmem:[%s1 + $0x10b8] sm:$0x77]
    %v574 = vld [vmem:[%s1 + $0x10c0] sm:$0x77]
    %v575 = vld [vmem:[%s1 + $0x10c8] sm:$0x77]
    %v576 = vld [vmem:[%s1 + $0x10d0] sm:$0x77]
    %v577 = vld [vmem:[%s1 + $0x10d8] sm:$0x77]
    %v578 = vld [vmem:[%s1 + $0x10e0] sm:$0x77]
    %v579 = vld [vmem:[%s1 + $0x10e8] sm:$0x77]
    %v580 = vld [vmem:[%s1 + $0x10f0] sm:$0x77]
    %v581 = vld [vmem:[%s1 + $0x10f8] sm:$0x77]
    %v582 = vld [vmem:[%s1 + $0x1100] sm:$0x77]
    %v583 = vld [vmem:[%s1 + $0x1108] sm:$0x77]
    %v584 = vld [vmem:[%s1 + $0x1110] sm:$0x77]
    %v585 = vld [vmem:[%s1 + $0x1118] sm:$0x77]
    %v586 = vld [vmem:[%s1 + $0x1120] sm:$0x77]
    %v587 = vld [vmem:[%s1 + $0x1128] sm:$0x77]
    %v588 = vld [vmem:[%s1 + $0x1130] sm:$0x77]
    %v589 = vld [vmem:[%s1 + $0x1138] sm:$0x77]
    %v590 = vld [vmem:[%s1 + $0x1140] sm:$0x77]
    %v591 = vld [vmem:[%s1 + $0x1148] sm:$0x77]
    %v592 = vld [vmem:[%s1 + $0x1150] sm:$0x77]
    %v593 = vld [vmem:[%s1 + $0x1158] sm:$0x77]
    %v594 = vld [vmem:[%s1 + $0x1160] sm:$0x77]
    %v595 = vld [vmem:[%s1 + $0x1168] sm:$0x77]
    %v596 = vld [vmem:[%s1 + $0x1170] sm:$0x77]
    %v597 = vld [vmem:[%s1 + $0x1178] sm:$0x77]
    %v598 = vld [vmem:[%s1 + $0x1180] sm:$0x77]
    %v599 = vld [vmem:[%s1 + $0x1188] sm:$0x77]
    %v600 = vld [vmem:[%s1 + $0x1190] sm:$0x77]
    %v601 = vld [vmem:[%s1 + $0x1198] sm:$0x77]
    %v602 = vld [vmem:[%s1 + $0x11a0] sm:$0x77]
    %v603 = vld [vmem:[%s1 + $0x11a8] sm:$0x77]
    %v604 = vld [vmem:[%s1 + $0x11b0] sm:$0x77]
    %v605 = vld [vmem:[%s1 + $0x11b8] sm:$0x77]
    %v606 = vld [vmem:[%s1 + $0x11c0] sm:$0x77]
    %v607 = vld [vmem:[%s1 + $0x11c8] sm:$0x77]
    %v608 = vld [vmem:[%s1 + $0x11d0] sm:$0x77]
    %v609 = vld [vmem:[%s1 + $0x11d8] sm:$0x77]
    %v610 = vld [vmem:[%s1 + $0x11e0] sm:$0x77]
    %v611 = vld [vmem:[%s1 + $0x11e8] sm:$0x77]
    %v612 = vld [vmem:[%s1 + $0x11f0] sm:$0x77]
    %v613 = vld [vmem:[%s1 + $0x11f8] sm:$0x77]
    %v614 = vld [vmem:[%s1 + $0x1200] sm:$0x77]
    %v615 = vld [vmem:[%s1 + $0x1208] sm:$0x77]
    %v616 = vld [vmem:[%s1 + $0x1210] sm:$0x77]
    %v617 = vld [vmem:[%s1 + $0x1218] sm:$0x77]
    %v618 = vld [vmem:[%s1 + $0x1220] sm:$0x77]
    %v619 = vld [vmem:[%s1 + $0x1228] sm:$0x77]
    %v620 = vld [vmem:[%s1 + $0x1230] sm:$0x77]
    %v621 = vld [vmem:[%s1 + $0x1238] sm:$0x77]
    %v622 = vld [vmem:[%s1 + $0x1240] sm:$0x77]
    %v623 = vld [vmem:[%s1 + $0x1248] sm:$0x77]
    %v624 = vld [vmem:[%s1 + $0x1250] sm:$0x77]
    %v625 = vld [vmem:[%s1 + $0x1258] sm:$0x77]
    %v626 = vld [vmem:[%s1 + $0x1260] sm:$0x77]
    %v627 = vld [vmem:[%s1 + $0x1268] sm:$0x77]
    %v628 = vld [vmem:[%s1 + $0x1270] sm:$0x77]
    %v629 = vld [vmem:[%s1 + $0x1278] sm:$0x77]
    %v630 = vld [vmem:[%s1 + $0x1280] sm:$0x77]
    %v631 = vld [vmem:[%s1 + $0x1288] sm:$0x77]
    %v632 = vld [vmem:[%s1 + $0x1290] sm:$0x77]
    %v633 = vld [vmem:[%s1 + $0x1298] sm:$0x77]
    %v634 = vld [vmem:[%s1 + $0x12a0] sm:$0x77]
    %v635 = vld [vmem:[%s1 + $0x12a8] sm:$0x77]
    %v636 = vld [vmem:[%s1 + $0x12b0] sm:$0x77]
    %v637 = vld [vmem:[%s1 + $0x12b8] sm:$0x77]
    %v638 = vld [vmem:[%s1 + $0x12c0] sm:$0x77]
    %v639 = vld [vmem:[%s1 + $0x12c8] sm:$0x77]
    %v640 = vld [vmem:[%s1 + $0x12d0] sm:$0x77]
    %v641 = vld [vmem:[%s1 + $0x12d8] sm:$0x77]
    %v642 = vld [vmem:[%s1 + $0x12e0] sm:$0x77]
    %v643 = vld [vmem:[%s1 + $0x12e8] sm:$0x77]
    %v644 = vld [vmem:[%s1 + $0x12f0] sm:$0x77]
    %v645 = vld [vmem:[%s1 + $0x12f8] sm:$0x77]
    %v646 = vld [vmem:[%s1 + $0x1300] sm:$0x77]
    %v647 = vld [vmem:[%s1 + $0x1308] sm:$0x77]
    %v648 = vld [vmem:[%s1 + $0x1310] sm:$0x77]
    %v649 = vld [vmem:[%s1 + $0x1318] sm:$0x77]
    %v650 = vld [vmem:[%s1 + $0x1320] sm:$0x77]
    %v651 = vld [vmem:[%s1 + $0x1328] sm:$0x77]
    %v652 = vld [vmem:[%s1 + $0x1330] sm:$0x77]
    %v653 = vld [vmem:[%s1 + $0x1338] sm:$0x77]
    %v654 = vld [vmem:[%s2] sm:$0x1]
    %v656 = vperm.slane %v654, 0
    %659 = vst [vmem:[#allocation1] ss:$9 sm:$0xff] %v16
    %v660 = vld [vmem:[#allocation1] sm:$0xff]
    %v661 = vld [vmem:[#allocation1 + $0x9] sm:$0xff]
    %v662 = vld [vmem:[#allocation1 + $0x12] sm:$0xff]
    %v663 = vld [vmem:[#allocation1 + $0x1b] sm:$0xff]
    %v664 = vld [vmem:[#allocation1 + $0x24] sm:$0xff]
    %v665 = vld [vmem:[#allocation1 + $0x2d] sm:$0xff]
    %v666 = vld [vmem:[#allocation1 + $0x36] sm:$0xff]
    %v667 = vld [vmem:[#allocation1 + $0x3f] sm:$0xff]
    %669 = vst [vmem:[#allocation1] ss:$9 sm:$0xff] %v17
    %v670 = vld [vmem:[#allocation1] sm:$0xff]
    %v671 = vld [vmem:[#allocation1 + $0x9] sm:$0xff]
    %v672 = vld [vmem:[#allocation1 + $0x12] sm:$0xff]
    %v673 = vld [vmem:[#allocation1 + $0x1b] sm:$0xff]
    %v674 = vld [vmem:[#allocation1 + $0x24] sm:$0xff]
    %v675 = vld [vmem:[#allocation1 + $0x2d] sm:$0xff]
    %v676 = vld [vmem:[#allocation1 + $0x36] sm:$0xff]
    %v677 = vld [vmem:[#allocation1 + $0x3f] sm:$0xff]
    %679 = vst [vmem:[#allocation1] ss:$9 sm:$0xff] %v18
    %v680 = vld [vmem:[#allocation1] sm:$0xff]
    %v681 = vld [vmem:[#allocation1 + $0x9] sm:$0xff]
    %v682 = vld [vmem:[#allocation1 + $0x12] sm:$0xff]
    %v683 = vld [vmem:[#allocation1 + $0x1b] sm:$0xff]
    %v684 = vld [vmem:[#allocation1 + $0x24] sm:$0xff]
    %v685 = vld [vmem:[#allocation1 + $0x2d] sm:$0xff]
    %v686 = vld [vmem:[#allocation1 + $0x36] sm:$0xff]
    %v687 = vld [vmem:[#allocation1 + $0x3f] sm:$0xff]
    %689 = vst [vmem:[#allocation1] ss:$9 sm:$0xff] %v19
    %v690 = vld [vmem:[#allocation1] sm:$0xff]
    %v691 = vld [vmem:[#allocation1 + $0x9] sm:$0xff]
    %v692 = vld [vmem:[#allocation1 + $0x12] sm:$0xff]
    %v693 = vld [vmem:[#allocation1 + $0x1b] sm:$0xff]
    %v694 = vld [vmem:[#allocation1 + $0x24] sm:$0xff]
    %v695 = vld [vmem:[#allocation1 + $0x2d] sm:$0xff]
    %v696 = vld [vmem:[#allocation1 + $0x36] sm:$0xff]
    %v697 = vld [vmem:[#allocation1 + $0x3f] sm:$0xff]
    %699 = vst [vmem:[#allocation1] ss:$9 sm:$0xff] %v20
    %v700 = vld [vmem:[#allocation1] sm:$0xff]
    %v701 = vld [vmem:[#allocation1 + $0x9] sm:$0xff]
    %v702 = vld [vmem:[#allocation1 + $0x12] sm:$0xff]
    %v703 = vld [vmem:[#allocation1 + $0x1b] sm:$0xff]
    %v704 = vld [vmem:[#allocation1 + $0x24] sm:$0xff]
    %v705 = vld [vmem:[#allocation1 + $0x2d] sm:$0xff]
    %v706 = vld [vmem:[#allocation1 + $0x36] sm:$0xff]
    %v707 = vld [vmem:[#allocation1 + $0x3f] sm:$0xff]
    %709 = vst [vmem:[#allocation1] ss:$9 sm:$0xff] %v21
    %v710 = vld [vmem:[#allocation1] sm:$0xff]
    %v711 = vld [vmem:[#allocation1 + $0x9] sm:$0xff]
    %v712 = vld [vmem:[#allocation1 + $0x12] sm:$0xff]
    %v713 = vld [vmem:[#allocation1 + $0x1b] sm:$0xff]
    %v714 = vld [vmem:[#allocation1 + $0x24] sm:$0xff]
    %v715 = vld [vmem:[#allocation1 + $0x2d] sm:$0xff]
    %v716 = vld [vmem:[#allocation1 + $0x36] sm:$0xff]
    %v717 = vld [vmem:[#allocation1 + $0x3f] sm:$0xff]
    %719 = vst [vmem:[#allocation1] ss:$9 sm:$0xff] %v22
    %v720 = vld [vmem:[#allocation1] sm:$0xff]
    %v721 = vld [vmem:[#allocation1 + $0x9] sm:$0xff]
    %v722 = vld [vmem:[#allocation1 + $0x12] sm:$0xff]
    %v723 = vld [vmem:[#allocation1 + $0x1b] sm:$0xff]
    %v724 = vld [vmem:[#allocation1 + $0x24] sm:$0xff]
    %v725 = vld [vmem:[#allocation1 + $0x2d] sm:$0xff]
    %v726 = vld [vmem:[#allocation1 + $0x36] sm:$0xff]
    %v727 = vld [vmem:[#allocation1 + $0x3f] sm:$0xff]
    %729 = vst [vmem:[#allocation1] ss:$9 sm:$0xff] %v23
    %v730 = vld [vmem:[#allocation1] sm:$0xff]
    %v731 = vld [vmem:[#allocation1 + $0x9] sm:$0xff]
    %v732 = vld [vmem:[#allocation1 + $0x12] sm:$0xff]
    %v733 = vld [vmem:[#allocation1 + $0x1b] sm:$0xff]
    %v734 = vld [vmem:[#allocation1 + $0x24] sm:$0xff]
    %v735 = vld [vmem:[#allocation1 + $0x2d] sm:$0xff]
    %v736 = vld [vmem:[#allocation1 + $0x36] sm:$0xff]
    %v737 = vld [vmem:[#allocation1 + $0x3f] sm:$0xff]
    %739 = vst [vmem:[#allocation1] ss:$9 sm:$0xff] %v24
    %v740 = vld [vmem:[#allocation1] sm:$0xff]
    %v741 = vld [vmem:[#allocation1 + $0x9] sm:$0xff]
    %v742 = vld [vmem:[#allocation1 + $0x12] sm:$0xff]
    %v743 = vld [vmem:[#allocation1 + $0x1b] sm:$0xff]
    %v744 = vld [vmem:[#allocation1 + $0x24] sm:$0xff]
    %v745 = vld [vmem:[#allocation1 + $0x2d] sm:$0xff]
    %v746 = vld [vmem:[#allocation1 + $0x36] sm:$0xff]
    %v747 = vld [vmem:[#allocation1 + $0x3f] sm:$0xff]
    %749 = vst [vmem:[#allocation1] ss:$9 sm:$0xff] %v25
    %v750 = vld [vmem:[#allocation1] sm:$0xff]
    %v751 = vld [vmem:[#allocation1 + $0x9] sm:$0xff]
    %v752 = vld [vmem:[#allocation1 + $0x12] sm:$0xff]
    %v753 = vld [vmem:[#allocation1 + $0x1b] sm:$0xff]
    %v754 = vld [vmem:[#allocation1 + $0x24] sm:$0xff]
    %v755 = vld [vmem:[#allocation1 + $0x2d] sm:$0xff]
    %v756 = vld [vmem:[#allocation1 + $0x36] sm:$0xff]
    %v757 = vld [vmem:[#allocation1 + $0x3f] sm:$0xff]
    %759 = vst [vmem:[#allocation1] ss:$9 sm:$0xff] %v26
    %v760 = vld [vmem:[#allocation1] sm:$0xff]
    %v761 = vld [vmem:[#allocation1 + $0x9] sm:$0xff]
    %v762 = vld [vmem:[#allocation1 + $0x12] sm:$0xff]
    %v763 = vld [vmem:[#allocation1 + $0x1b] sm:$0xff]
    %v764 = vld [vmem:[#allocation1 + $0x24] sm:$0xff]
    %v765 = vld [vmem:[#allocation1 + $0x2d] sm:$0xff]
    %v766 = vld [vmem:[#allocation1 + $0x36] sm:$0xff]
    %v767 = vld [vmem:[#allocation1 + $0x3f] sm:$0xff]
    %769 = vst [vmem:[#allocation1] ss:$9 sm:$0xff] %v27
    %v770 = vld [vmem:[#allocation1] sm:$0xff]
    %v771 = vld [vmem:[#allocation1 + $0x9] sm:$0xff]
    %v772 = vld [vmem:[#allocation1 + $0x12] sm:$0xff]
    %v773 = vld [vmem:[#allocation1 + $0x1b] sm:$0xff]
    %v774 = vld [vmem:[#allocation1 + $0x24] sm:$0xff]
    %v775 = vld [vmem:[#allocation1 + $0x2d] sm:$0xff]
    %v776 = vld [vmem:[#allocation1 + $0x36] sm:$0xff]
    %v777 = vld [vmem:[#allocation1 + $0x3f] sm:$0xff]
    %779 = vst [vmem:[#allocation1] ss:$9 sm:$0xff] %v28
    %v780 = vld [vmem:[#allocation1] sm:$0xff]
    %v781 = vld [vmem:[#allocation1 + $0x9] sm:$0xff]
    %v782 = vld [vmem:[#allocation1 + $0x12] sm:$0xff]
    %v783 = vld [vmem:[#allocation1 + $0x1b] sm:$0xff]
    %v784 = vld [vmem:[#allocation1 + $0x24] sm:$0xff]
    %v785 = vld [vmem:[#allocation1 + $0x2d] sm:$0xff]
    %v786 = vld [vmem:[#allocation1 + $0x36] sm:$0xff]
    %v787 = vld [vmem:[#allocation1 + $0x3f] sm:$0xff]
    %789 = vst [vmem:[#allocation1] ss:$9 sm:$0xff] %v29
    %v790 = vld [vmem:[#allocation1] sm:$0xff]
    %v791 = vld [vmem:[#allocation1 + $0x9] sm:$0xff]
    %v792 = vld [vmem:[#allocation1 + $0x12] sm:$0xff]
    %v793 = vld [vmem:[#allocation1 + $0x1b] sm:$0xff]
    %v794 = vld [vmem:[#allocation1 + $0x24] sm:$0xff]
    %v795 = vld [vmem:[#allocation1 + $0x2d] sm:$0xff]
    %v796 = vld [vmem:[#allocation1 + $0x36] sm:$0xff]
    %v797 = vld [vmem:[#allocation1 + $0x3f] sm:$0xff]
    %799 = vst [vmem:[#allocation1] ss:$9 sm:$0xff] %v30
    %v800 = vld [vmem:[#allocation1] sm:$0xff]
    %v801 = vld [vmem:[#allocation1 + $0x9] sm:$0xff]
    %v802 = vld [vmem:[#allocation1 + $0x12] sm:$0xff]
    %v803 = vld [vmem:[#allocation1 + $0x1b] sm:$0xff]
    %v804 = vld [vmem:[#allocation1 + $0x24] sm:$0xff]
    %v805 = vld [vmem:[#allocation1 + $0x2d] sm:$0xff]
    %v806 = vld [vmem:[#allocation1 + $0x36] sm:$0xff]
    %v807 = vld [vmem:[#allocation1 + $0x3f] sm:$0xff]
    %809 = vst [vmem:[#allocation1] ss:$9 sm:$0xff] %v31
    %v810 = vld [vmem:[#allocation1] sm:$0xff]
    %v811 = vld [vmem:[#allocation1 + $0x9] sm:$0xff]
    %v812 = vld [vmem:[#allocation1 + $0x12] sm:$0xff]
    %v813 = vld [vmem:[#allocation1 + $0x1b] sm:$0xff]
    %v814 = vld [vmem:[#allocation1 + $0x24] sm:$0xff]
    %v815 = vld [vmem:[#allocation1 + $0x2d] sm:$0xff]
    %v816 = vld [vmem:[#allocation1 + $0x36] sm:$0xff]
    %v817 = vld [vmem:[#allocation1 + $0x3f] sm:$0xff]
    %819 = vst [vmem:[#allocation1] ss:$9 sm:$0xff] %v32
    %v820 = vld [vmem:[#allocation1] sm:$0xff]
    %v821 = vld [vmem:[#allocation1 + $0x9] sm:$0xff]
    %v822 = vld [vmem:[#allocation1 + $0x12] sm:$0xff]
    %v823 = vld [vmem:[#allocation1 + $0x1b] sm:$0xff]
    %v824 = vld [vmem:[#allocation1 + $0x24] sm:$0xff]
    %v825 = vld [vmem:[#allocation1 + $0x2d] sm:$0xff]
    %v826 = vld [vmem:[#allocation1 + $0x36] sm:$0xff]
    %v827 = vld [vmem:[#allocation1 + $0x3f] sm:$0xff]
    %829 = vst [vmem:[#allocation1] ss:$9 sm:$0xff] %v33
    %v830 = vld [vmem:[#allocation1] sm:$0xff]
    %v831 = vld [vmem:[#allocation1 + $0x9] sm:$0xff]
    %v832 = vld [vmem:[#allocation1 + $0x12] sm:$0xff]
    %v833 = vld [vmem:[#allocation1 + $0x1b] sm:$0xff]
    %v834 = vld [vmem:[#allocation1 + $0x24] sm:$0xff]
    %v835 = vld [vmem:[#allocation1 + $0x2d] sm:$0xff]
    %v836 = vld [vmem:[#allocation1 + $0x36] sm:$0xff]
    %v837 = vld [vmem:[#allocation1 + $0x3f] sm:$0xff]
    %839 = vst [vmem:[#allocation1] ss:$9 sm:$0xff] %v34
    %v840 = vld [vmem:[#allocation1] sm:$0xff]
    %v841 = vld [vmem:[#allocation1 + $0x9] sm:$0xff]
    %v842 = vld [vmem:[#allocation1 + $0x12] sm:$0xff]
    %v843 = vld [vmem:[#allocation1 + $0x1b] sm:$0xff]
    %v844 = vld [vmem:[#allocation1 + $0x24] sm:$0xff]
    %v845 = vld [vmem:[#allocation1 + $0x2d] sm:$0xff]
    %v846 = vld [vmem:[#allocation1 + $0x36] sm:$0xff]
    %v847 = vld [vmem:[#allocation1 + $0x3f] sm:$0xff]
    %849 = vst [vmem:[#allocation1] ss:$9 sm:$0xff] %v35
    %v850 = vld [vmem:[#allocation1] sm:$0xff]
    %v851 = vld [vmem:[#allocation1 + $0x9] sm:$0xff]
    %v852 = vld [vmem:[#allocation1 + $0x12] sm:$0xff]
    %v853 = vld [vmem:[#allocation1 + $0x1b] sm:$0xff]
    %v854 = vld [vmem:[#allocation1 + $0x24] sm:$0xff]
    %v855 = vld [vmem:[#allocation1 + $0x2d] sm:$0xff]
    %v856 = vld [vmem:[#allocation1 + $0x36] sm:$0xff]
    %v857 = vld [vmem:[#allocation1 + $0x3f] sm:$0xff]
    %859 = vst [vmem:[#allocation1] ss:$9 sm:$0xff] %v36
    %v860 = vld [vmem:[#allocation1] sm:$0xff]
    %v861 = vld [vmem:[#allocation1 + $0x9] sm:$0xff]
    %v862 = vld [vmem:[#allocation1 + $0x12] sm:$0xff]
    %v863 = vld [vmem:[#allocation1 + $0x1b] sm:$0xff]
    %v864 = vld [vmem:[#allocation1 + $0x24] sm:$0xff]
    %v865 = vld [vmem:[#allocation1 + $0x2d] sm:$0xff]
    %v866 = vld [vmem:[#allocation1 + $0x36] sm:$0xff]
    %v867 = vld [vmem:[#allocation1 + $0x3f] sm:$0xff]
    %869 = vst [vmem:[#allocation1] ss:$9 sm:$0xff] %v37
    %v870 = vld [vmem:[#allocation1] sm:$0xff]
    %v871 = vld [vmem:[#allocation1 + $0x9] sm:$0xff]
    %v872 = vld [vmem:[#allocation1 + $0x12] sm:$0xff]
    %v873 = vld [vmem:[#allocation1 + $0x1b] sm:$0xff]
    %v874 = vld [vmem:[#allocation1 + $0x24] sm:$0xff]
    %v875 = vld [vmem:[#allocation1 + $0x2d] sm:$0xff]
    %v876 = vld [vmem:[#allocation1 + $0x36] sm:$0xff]
    %v877 = vld [vmem:[#allocation1 + $0x3f] sm:$0xff]
    %v1669 = vunpack.c.l.b16 %v38
    %v1670 = vunpack.c.h.b16 %v38
    %v1671 = vunpack.c.l.b16 %v39
    %v1672 = vunpack.c.h.b16 %v39
    %v1673 = vunpack.c.l.b16 %v40
    %v1674 = vunpack.c.h.b16 %v40
    %v1675 = vunpack.c.l.b16 %v41
    %v1676 = vunpack.c.h.b16 %v41
    %v1677 = vunpack.c.l.b16 %v42
    %v1678 = vunpack.c.h.b16 %v42
    %v1679 = vunpack.c.l.b16 %v43
    %v1680 = vunpack.c.h.b16 %v43
    %v1681 = vunpack.c.l.b16 %v44
    %v1682 = vunpack.c.h.b16 %v44
    %v1683 = vunpack.c.l.b16 %v45
    %v1684 = vunpack.c.h.b16 %v45
    %v1685 = vunpack.c.l.b16 %v46
    %v1686 = vunpack.c.h.b16 %v46
    %v1687 = vunpack.c.l.b16 %v47
    %v1688 = vunpack.c.h.b16 %v47
    %v1689 = vunpack.c.l.b16 %v48
    %v1690 = vunpack.c.h.b16 %v48
    %v1691 = vunpack.c.l.b16 %v49
    %v1692 = vunpack.c.h.b16 %v49
    %v1693 = vunpack.c.l.b16 %v50
    %v1694 = vunpack.c.h.b16 %v50
    %v1695 = vunpack.c.l.b16 %v51
    %v1696 = vunpack.c.h.b16 %v51
    %v1697 = vunpack.c.l.b16 %v52
    %v1698 = vunpack.c.h.b16 %v52
    %v1699 = vunpack.c.l.b16 %v53
    %v1700 = vunpack.c.h.b16 %v53
    %v1701 = vunpack.c.l.b16 %v54
    %v1702 = vunpack.c.h.b16 %v54
    %v1703 = vunpack.c.l.b16 %v55
    %v1704 = vunpack.c.h.b16 %v55
    %v1705 = vunpack.c.l.b16 %v56
    %v1706 = vunpack.c.h.b16 %v56
    %v1707 = vunpack.c.l.b16 %v57
    %v1708 = vunpack.c.h.b16 %v57
    %v1709 = vunpack.c.l.b16 %v58
    %v1710 = vunpack.c.h.b16 %v58
    %v1711 = vunpack.c.l.b16 %v59
    %v1712 = vunpack.c.h.b16 %v59
    %v1713 = vunpack.c.l.b16 %v60
    %v1714 = vunpack.c.h.b16 %v60
    %v1715 = vunpack.c.l.b16 %v61
    %v1716 = vunpack.c.h.b16 %v61
    %v1717 = vunpack.c.l.b16 %v62
    %v1718 = vunpack.c.h.b16 %v62
    %v1719 = vunpack.c.l.b16 %v63
    %v1720 = vunpack.c.h.b16 %v63
    %v1721 = vunpack.c.l.b16 %v64
    %v1722 = vunpack.c.h.b16 %v64
    %v1723 = vunpack.c.l.b16 %v65
    %v1724 = vunpack.c.h.b16 %v65
    %v1725 = vunpack.c.l.b16 %v66
    %v1726 = vunpack.c.h.b16 %v66
    %v1727 = vunpack.c.l.b16 %v67
    %v1728 = vunpack.c.h.b16 %v67
    %v1729 = vunpack.c.l.b16 %v68
    %v1730 = vunpack.c.h.b16 %v68
    %v1731 = vunpack.c.l.b16 %v69
    %v1732 = vunpack.c.h.b16 %v69
    %v1733 = vunpack.c.l.b16 %v70
    %v1734 = vunpack.c.h.b16 %v70
    %v1735 = vunpack.c.l.b16 %v71
    %v1736 = vunpack.c.h.b16 %v71
    %v1737 = vunpack.c.l.b16 %v72
    %v1738 = vunpack.c.h.b16 %v72
    %v1739 = vunpack.c.l.b16 %v73
    %v1740 = vunpack.c.h.b16 %v73
    %v1741 = vunpack.c.l.b16 %v74
    %v1742 = vunpack.c.h.b16 %v74
    %v1743 = vunpack.c.l.b16 %v75
    %v1744 = vunpack.c.h.b16 %v75
    %v1745 = vunpack.c.l.b16 %v76
    %v1746 = vunpack.c.h.b16 %v76
    %v1747 = vunpack.c.l.b16 %v77
    %v1748 = vunpack.c.h.b16 %v77
    %v1749 = vunpack.c.l.b16 %v78
    %v1750 = vunpack.c.h.b16 %v78
    %v1751 = vunpack.c.l.b16 %v79
    %v1752 = vunpack.c.h.b16 %v79
    %v1753 = vunpack.c.l.b16 %v80
    %v1754 = vunpack.c.h.b16 %v80
    %v1755 = vunpack.c.l.b16 %v81
    %v1756 = vunpack.c.h.b16 %v81
    %v1757 = vunpack.c.l.b16 %v82
    %v1758 = vunpack.c.h.b16 %v82
    %v1759 = vunpack.c.l.b16 %v83
    %v1760 = vunpack.c.h.b16 %v83
    %v1761 = vunpack.c.l.b16 %v84
    %v1762 = vunpack.c.h.b16 %v84
    %v1763 = vunpack.c.l.b16 %v85
    %v1764 = vunpack.c.h.b16 %v85
    %v1765 = vunpack.c.l.b16 %v86
    %v1766 = vunpack.c.h.b16 %v86
    %v1767 = vunpack.c.l.b16 %v87
    %v1768 = vunpack.c.h.b16 %v87
    %v1769 = vunpack.c.l.b16 %v88
    %v1770 = vunpack.c.h.b16 %v88
    %v1771 = vunpack.c.l.b16 %v89
    %v1772 = vunpack.c.h.b16 %v89
    %v1773 = vunpack.c.l.b16 %v90
    %v1774 = vunpack.c.h.b16 %v90
    %v1775 = vunpack.c.l.b16 %v91
    %v1776 = vunpack.c.h.b16 %v91
    %v1777 = vunpack.c.l.b16 %v92
    %v1778 = vunpack.c.h.b16 %v92
    %v1779 = vunpack.c.l.b16 %v93
    %v1780 = vunpack.c.h.b16 %v93
    %v1781 = vunpack.c.l.b16 %v94
    %v1782 = vunpack.c.h.b16 %v94
    %v1783 = vunpack.c.l.b16 %v95
    %v1784 = vunpack.c.h.b16 %v95
    %v1785 = vunpack.c.l.b16 %v96
    %v1786 = vunpack.c.h.b16 %v96
    %v1787 = vunpack.c.l.b16 %v97
    %v1788 = vunpack.c.h.b16 %v97
    %v1789 = vunpack.c.l.b16 %v98
    %v1790 = vunpack.c.h.b16 %v98
    %v1791 = vunpack.c.l.b16 %v99
    %v1792 = vunpack.c.h.b16 %v99
    %v1793 = vunpack.c.l.b16 %v100
    %v1794 = vunpack.c.h.b16 %v100
    %v1795 = vunpack.c.l.b16 %v101
    %v1796 = vunpack.c.h.b16 %v101
    %v1797 = vunpack.c.l.b16 %v102
    %v1798 = vunpack.c.h.b16 %v102
    %v1799 = vunpack.c.l.b16 %v103
    %v1800 = vunpack.c.h.b16 %v103
    %v1801 = vunpack.c.l.b16 %v104
    %v1802 = vunpack.c.h.b16 %v104
    %v1803 = vunpack.c.l.b16 %v105
    %v1804 = vunpack.c.h.b16 %v105
    %v1805 = vunpack.c.l.b16 %v106
    %v1806 = vunpack.c.h.b16 %v106
    %v1807 = vunpack.c.l.b16 %v107
    %v1808 = vunpack.c.h.b16 %v107
    %v1809 = vunpack.c.l.b16 %v108
    %v1810 = vunpack.c.h.b16 %v108
    %v1811 = vunpack.c.l.b16 %v109
    %v1812 = vunpack.c.h.b16 %v109
    %v1813 = vunpack.c.l.b16 %v110
    %v1814 = vunpack.c.h.b16 %v110
    %v1815 = vunpack.c.l.b16 %v111
    %v1816 = vunpack.c.h.b16 %v111
    %v1817 = vunpack.c.l.b16 %v112
    %v1818 = vunpack.c.h.b16 %v112
    %v1819 = vunpack.c.l.b16 %v113
    %v1820 = vunpack.c.h.b16 %v113
    %v1821 = vunpack.c.l.b16 %v114
    %v1822 = vunpack.c.h.b16 %v114
    %v1823 = vunpack.c.l.b16 %v115
    %v1824 = vunpack.c.h.b16 %v115
    %v1825 = vunpack.c.l.b16 %v116
    %v1826 = vunpack.c.h.b16 %v116
    %v1827 = vunpack.c.l.b16 %v117
    %v1828 = vunpack.c.h.b16 %v117
    %v1829 = vunpack.c.l.b16 %v118
    %v1830 = vunpack.c.h.b16 %v118
    %v1831 = vunpack.c.l.b16 %v119
    %v1832 = vunpack.c.h.b16 %v119
    %v1833 = vunpack.c.l.b16 %v120
    %v1834 = vunpack.c.h.b16 %v120
    %v1835 = vunpack.c.l.b16 %v121
    %v1836 = vunpack.c.h.b16 %v121
    %v1837 = vunpack.c.l.b16 %v122
    %v1838 = vunpack.c.h.b16 %v122
    %v1839 = vunpack.c.l.b16 %v123
    %v1840 = vunpack.c.h.b16 %v123
    %v1841 = vunpack.c.l.b16 %v124
    %v1842 = vunpack.c.h.b16 %v124
    %v1843 = vunpack.c.l.b16 %v125
    %v1844 = vunpack.c.h.b16 %v125
    %v1845 = vunpack.c.l.b16 %v126
    %v1846 = vunpack.c.h.b16 %v126
    %v1847 = vunpack.c.l.b16 %v127
    %v1848 = vunpack.c.h.b16 %v127
    %v1849 = vunpack.c.l.b16 %v128
    %v1850 = vunpack.c.h.b16 %v128
    %v1851 = vunpack.c.l.b16 %v129
    %v1852 = vunpack.c.h.b16 %v129
    %v1853 = vunpack.c.l.b16 %v130
    %v1854 = vunpack.c.h.b16 %v130
    %v1855 = vunpack.c.l.b16 %v131
    %v1856 = vunpack.c.h.b16 %v131
    %v1857 = vunpack.c.l.b16 %v132
    %v1858 = vunpack.c.h.b16 %v132
    %v1859 = vunpack.c.l.b16 %v133
    %v1860 = vunpack.c.h.b16 %v133
    %v1861 = vunpack.c.l.b16 %v134
    %v1862 = vunpack.c.h.b16 %v134
    %v1863 = vunpack.c.l.b16 %v135
    %v1864 = vunpack.c.h.b16 %v135
    %v1865 = vunpack.c.l.b16 %v136
    %v1866 = vunpack.c.h.b16 %v136
    %v1867 = vunpack.c.l.b16 %v137
    %v1868 = vunpack.c.h.b16 %v137
    %v1869 = vunpack.c.l.b16 %v138
    %v1870 = vunpack.c.h.b16 %v138
    %v1871 = vunpack.c.l.b16 %v139
    %v1872 = vunpack.c.h.b16 %v139
    %v1873 = vunpack.c.l.b16 %v140
    %v1874 = vunpack.c.h.b16 %v140
    %v1875 = vunpack.c.l.b16 %v141
    %v1876 = vunpack.c.h.b16 %v141
    %v1877 = vunpack.c.l.b16 %v142
    %v1878 = vunpack.c.h.b16 %v142
    %v1879 = vunpack.c.l.b16 %v143
    %v1880 = vunpack.c.h.b16 %v143
    %v1881 = vunpack.c.l.b16 %v144
    %v1882 = vunpack.c.h.b16 %v144
    %v1883 = vunpack.c.l.b16 %v145
    %v1884 = vunpack.c.h.b16 %v145
    %v1885 = vunpack.c.l.b16 %v146
    %v1886 = vunpack.c.h.b16 %v146
    %v1887 = vunpack.c.l.b16 %v147
    %v1888 = vunpack.c.h.b16 %v147
    %v1889 = vunpack.c.l.b16 %v148
    %v1890 = vunpack.c.h.b16 %v148
    %v1891 = vunpack.c.l.b16 %v149
    %v1892 = vunpack.c.h.b16 %v149
    %v1893 = vunpack.c.l.b16 %v150
    %v1894 = vunpack.c.h.b16 %v150
    %v1895 = vunpack.c.l.b16 %v151
    %v1896 = vunpack.c.h.b16 %v151
    %v1897 = vunpack.c.l.b16 %v152
    %v1898 = vunpack.c.h.b16 %v152
    %v1899 = vunpack.c.l.b16 %v153
    %v1900 = vunpack.c.h.b16 %v153
    %v1901 = vunpack.c.l.b16 %v154
    %v1902 = vunpack.c.h.b16 %v154
    %v1903 = vunpack.c.l.b16 %v155
    %v1904 = vunpack.c.h.b16 %v155
    %v1905 = vunpack.c.l.b16 %v156
    %v1906 = vunpack.c.h.b16 %v156
    %v1907 = vunpack.c.l.b16 %v157
    %v1908 = vunpack.c.h.b16 %v157
    %v1909 = vunpack.c.l.b16 %v158
    %v1910 = vunpack.c.h.b16 %v158
    %v1911 = vunpack.c.l.b16 %v159
    %v1912 = vunpack.c.h.b16 %v159
    %v1913 = vunpack.c.l.b16 %v160
    %v1914 = vunpack.c.h.b16 %v160
    %v1915 = vunpack.c.l.b16 %v161
    %v1916 = vunpack.c.h.b16 %v161
    %v1917 = vunpack.c.l.b16 %v162
    %v1918 = vunpack.c.h.b16 %v162
    %v1919 = vunpack.c.l.b16 %v163
    %v1920 = vunpack.c.h.b16 %v163
    %v1921 = vunpack.c.l.b16 %v164
    %v1922 = vunpack.c.h.b16 %v164
    %v1923 = vunpack.c.l.b16 %v165
    %v1924 = vunpack.c.h.b16 %v165
    %v1925 = vunpack.c.l.b16 %v166
    %v1926 = vunpack.c.h.b16 %v166
    %v1927 = vunpack.c.l.b16 %v167
    %v1928 = vunpack.c.h.b16 %v167
    %v1929 = vunpack.c.l.b16 %v168
    %v1930 = vunpack.c.h.b16 %v168
    %v1931 = vunpack.c.l.b16 %v169
    %v1932 = vunpack.c.h.b16 %v169
    %v1933 = vunpack.c.l.b16 %v170
    %v1934 = vunpack.c.h.b16 %v170
    %v1935 = vunpack.c.l.b16 %v171
    %v1936 = vunpack.c.h.b16 %v171
    %v1937 = vunpack.c.l.b16 %v172
    %v1938 = vunpack.c.h.b16 %v172
    %v1939 = vunpack.c.l.b16 %v173
    %v1940 = vunpack.c.h.b16 %v173
    %v1941 = vunpack.c.l.b16 %v174
    %v1942 = vunpack.c.h.b16 %v174
    %v1943 = vunpack.c.l.b16 %v175
    %v1944 = vunpack.c.h.b16 %v175
    %v1945 = vunpack.c.l.b16 %v176
    %v1946 = vunpack.c.h.b16 %v176
    %v1947 = vunpack.c.l.b16 %v177
    %v1948 = vunpack.c.h.b16 %v177
    %v1949 = vunpack.c.l.b16 %v178
    %v1950 = vunpack.c.h.b16 %v178
    %v1951 = vunpack.c.l.b16 %v179
    %v1952 = vunpack.c.h.b16 %v179
    %v1953 = vunpack.c.l.b16 %v180
    %v1954 = vunpack.c.h.b16 %v180
    %v1955 = vunpack.c.l.b16 %v181
    %v1956 = vunpack.c.h.b16 %v181
    %v1957 = vunpack.c.l.b16 %v182
    %v1958 = vunpack.c.h.b16 %v182
    %v1959 = vunpack.c.l.b16 %v183
    %v1960 = vunpack.c.h.b16 %v183
    %v1961 = vunpack.c.l.b16 %v184
    %v1962 = vunpack.c.h.b16 %v184
    %v1963 = vunpack.c.l.b16 %v185
    %v1964 = vunpack.c.h.b16 %v185
    %v1965 = vunpack.c.l.b16 %v186
    %v1966 = vunpack.c.h.b16 %v186
    %v1967 = vunpack.c.l.b16 %v187
    %v1968 = vunpack.c.h.b16 %v187
    %v1969 = vunpack.c.l.b16 %v188
    %v1970 = vunpack.c.h.b16 %v188
    %v1971 = vunpack.c.l.b16 %v189
    %v1972 = vunpack.c.h.b16 %v189
    %v1973 = vunpack.c.l.b16 %v190
    %v1974 = vunpack.c.h.b16 %v190
    %v1975 = vunpack.c.l.b16 %v191
    %v1976 = vunpack.c.h.b16 %v191
    %v1977 = vunpack.c.l.b16 %v192
    %v1978 = vunpack.c.h.b16 %v192
    %v1979 = vunpack.c.l.b16 %v193
    %v1980 = vunpack.c.h.b16 %v193
    %v1981 = vunpack.c.l.b16 %v194
    %v1982 = vunpack.c.h.b16 %v194
    %v1983 = vunpack.c.l.b16 %v195
    %v1984 = vunpack.c.h.b16 %v195
    %v1985 = vunpack.c.l.b16 %v196
    %v1986 = vunpack.c.h.b16 %v196
    %v1987 = vunpack.c.l.b16 %v197
    %v1988 = vunpack.c.h.b16 %v197
    %v1989 = vunpack.c.l.b16 %v198
    %v1990 = vunpack.c.h.b16 %v198
    %v1991 = vunpack.c.l.b16 %v199
    %v1992 = vunpack.c.h.b16 %v199
    %v1993 = vunpack.c.l.b16 %v200
    %v1994 = vunpack.c.h.b16 %v200
    %v1995 = vunpack.c.l.b16 %v201
    %v1996 = vunpack.c.h.b16 %v201
    %v1997 = vunpack.c.l.b16 %v202
    %v1998 = vunpack.c.h.b16 %v202
    %v1999 = vunpack.c.l.b16 %v203
    %v2000 = vunpack.c.h.b16 %v203
    %v2001 = vunpack.c.l.b16 %v204
    %v2002 = vunpack.c.h.b16 %v204
    %v2003 = vunpack.c.l.b16 %v205
    %v2004 = vunpack.c.h.b16 %v205
    %v2005 = vunpack.c.l.b16 %v206
    %v2006 = vunpack.c.h.b16 %v206
    %v2007 = vunpack.c.l.b16 %v207
    %v2008 = vunpack.c.h.b16 %v207
    %v2009 = vunpack.c.l.b16 %v208
    %v2010 = vunpack.c.h.b16 %v208
    %v2011 = vunpack.c.l.b16 %v209
    %v2012 = vunpack.c.h.b16 %v209
    %v2013 = vunpack.c.l.b16 %v210
    %v2014 = vunpack.c.h.b16 %v210
    %v2015 = vunpack.c.l.b16 %v211
    %v2016 = vunpack.c.h.b16 %v211
    %v2017 = vunpack.c.l.b16 %v212
    %v2018 = vunpack.c.h.b16 %v212
    %v2019 = vunpack.c.l.b16 %v213
    %v2020 = vunpack.c.h.b16 %v213
    %v2021 = vunpack.c.l.b16 %v214
    %v2022 = vunpack.c.h.b16 %v214
    %v2023 = vunpack.c.l.b16 %v215
    %v2024 = vunpack.c.h.b16 %v215
    %v2025 = vunpack.c.l.b16 %v216
    %v2026 = vunpack.c.h.b16 %v216
    %v2027 = vunpack.c.l.b16 %v217
    %v2028 = vunpack.c.h.b16 %v217
    %v2029 = vunpack.c.l.b16 %v218
    %v2030 = vunpack.c.h.b16 %v218
    %v2031 = vunpack.c.l.b16 %v219
    %v2032 = vunpack.c.h.b16 %v219
    %v2033 = vunpack.c.l.b16 %v220
    %v2034 = vunpack.c.h.b16 %v220
    %v2035 = vunpack.c.l.b16 %v221
    %v2036 = vunpack.c.h.b16 %v221
    %v2037 = vunpack.c.l.b16 %v222
    %v2038 = vunpack.c.h.b16 %v222
    %v2039 = vunpack.c.l.b16 %v223
    %v2040 = vunpack.c.h.b16 %v223
    %v2041 = vunpack.c.l.b16 %v224
    %v2042 = vunpack.c.h.b16 %v224
    %v2043 = vunpack.c.l.b16 %v225
    %v2044 = vunpack.c.h.b16 %v225
    %v2045 = vunpack.c.l.b16 %v226
    %v2046 = vunpack.c.h.b16 %v226
    %v2047 = vunpack.c.l.b16 %v227
    %v2048 = vunpack.c.h.b16 %v227
    %v2049 = vunpack.c.l.b16 %v228
    %v2050 = vunpack.c.h.b16 %v228
    %v2051 = vunpack.c.l.b16 %v229
    %v2052 = vunpack.c.h.b16 %v229
    %v2053 = vunpack.c.l.b16 %v230
    %v2054 = vunpack.c.h.b16 %v230
    %v2055 = vunpack.c.l.b16 %v231
    %v2056 = vunpack.c.h.b16 %v231
    %v2057 = vunpack.c.l.b16 %v232
    %v2058 = vunpack.c.h.b16 %v232
    %v2059 = vunpack.c.l.b16 %v233
    %v2060 = vunpack.c.h.b16 %v233
    %v2061 = vunpack.c.l.b16 %v234
    %v2062 = vunpack.c.h.b16 %v234
    %v2063 = vunpack.c.l.b16 %v235
    %v2064 = vunpack.c.h.b16 %v235
    %v2065 = vunpack.c.l.b16 %v236
    %v2066 = vunpack.c.h.b16 %v236
    %v2067 = vunpack.c.l.b16 %v237
    %v2068 = vunpack.c.h.b16 %v237
    %v2069 = vunpack.c.l.b16 %v238
    %v2070 = vunpack.c.h.b16 %v238
    %v2071 = vunpack.c.l.b16 %v239
    %v2072 = vunpack.c.h.b16 %v239
    %v2073 = vunpack.c.l.b16 %v240
    %v2074 = vunpack.c.h.b16 %v240
    %v2075 = vunpack.c.l.b16 %v241
    %v2076 = vunpack.c.h.b16 %v241
    %v2077 = vunpack.c.l.b16 %v242
    %v2078 = vunpack.c.h.b16 %v242
    %v2079 = vunpack.c.l.b16 %v243
    %v2080 = vunpack.c.h.b16 %v243
    %v2081 = vunpack.c.l.b16 %v244
    %v2082 = vunpack.c.h.b16 %v244
    %v2083 = vunpack.c.l.b16 %v245
    %v2084 = vunpack.c.h.b16 %v245
    %v2085 = vunpack.c.l.b16 %v246
    %v2086 = vunpack.c.h.b16 %v246
    %v2087 = vunpack.c.l.b16 %v247
    %v2088 = vunpack.c.h.b16 %v247
    %v2089 = vunpack.c.l.b16 %v248
    %v2090 = vunpack.c.h.b16 %v248
    %v2091 = vunpack.c.l.b16 %v249
    %v2092 = vunpack.c.h.b16 %v249
    %v2093 = vunpack.c.l.b16 %v250
    %v2094 = vunpack.c.h.b16 %v250
    %v2095 = vunpack.c.l.b16 %v251
    %v2096 = vunpack.c.h.b16 %v251
    %v2097 = vunpack.c.l.b16 %v252
    %v2098 = vunpack.c.h.b16 %v252
    %v2099 = vunpack.c.l.b16 %v253
    %v2100 = vunpack.c.h.b16 %v253
    %v2101 = vunpack.c.l.b16 %v254
    %v2102 = vunpack.c.h.b16 %v254
    %v2103 = vunpack.c.l.b16 %v255
    %v2104 = vunpack.c.h.b16 %v255
    %v2105 = vunpack.c.l.b16 %v256
    %v2106 = vunpack.c.h.b16 %v256
    %v2107 = vunpack.c.l.b16 %v257
    %v2108 = vunpack.c.h.b16 %v257
    %v2109 = vunpack.c.l.b16 %v258
    %v2110 = vunpack.c.h.b16 %v258
    %v2111 = vunpack.c.l.b16 %v259
    %v2112 = vunpack.c.h.b16 %v259
    %v2113 = vunpack.c.l.b16 %v260
    %v2114 = vunpack.c.h.b16 %v260
    %v2115 = vunpack.c.l.b16 %v261
    %v2116 = vunpack.c.h.b16 %v261
    %v2117 = vunpack.c.l.b16 %v262
    %v2118 = vunpack.c.h.b16 %v262
    %v2119 = vunpack.c.l.b16 %v263
    %v2120 = vunpack.c.h.b16 %v263
    %v2121 = vunpack.c.l.b16 %v264
    %v2122 = vunpack.c.h.b16 %v264
    %v2123 = vunpack.c.l.b16 %v265
    %v2124 = vunpack.c.h.b16 %v265
    %v2125 = vunpack.c.l.b16 %v266
    %v2126 = vunpack.c.h.b16 %v266
    %v2127 = vunpack.c.l.b16 %v267
    %v2128 = vunpack.c.h.b16 %v267
    %v2129 = vunpack.c.l.b16 %v268
    %v2130 = vunpack.c.h.b16 %v268
    %v2131 = vunpack.c.l.b16 %v269
    %v2132 = vunpack.c.h.b16 %v269
    %v2133 = vunpack.c.l.b16 %v270
    %v2134 = vunpack.c.h.b16 %v270
    %v2135 = vunpack.c.l.b16 %v271
    %v2136 = vunpack.c.h.b16 %v271
    %v2137 = vunpack.c.l.b16 %v272
    %v2138 = vunpack.c.h.b16 %v272
    %v2139 = vunpack.c.l.b16 %v273
    %v2140 = vunpack.c.h.b16 %v273
    %v2141 = vunpack.c.l.b16 %v274
    %v2142 = vunpack.c.h.b16 %v274
    %v2143 = vunpack.c.l.b16 %v275
    %v2144 = vunpack.c.h.b16 %v275
    %v2145 = vunpack.c.l.b16 %v276
    %v2146 = vunpack.c.h.b16 %v276
    %v2147 = vunpack.c.l.b16 %v277
    %v2148 = vunpack.c.h.b16 %v277
    %v2149 = vunpack.c.l.b16 %v278
    %v2150 = vunpack.c.h.b16 %v278
    %v2151 = vunpack.c.l.b16 %v279
    %v2152 = vunpack.c.h.b16 %v279
    %v2153 = vunpack.c.l.b16 %v280
    %v2154 = vunpack.c.h.b16 %v280
    %v2155 = vunpack.c.l.b16 %v281
    %v2156 = vunpack.c.h.b16 %v281
    %v2157 = vunpack.c.l.b16 %v282
    %v2158 = vunpack.c.h.b16 %v282
    %v2159 = vunpack.c.l.b16 %v283
    %v2160 = vunpack.c.h.b16 %v283
    %v2161 = vunpack.c.l.b16 %v284
    %v2162 = vunpack.c.h.b16 %v284
    %v2163 = vunpack.c.l.b16 %v285
    %v2164 = vunpack.c.h.b16 %v285
    %v2165 = vunpack.c.l.b16 %v286
    %v2166 = vunpack.c.h.b16 %v286
    %v2167 = vunpack.c.l.b16 %v287
    %v2168 = vunpack.c.h.b16 %v287
    %v2169 = vunpack.c.l.b16 %v288
    %v2170 = vunpack.c.h.b16 %v288
    %v2171 = vunpack.c.l.b16 %v289
    %v2172 = vunpack.c.h.b16 %v289
    %v2173 = vunpack.c.l.b16 %v290
    %v2174 = vunpack.c.h.b16 %v290
    %v2175 = vunpack.c.l.b16 %v291
    %v2176 = vunpack.c.h.b16 %v291
    %v2177 = vunpack.c.l.b16 %v292
    %v2178 = vunpack.c.h.b16 %v292
    %v2179 = vunpack.c.l.b16 %v293
    %v2180 = vunpack.c.h.b16 %v293
    %v2181 = vunpack.c.l.b16 %v294
    %v2182 = vunpack.c.h.b16 %v294
    %v2183 = vunpack.c.l.b16 %v295
    %v2184 = vunpack.c.h.b16 %v295
    %v2185 = vunpack.c.l.b16 %v296
    %v2186 = vunpack.c.h.b16 %v296
    %v2187 = vunpack.c.l.b16 %v297
    %v2188 = vunpack.c.h.b16 %v297
    %v2189 = vunpack.c.l.b16 %v298
    %v2190 = vunpack.c.h.b16 %v298
    %v2191 = vunpack.c.l.b16 %v299
    %v2192 = vunpack.c.h.b16 %v299
    %v2193 = vunpack.c.l.b16 %v300
    %v2194 = vunpack.c.h.b16 %v300
    %v2195 = vunpack.c.l.b16 %v301
    %v2196 = vunpack.c.h.b16 %v301
    %v2197 = vunpack.c.l.b16 %v302
    %v2198 = vunpack.c.h.b16 %v302
    %v2199 = vunpack.c.l.b16 %v303
    %v2200 = vunpack.c.h.b16 %v303
    %v2201 = vunpack.c.l.b16 %v304
    %v2202 = vunpack.c.h.b16 %v304
    %v2203 = vunpack.c.l.b16 %v305
    %v2204 = vunpack.c.h.b16 %v305
    %v2205 = vunpack.c.l.b16 %v306
    %v2206 = vunpack.c.h.b16 %v306
    %v2207 = vunpack.c.l.b16 %v307
    %v2208 = vunpack.c.h.b16 %v307
    %v2209 = vunpack.c.l.b16 %v308
    %v2210 = vunpack.c.h.b16 %v308
    %v2211 = vunpack.c.l.b16 %v309
    %v2212 = vunpack.c.h.b16 %v309
    %v2213 = vunpack.c.l.b16 %v310
    %v2214 = vunpack.c.h.b16 %v310
    %v2215 = vunpack.c.l.b16 %v311
    %v2216 = vunpack.c.h.b16 %v311
    %v2217 = vunpack.c.l.b16 %v312
    %v2218 = vunpack.c.h.b16 %v312
    %v2219 = vunpack.c.l.b16 %v313
    %v2220 = vunpack.c.h.b16 %v313
    %v2221 = vunpack.c.l.b16 %v314
    %v2222 = vunpack.c.h.b16 %v314
    %v2223 = vunpack.c.l.b16 %v315
    %v2224 = vunpack.c.h.b16 %v315
    %v2225 = vunpack.c.l.b16 %v316
    %v2226 = vunpack.c.h.b16 %v316
    %v2227 = vunpack.c.l.b16 %v317
    %v2228 = vunpack.c.h.b16 %v317
    %v2229 = vunpack.c.l.b16 %v318
    %v2230 = vunpack.c.h.b16 %v318
    %v2231 = vunpack.c.l.b16 %v319
    %v2232 = vunpack.c.h.b16 %v319
    %v2233 = vunpack.c.l.b16 %v320
    %v2234 = vunpack.c.h.b16 %v320
    %v2235 = vunpack.c.l.b16 %v321
    %v2236 = vunpack.c.h.b16 %v321
    %v2237 = vunpack.c.l.b16 %v322
    %v2238 = vunpack.c.h.b16 %v322
    %v2239 = vunpack.c.l.b16 %v323
    %v2240 = vunpack.c.h.b16 %v323
    %v2241 = vunpack.c.l.b16 %v324
    %v2242 = vunpack.c.h.b16 %v324
    %v2243 = vunpack.c.l.b16 %v325
    %v2244 = vunpack.c.h.b16 %v325
    %v2245 = vunpack.c.l.b16 %v326
    %v2246 = vunpack.c.h.b16 %v326
    %v2247 = vunpack.c.l.b16 %v327
    %v2248 = vunpack.c.h.b16 %v327
    %v2249 = vunpack.c.l.b16 %v328
    %v2250 = vunpack.c.h.b16 %v328
    %v2251 = vunpack.c.l.b16 %v329
    %v2252 = vunpack.c.h.b16 %v329
    %v2253 = vunpack.c.l.b16 %v330
    %v2254 = vunpack.c.h.b16 %v330
    %v2255 = vunpack.c.l.b16 %v331
    %v2256 = vunpack.c.h.b16 %v331
    %v2257 = vunpack.c.l.b16 %v332
    %v2258 = vunpack.c.h.b16 %v332
    %v2259 = vunpack.c.l.b16 %v333
    %v2260 = vunpack.c.h.b16 %v333
    %v2261 = vunpack.c.l.b16 %v334
    %v2262 = vunpack.c.h.b16 %v334
    %v2263 = vunpack.c.l.b16 %v335
    %v2264 = vunpack.c.h.b16 %v335
    %v2265 = vunpack.c.l.b16 %v336
    %v2266 = vunpack.c.h.b16 %v336
    %v2267 = vunpack.c.l.b16 %v337
    %v2268 = vunpack.c.h.b16 %v337
    %v2269 = vunpack.c.l.b16 %v338
    %v2270 = vunpack.c.h.b16 %v338
    %v2271 = vunpack.c.l.b16 %v339
    %v2272 = vunpack.c.h.b16 %v339
    %v2273 = vunpack.c.l.b16 %v340
    %v2274 = vunpack.c.h.b16 %v340
    %v2275 = vunpack.c.l.b16 %v341
    %v2276 = vunpack.c.h.b16 %v341
    %v2277 = vunpack.c.l.b16 %v342
    %v2278 = vunpack.c.h.b16 %v342
    %v2279 = vunpack.c.l.b16 %v343
    %v2280 = vunpack.c.h.b16 %v343
    %v2281 = vunpack.c.l.b16 %v344
    %v2282 = vunpack.c.h.b16 %v344
    %v2283 = vunpack.c.l.b16 %v345
    %v2284 = vunpack.c.h.b16 %v345
    %v2285 = vunpack.c.l.b16 %v346
    %v2286 = vunpack.c.h.b16 %v346
    %v2287 = vunpack.c.l.b16 %v347
    %v2288 = vunpack.c.h.b16 %v347
    %v2289 = vunpack.c.l.b16 %v348
    %v2290 = vunpack.c.h.b16 %v348
    %v2291 = vunpack.c.l.b16 %v349
    %v2292 = vunpack.c.h.b16 %v349
    %v2293 = vunpack.c.l.b16 %v350
    %v2294 = vunpack.c.h.b16 %v350
    %v2295 = vunpack.c.l.b16 %v351
    %v2296 = vunpack.c.h.b16 %v351
    %v2297 = vunpack.c.l.b16 %v352
    %v2298 = vunpack.c.h.b16 %v352
    %v2299 = vunpack.c.l.b16 %v353
    %v2300 = vunpack.c.h.b16 %v353
    %v2301 = vunpack.c.l.b16 %v354
    %v2302 = vunpack.c.h.b16 %v354
    %v2303 = vunpack.c.l.b16 %v355
    %v2304 = vunpack.c.h.b16 %v355
    %v2305 = vunpack.c.l.b16 %v356
    %v2306 = vunpack.c.h.b16 %v356
    %v2307 = vunpack.c.l.b16 %v357
    %v2308 = vunpack.c.h.b16 %v357
    %v2309 = vunpack.c.l.b16 %v358
    %v2310 = vunpack.c.h.b16 %v358
    %v2311 = vunpack.c.l.b16 %v359
    %v2312 = vunpack.c.h.b16 %v359
    %v2313 = vunpack.c.l.b16 %v360
    %v2314 = vunpack.c.h.b16 %v360
    %v2315 = vunpack.c.l.b16 %v361
    %v2316 = vunpack.c.h.b16 %v361
    %v2317 = vunpack.c.l.b16 %v362
    %v2318 = vunpack.c.h.b16 %v362
    %v2319 = vunpack.c.l.b16 %v363
    %v2320 = vunpack.c.h.b16 %v363
    %v2321 = vunpack.c.l.b16 %v364
    %v2322 = vunpack.c.h.b16 %v364
    %v2323 = vunpack.c.l.b16 %v365
    %v2324 = vunpack.c.h.b16 %v365
    %v2325 = vunpack.c.l.b16 %v366
    %v2326 = vunpack.c.h.b16 %v366
    %v2327 = vunpack.c.l.b16 %v367
    %v2328 = vunpack.c.h.b16 %v367
    %v2329 = vunpack.c.l.b16 %v368
    %v2330 = vunpack.c.h.b16 %v368
    %v2331 = vunpack.c.l.b16 %v369
    %v2332 = vunpack.c.h.b16 %v369
    %v2333 = vunpack.c.l.b16 %v370
    %v2334 = vunpack.c.h.b16 %v370
    %v2335 = vunpack.c.l.b16 %v371
    %v2336 = vunpack.c.h.b16 %v371
    %v2337 = vunpack.c.l.b16 %v372
    %v2338 = vunpack.c.h.b16 %v372
    %v2339 = vunpack.c.l.b16 %v373
    %v2340 = vunpack.c.h.b16 %v373
    %v2341 = vunpack.c.l.b16 %v374
    %v2342 = vunpack.c.h.b16 %v374
    %v2343 = vunpack.c.l.b16 %v375
    %v2344 = vunpack.c.h.b16 %v375
    %v2345 = vunpack.c.l.b16 %v376
    %v2346 = vunpack.c.h.b16 %v376
    %v2347 = vunpack.c.l.b16 %v377
    %v2348 = vunpack.c.h.b16 %v377
    %v2349 = vunpack.c.l.b16 %v378
    %v2350 = vunpack.c.h.b16 %v378
    %v2351 = vunpack.c.l.b16 %v379
    %v2352 = vunpack.c.h.b16 %v379
    %v2353 = vunpack.c.l.b16 %v380
    %v2354 = vunpack.c.h.b16 %v380
    %v2355 = vunpack.c.l.b16 %v381
    %v2356 = vunpack.c.h.b16 %v381
    %v2357 = vunpack.c.l.b16 %v382
    %v2358 = vunpack.c.h.b16 %v382
    %v2359 = vunpack.c.l.b16 %v383
    %v2360 = vunpack.c.h.b16 %v383
    %v2361 = vunpack.c.l.b16 %v384
    %v2362 = vunpack.c.h.b16 %v384
    %v2363 = vunpack.c.l.b16 %v385
    %v2364 = vunpack.c.h.b16 %v385
    %v2365 = vunpack.c.l.b16 %v386
    %v2366 = vunpack.c.h.b16 %v386
    %v2367 = vunpack.c.l.b16 %v387
    %v2368 = vunpack.c.h.b16 %v387
    %v2369 = vunpack.c.l.b16 %v388
    %v2370 = vunpack.c.h.b16 %v388
    %v2371 = vunpack.c.l.b16 %v389
    %v2372 = vunpack.c.h.b16 %v389
    %v2373 = vunpack.c.l.b16 %v390
    %v2374 = vunpack.c.h.b16 %v390
    %v2375 = vunpack.c.l.b16 %v391
    %v2376 = vunpack.c.h.b16 %v391
    %v2377 = vunpack.c.l.b16 %v392
    %v2378 = vunpack.c.h.b16 %v392
    %v2379 = vunpack.c.l.b16 %v393
    %v2380 = vunpack.c.h.b16 %v393
    %v2381 = vunpack.c.l.b16 %v394
    %v2382 = vunpack.c.h.b16 %v394
    %v2383 = vunpack.c.l.b16 %v395
    %v2384 = vunpack.c.h.b16 %v395
    %v2385 = vunpack.c.l.b16 %v396
    %v2386 = vunpack.c.h.b16 %v396
    %v2387 = vunpack.c.l.b16 %v397
    %v2388 = vunpack.c.h.b16 %v397
    %v2389 = vunpack.c.l.b16 %v398
    %v2390 = vunpack.c.h.b16 %v398
    %v2391 = vunpack.c.l.b16 %v399
    %v2392 = vunpack.c.h.b16 %v399
    %v2393 = vunpack.c.l.b16 %v400
    %v2394 = vunpack.c.h.b16 %v400
    %v2395 = vunpack.c.l.b16 %v401
    %v2396 = vunpack.c.h.b16 %v401
    %v2397 = vunpack.c.l.b16 %v402
    %v2398 = vunpack.c.h.b16 %v402
    %v2399 = vunpack.c.l.b16 %v403
    %v2400 = vunpack.c.h.b16 %v403
    %v2401 = vunpack.c.l.b16 %v404
    %v2402 = vunpack.c.h.b16 %v404
    %v2403 = vunpack.c.l.b16 %v405
    %v2404 = vunpack.c.h.b16 %v405
    %v2405 = vunpack.c.l.b16 %v406
    %v2406 = vunpack.c.h.b16 %v406
    %v2407 = vunpack.c.l.b16 %v407
    %v2408 = vunpack.c.h.b16 %v407
    %v2409 = vunpack.c.l.b16 %v408
    %v2410 = vunpack.c.h.b16 %v408
    %v2411 = vunpack.c.l.b16 %v409
    %v2412 = vunpack.c.h.b16 %v409
    %v2413 = vunpack.c.l.b16 %v410
    %v2414 = vunpack.c.h.b16 %v410
    %v2415 = vunpack.c.l.b16 %v411
    %v2416 = vunpack.c.h.b16 %v411
    %v2417 = vunpack.c.l.b16 %v412
    %v2418 = vunpack.c.h.b16 %v412
    %v2419 = vunpack.c.l.b16 %v413
    %v2420 = vunpack.c.h.b16 %v413
    %v2421 = vunpack.c.l.b16 %v414
    %v2422 = vunpack.c.h.b16 %v414
    %v2423 = vunpack.c.l.b16 %v415
    %v2424 = vunpack.c.h.b16 %v415
    %v2425 = vunpack.c.l.b16 %v416
    %v2426 = vunpack.c.h.b16 %v416
    %v2427 = vunpack.c.l.b16 %v417
    %v2428 = vunpack.c.h.b16 %v417
    %v2429 = vunpack.c.l.b16 %v418
    %v2430 = vunpack.c.h.b16 %v418
    %v2431 = vunpack.c.l.b16 %v419
    %v2432 = vunpack.c.h.b16 %v419
    %v2433 = vunpack.c.l.b16 %v420
    %v2434 = vunpack.c.h.b16 %v420
    %v2435 = vunpack.c.l.b16 %v421
    %v2436 = vunpack.c.h.b16 %v421
    %v2437 = vunpack.c.l.b16 %v422
    %v2438 = vunpack.c.h.b16 %v422
    %v2439 = vunpack.c.l.b16 %v423
    %v2440 = vunpack.c.h.b16 %v423
    %v2441 = vunpack.c.l.b16 %v424
    %v2442 = vunpack.c.h.b16 %v424
    %v2443 = vunpack.c.l.b16 %v425
    %v2444 = vunpack.c.h.b16 %v425
    %v2445 = vunpack.c.l.b16 %v426
    %v2446 = vunpack.c.h.b16 %v426
    %v2447 = vunpack.c.l.b16 %v427
    %v2448 = vunpack.c.h.b16 %v427
    %v2449 = vunpack.c.l.b16 %v428
    %v2450 = vunpack.c.h.b16 %v428
    %v2451 = vunpack.c.l.b16 %v429
    %v2452 = vunpack.c.h.b16 %v429
    %v2453 = vunpack.c.l.b16 %v430
    %v2454 = vunpack.c.h.b16 %v430
    %v2455 = vunpack.c.l.b16 %v431
    %v2456 = vunpack.c.h.b16 %v431
    %v2457 = vunpack.c.l.b16 %v432
    %v2458 = vunpack.c.h.b16 %v432
    %v2459 = vunpack.c.l.b16 %v433
    %v2460 = vunpack.c.h.b16 %v433
    %v2461 = vunpack.c.l.b16 %v434
    %v2462 = vunpack.c.h.b16 %v434
    %v2463 = vunpack.c.l.b16 %v435
    %v2464 = vunpack.c.h.b16 %v435
    %v2465 = vunpack.c.l.b16 %v436
    %v2466 = vunpack.c.h.b16 %v436
    %v2467 = vunpack.c.l.b16 %v437
    %v2468 = vunpack.c.h.b16 %v437
    %v2469 = vunpack.c.l.b16 %v438
    %v2470 = vunpack.c.h.b16 %v438
    %v2471 = vunpack.c.l.b16 %v439
    %v2472 = vunpack.c.h.b16 %v439
    %v2473 = vunpack.c.l.b16 %v440
    %v2474 = vunpack.c.h.b16 %v440
    %v2475 = vunpack.c.l.b16 %v441
    %v2476 = vunpack.c.h.b16 %v441
    %v2477 = vunpack.c.l.b16 %v442
    %v2478 = vunpack.c.h.b16 %v442
    %v2479 = vunpack.c.l.b16 %v443
    %v2480 = vunpack.c.h.b16 %v443
    %v2481 = vunpack.c.l.b16 %v444
    %v2482 = vunpack.c.h.b16 %v444
    %v2483 = vunpack.c.l.b16 %v445
    %v2484 = vunpack.c.h.b16 %v445
    %v2485 = vunpack.c.l.b16 %v446
    %v2486 = vunpack.c.h.b16 %v446
    %v2487 = vunpack.c.l.b16 %v447
    %v2488 = vunpack.c.h.b16 %v447
    %v2489 = vunpack.c.l.b16 %v448
    %v2490 = vunpack.c.h.b16 %v448
    %v2491 = vunpack.c.l.b16 %v449
    %v2492 = vunpack.c.h.b16 %v449
    %v2493 = vunpack.c.l.b16 %v450
    %v2494 = vunpack.c.h.b16 %v450
    %v2495 = vunpack.c.l.b16 %v451
    %v2496 = vunpack.c.h.b16 %v451
    %v2497 = vunpack.c.l.b16 %v452
    %v2498 = vunpack.c.h.b16 %v452
    %v2499 = vunpack.c.l.b16 %v453
    %v2500 = vunpack.c.h.b16 %v453
    %v2501 = vunpack.c.l.b16 %v454
    %v2502 = vunpack.c.h.b16 %v454
    %v2503 = vunpack.c.l.b16 %v455
    %v2504 = vunpack.c.h.b16 %v455
    %v2505 = vunpack.c.l.b16 %v456
    %v2506 = vunpack.c.h.b16 %v456
    %v2507 = vunpack.c.l.b16 %v457
    %v2508 = vunpack.c.h.b16 %v457
    %v2509 = vunpack.c.l.b16 %v458
    %v2510 = vunpack.c.h.b16 %v458
    %v2511 = vunpack.c.l.b16 %v459
    %v2512 = vunpack.c.h.b16 %v459
    %v2513 = vunpack.c.l.b16 %v460
    %v2514 = vunpack.c.h.b16 %v460
    %v2515 = vunpack.c.l.b16 %v461
    %v2516 = vunpack.c.h.b16 %v461
    %v2517 = vunpack.c.l.b16 %v462
    %v2518 = vunpack.c.h.b16 %v462
    %v2519 = vunpack.c.l.b16 %v463
    %v2520 = vunpack.c.h.b16 %v463
    %v2521 = vunpack.c.l.b16 %v464
    %v2522 = vunpack.c.h.b16 %v464
    %v2523 = vunpack.c.l.b16 %v465
    %v2524 = vunpack.c.h.b16 %v465
    %v2525 = vunpack.c.l.b16 %v466
    %v2526 = vunpack.c.h.b16 %v466
    %v2527 = vunpack.c.l.b16 %v467
    %v2528 = vunpack.c.h.b16 %v467
    %v2529 = vunpack.c.l.b16 %v468
    %v2530 = vunpack.c.h.b16 %v468
    %v2531 = vunpack.c.l.b16 %v469
    %v2532 = vunpack.c.h.b16 %v469
    %v2533 = vunpack.c.l.b16 %v470
    %v2534 = vunpack.c.h.b16 %v470
    %v2535 = vunpack.c.l.b16 %v471
    %v2536 = vunpack.c.h.b16 %v471
    %v2537 = vunpack.c.l.b16 %v472
    %v2538 = vunpack.c.h.b16 %v472
    %v2539 = vunpack.c.l.b16 %v473
    %v2540 = vunpack.c.h.b16 %v473
    %v2541 = vunpack.c.l.b16 %v474
    %v2542 = vunpack.c.h.b16 %v474
    %v2543 = vunpack.c.l.b16 %v475
    %v2544 = vunpack.c.h.b16 %v475
    %v2545 = vunpack.c.l.b16 %v476
    %v2546 = vunpack.c.h.b16 %v476
    %v2547 = vunpack.c.l.b16 %v477
    %v2548 = vunpack.c.h.b16 %v477
    %v2549 = vunpack.c.l.b16 %v478
    %v2550 = vunpack.c.h.b16 %v478
    %v2551 = vunpack.c.l.b16 %v479
    %v2552 = vunpack.c.h.b16 %v479
    %v2553 = vunpack.c.l.b16 %v480
    %v2554 = vunpack.c.h.b16 %v480
    %v2555 = vunpack.c.l.b16 %v481
    %v2556 = vunpack.c.h.b16 %v481
    %v2557 = vunpack.c.l.b16 %v482
    %v2558 = vunpack.c.h.b16 %v482
    %v2559 = vunpack.c.l.b16 %v483
    %v2560 = vunpack.c.h.b16 %v483
    %v2561 = vunpack.c.l.b16 %v484
    %v2562 = vunpack.c.h.b16 %v484
    %v2563 = vunpack.c.l.b16 %v485
    %v2564 = vunpack.c.h.b16 %v485
    %v2565 = vunpack.c.l.b16 %v486
    %v2566 = vunpack.c.h.b16 %v486
    %v2567 = vunpack.c.l.b16 %v487
    %v2568 = vunpack.c.h.b16 %v487
    %v2569 = vunpack.c.l.b16 %v488
    %v2570 = vunpack.c.h.b16 %v488
    %v2571 = vunpack.c.l.b16 %v489
    %v2572 = vunpack.c.h.b16 %v489
    %v2573 = vunpack.c.l.b16 %v490
    %v2574 = vunpack.c.h.b16 %v490
    %v2575 = vunpack.c.l.b16 %v491
    %v2576 = vunpack.c.h.b16 %v491
    %v2577 = vunpack.c.l.b16 %v492
    %v2578 = vunpack.c.h.b16 %v492
    %v2579 = vunpack.c.l.b16 %v493
    %v2580 = vunpack.c.h.b16 %v493
    %v2581 = vunpack.c.l.b16 %v494
    %v2582 = vunpack.c.h.b16 %v494
    %v2583 = vunpack.c.l.b16 %v495
    %v2584 = vunpack.c.h.b16 %v495
    %v2585 = vunpack.c.l.b16 %v496
    %v2586 = vunpack.c.h.b16 %v496
    %v2587 = vunpack.c.l.b16 %v497
    %v2588 = vunpack.c.h.b16 %v497
    %v2589 = vunpack.c.l.b16 %v498
    %v2590 = vunpack.c.h.b16 %v498
    %v2591 = vunpack.c.l.b16 %v499
    %v2592 = vunpack.c.h.b16 %v499
    %v2593 = vunpack.c.l.b16 %v500
    %v2594 = vunpack.c.h.b16 %v500
    %v2595 = vunpack.c.l.b16 %v501
    %v2596 = vunpack.c.h.b16 %v501
    %v2597 = vunpack.c.l.b16 %v502
    %v2598 = vunpack.c.h.b16 %v502
    %v2599 = vunpack.c.l.b16 %v503
    %v2600 = vunpack.c.h.b16 %v503
    %v2601 = vunpack.c.l.b16 %v504
    %v2602 = vunpack.c.h.b16 %v504
    %v2603 = vunpack.c.l.b16 %v505
    %v2604 = vunpack.c.h.b16 %v505
    %v2605 = vunpack.c.l.b16 %v506
    %v2606 = vunpack.c.h.b16 %v506
    %v2607 = vunpack.c.l.b16 %v507
    %v2608 = vunpack.c.h.b16 %v507
    %v2609 = vunpack.c.l.b16 %v508
    %v2610 = vunpack.c.h.b16 %v508
    %v2611 = vunpack.c.l.b16 %v509
    %v2612 = vunpack.c.h.b16 %v509
    %v2613 = vunpack.c.l.b16 %v510
    %v2614 = vunpack.c.h.b16 %v510
    %v2615 = vunpack.c.l.b16 %v511
    %v2616 = vunpack.c.h.b16 %v511
    %v2617 = vunpack.c.l.b16 %v512
    %v2618 = vunpack.c.h.b16 %v512
    %v2619 = vunpack.c.l.b16 %v513
    %v2620 = vunpack.c.h.b16 %v513
    %v2621 = vunpack.c.l.b16 %v514
    %v2622 = vunpack.c.h.b16 %v514
    %v2623 = vunpack.c.l.b16 %v515
    %v2624 = vunpack.c.h.b16 %v515
    %v2625 = vunpack.c.l.b16 %v516
    %v2626 = vunpack.c.h.b16 %v516
    %v2627 = vunpack.c.l.b16 %v517
    %v2628 = vunpack.c.h.b16 %v517
    %v2629 = vunpack.c.l.b16 %v518
    %v2630 = vunpack.c.h.b16 %v518
    %v2631 = vunpack.c.l.b16 %v519
    %v2632 = vunpack.c.h.b16 %v519
    %v2633 = vunpack.c.l.b16 %v520
    %v2634 = vunpack.c.h.b16 %v520
    %v2635 = vunpack.c.l.b16 %v521
    %v2636 = vunpack.c.h.b16 %v521
    %v2637 = vunpack.c.l.b16 %v522
    %v2638 = vunpack.c.h.b16 %v522
    %v2639 = vunpack.c.l.b16 %v523
    %v2640 = vunpack.c.h.b16 %v523
    %v2641 = vunpack.c.l.b16 %v524
    %v2642 = vunpack.c.h.b16 %v524
    %v2643 = vunpack.c.l.b16 %v525
    %v2644 = vunpack.c.h.b16 %v525
    %v2645 = vunpack.c.l.b16 %v526
    %v2646 = vunpack.c.h.b16 %v526
    %v2647 = vunpack.c.l.b16 %v527
    %v2648 = vunpack.c.h.b16 %v527
    %v2649 = vunpack.c.l.b16 %v528
    %v2650 = vunpack.c.h.b16 %v528
    %v2651 = vunpack.c.l.b16 %v529
    %v2652 = vunpack.c.h.b16 %v529
    %v2653 = vunpack.c.l.b16 %v530
    %v2654 = vunpack.c.h.b16 %v530
    %v2655 = vunpack.c.l.b16 %v531
    %v2656 = vunpack.c.h.b16 %v531
    %v2657 = vunpack.c.l.b16 %v532
    %v2658 = vunpack.c.h.b16 %v532
    %v2659 = vunpack.c.l.b16 %v533
    %v2660 = vunpack.c.h.b16 %v533
    %v2661 = vunpack.c.l.b16 %v534
    %v2662 = vunpack.c.h.b16 %v534
    %v2663 = vunpack.c.l.b16 %v535
    %v2664 = vunpack.c.h.b16 %v535
    %v2665 = vunpack.c.l.b16 %v536
    %v2666 = vunpack.c.h.b16 %v536
    %v2667 = vunpack.c.l.b16 %v537
    %v2668 = vunpack.c.h.b16 %v537
    %v2669 = vunpack.c.l.b16 %v538
    %v2670 = vunpack.c.h.b16 %v538
    %v2671 = vunpack.c.l.b16 %v539
    %v2672 = vunpack.c.h.b16 %v539
    %v2673 = vunpack.c.l.b16 %v540
    %v2674 = vunpack.c.h.b16 %v540
    %v2675 = vunpack.c.l.b16 %v541
    %v2676 = vunpack.c.h.b16 %v541
    %v2677 = vunpack.c.l.b16 %v542
    %v2678 = vunpack.c.h.b16 %v542
    %v2679 = vunpack.c.l.b16 %v543
    %v2680 = vunpack.c.h.b16 %v543
    %v2681 = vunpack.c.l.b16 %v544
    %v2682 = vunpack.c.h.b16 %v544
    %v2683 = vunpack.c.l.b16 %v545
    %v2684 = vunpack.c.h.b16 %v545
    %v2685 = vunpack.c.l.b16 %v546
    %v2686 = vunpack.c.h.b16 %v546
    %v2687 = vunpack.c.l.b16 %v547
    %v2688 = vunpack.c.h.b16 %v547
    %v2689 = vunpack.c.l.b16 %v548
    %v2690 = vunpack.c.h.b16 %v548
    %v2691 = vunpack.c.l.b16 %v549
    %v2692 = vunpack.c.h.b16 %v549
    %v2693 = vunpack.c.l.b16 %v550
    %v2694 = vunpack.c.h.b16 %v550
    %v2695 = vunpack.c.l.b16 %v551
    %v2696 = vunpack.c.h.b16 %v551
    %v2697 = vunpack.c.l.b16 %v552
    %v2698 = vunpack.c.h.b16 %v552
    %v2699 = vunpack.c.l.b16 %v553
    %v2700 = vunpack.c.h.b16 %v553
    %v2701 = vunpack.c.l.b16 %v554
    %v2702 = vunpack.c.h.b16 %v554
    %v2703 = vunpack.c.l.b16 %v555
    %v2704 = vunpack.c.h.b16 %v555
    %v2705 = vunpack.c.l.b16 %v556
    %v2706 = vunpack.c.h.b16 %v556
    %v2707 = vunpack.c.l.b16 %v557
    %v2708 = vunpack.c.h.b16 %v557
    %v2709 = vunpack.c.l.b16 %v558
    %v2710 = vunpack.c.h.b16 %v558
    %v2711 = vunpack.c.l.b16 %v559
    %v2712 = vunpack.c.h.b16 %v559
    %v2713 = vunpack.c.l.b16 %v560
    %v2714 = vunpack.c.h.b16 %v560
    %v2715 = vunpack.c.l.b16 %v561
    %v2716 = vunpack.c.h.b16 %v561
    %v2717 = vunpack.c.l.b16 %v562
    %v2718 = vunpack.c.h.b16 %v562
    %v2719 = vunpack.c.l.b16 %v563
    %v2720 = vunpack.c.h.b16 %v563
    %v2721 = vunpack.c.l.b16 %v564
    %v2722 = vunpack.c.h.b16 %v564
    %v2723 = vunpack.c.l.b16 %v565
    %v2724 = vunpack.c.h.b16 %v565
    %v2725 = vunpack.c.l.b16 %v566
    %v2726 = vunpack.c.h.b16 %v566
    %v2727 = vunpack.c.l.b16 %v567
    %v2728 = vunpack.c.h.b16 %v567
    %v2729 = vunpack.c.l.b16 %v568
    %v2730 = vunpack.c.h.b16 %v568
    %v2731 = vunpack.c.l.b16 %v569
    %v2732 = vunpack.c.h.b16 %v569
    %v2733 = vunpack.c.l.b16 %v570
    %v2734 = vunpack.c.h.b16 %v570
    %v2735 = vunpack.c.l.b16 %v571
    %v2736 = vunpack.c.h.b16 %v571
    %v2737 = vunpack.c.l.b16 %v572
    %v2738 = vunpack.c.h.b16 %v572
    %v2739 = vunpack.c.l.b16 %v573
    %v2740 = vunpack.c.h.b16 %v573
    %v2741 = vunpack.c.l.b16 %v574
    %v2742 = vunpack.c.h.b16 %v574
    %v2743 = vunpack.c.l.b16 %v575
    %v2744 = vunpack.c.h.b16 %v575
    %v2745 = vunpack.c.l.b16 %v576
    %v2746 = vunpack.c.h.b16 %v576
    %v2747 = vunpack.c.l.b16 %v577
    %v2748 = vunpack.c.h.b16 %v577
    %v2749 = vunpack.c.l.b16 %v578
    %v2750 = vunpack.c.h.b16 %v578
    %v2751 = vunpack.c.l.b16 %v579
    %v2752 = vunpack.c.h.b16 %v579
    %v2753 = vunpack.c.l.b16 %v580
    %v2754 = vunpack.c.h.b16 %v580
    %v2755 = vunpack.c.l.b16 %v581
    %v2756 = vunpack.c.h.b16 %v581
    %v2757 = vunpack.c.l.b16 %v582
    %v2758 = vunpack.c.h.b16 %v582
    %v2759 = vunpack.c.l.b16 %v583
    %v2760 = vunpack.c.h.b16 %v583
    %v2761 = vunpack.c.l.b16 %v584
    %v2762 = vunpack.c.h.b16 %v584
    %v2763 = vunpack.c.l.b16 %v585
    %v2764 = vunpack.c.h.b16 %v585
    %v2765 = vunpack.c.l.b16 %v586
    %v2766 = vunpack.c.h.b16 %v586
    %v2767 = vunpack.c.l.b16 %v587
    %v2768 = vunpack.c.h.b16 %v587
    %v2769 = vunpack.c.l.b16 %v588
    %v2770 = vunpack.c.h.b16 %v588
    %v2771 = vunpack.c.l.b16 %v589
    %v2772 = vunpack.c.h.b16 %v589
    %v2773 = vunpack.c.l.b16 %v590
    %v2774 = vunpack.c.h.b16 %v590
    %v2775 = vunpack.c.l.b16 %v591
    %v2776 = vunpack.c.h.b16 %v591
    %v2777 = vunpack.c.l.b16 %v592
    %v2778 = vunpack.c.h.b16 %v592
    %v2779 = vunpack.c.l.b16 %v593
    %v2780 = vunpack.c.h.b16 %v593
    %v2781 = vunpack.c.l.b16 %v594
    %v2782 = vunpack.c.h.b16 %v594
    %v2783 = vunpack.c.l.b16 %v595
    %v2784 = vunpack.c.h.b16 %v595
    %v2785 = vunpack.c.l.b16 %v596
    %v2786 = vunpack.c.h.b16 %v596
    %v2787 = vunpack.c.l.b16 %v597
    %v2788 = vunpack.c.h.b16 %v597
    %v2789 = vunpack.c.l.b16 %v598
    %v2790 = vunpack.c.h.b16 %v598
    %v2791 = vunpack.c.l.b16 %v599
    %v2792 = vunpack.c.h.b16 %v599
    %v2793 = vunpack.c.l.b16 %v600
    %v2794 = vunpack.c.h.b16 %v600
    %v2795 = vunpack.c.l.b16 %v601
    %v2796 = vunpack.c.h.b16 %v601
    %v2797 = vunpack.c.l.b16 %v602
    %v2798 = vunpack.c.h.b16 %v602
    %v2799 = vunpack.c.l.b16 %v603
    %v2800 = vunpack.c.h.b16 %v603
    %v2801 = vunpack.c.l.b16 %v604
    %v2802 = vunpack.c.h.b16 %v604
    %v2803 = vunpack.c.l.b16 %v605
    %v2804 = vunpack.c.h.b16 %v605
    %v2805 = vunpack.c.l.b16 %v606
    %v2806 = vunpack.c.h.b16 %v606
    %v2807 = vunpack.c.l.b16 %v607
    %v2808 = vunpack.c.h.b16 %v607
    %v2809 = vunpack.c.l.b16 %v608
    %v2810 = vunpack.c.h.b16 %v608
    %v2811 = vunpack.c.l.b16 %v609
    %v2812 = vunpack.c.h.b16 %v609
    %v2813 = vunpack.c.l.b16 %v610
    %v2814 = vunpack.c.h.b16 %v610
    %v2815 = vunpack.c.l.b16 %v611
    %v2816 = vunpack.c.h.b16 %v611
    %v2817 = vunpack.c.l.b16 %v612
    %v2818 = vunpack.c.h.b16 %v612
    %v2819 = vunpack.c.l.b16 %v613
    %v2820 = vunpack.c.h.b16 %v613
    %v2821 = vunpack.c.l.b16 %v614
    %v2822 = vunpack.c.h.b16 %v614
    %v2823 = vunpack.c.l.b16 %v615
    %v2824 = vunpack.c.h.b16 %v615
    %v2825 = vunpack.c.l.b16 %v616
    %v2826 = vunpack.c.h.b16 %v616
    %v2827 = vunpack.c.l.b16 %v617
    %v2828 = vunpack.c.h.b16 %v617
    %v2829 = vunpack.c.l.b16 %v618
    %v2830 = vunpack.c.h.b16 %v618
    %v2831 = vunpack.c.l.b16 %v619
    %v2832 = vunpack.c.h.b16 %v619
    %v2833 = vunpack.c.l.b16 %v620
    %v2834 = vunpack.c.h.b16 %v620
    %v2835 = vunpack.c.l.b16 %v621
    %v2836 = vunpack.c.h.b16 %v621
    %v2837 = vunpack.c.l.b16 %v622
    %v2838 = vunpack.c.h.b16 %v622
    %v2839 = vunpack.c.l.b16 %v623
    %v2840 = vunpack.c.h.b16 %v623
    %v2841 = vunpack.c.l.b16 %v624
    %v2842 = vunpack.c.h.b16 %v624
    %v2843 = vunpack.c.l.b16 %v625
    %v2844 = vunpack.c.h.b16 %v625
    %v2845 = vunpack.c.l.b16 %v626
    %v2846 = vunpack.c.h.b16 %v626
    %v2847 = vunpack.c.l.b16 %v627
    %v2848 = vunpack.c.h.b16 %v627
    %v2849 = vunpack.c.l.b16 %v628
    %v2850 = vunpack.c.h.b16 %v628
    %v2851 = vunpack.c.l.b16 %v629
    %v2852 = vunpack.c.h.b16 %v629
    %v2853 = vunpack.c.l.b16 %v630
    %v2854 = vunpack.c.h.b16 %v630
    %v2855 = vunpack.c.l.b16 %v631
    %v2856 = vunpack.c.h.b16 %v631
    %v2857 = vunpack.c.l.b16 %v632
    %v2858 = vunpack.c.h.b16 %v632
    %v2859 = vunpack.c.l.b16 %v633
    %v2860 = vunpack.c.h.b16 %v633
    %v2861 = vunpack.c.l.b16 %v634
    %v2862 = vunpack.c.h.b16 %v634
    %v2863 = vunpack.c.l.b16 %v635
    %v2864 = vunpack.c.h.b16 %v635
    %v2865 = vunpack.c.l.b16 %v636
    %v2866 = vunpack.c.h.b16 %v636
    %v2867 = vunpack.c.l.b16 %v637
    %v2868 = vunpack.c.h.b16 %v637
    %v2869 = vunpack.c.l.b16 %v638
    %v2870 = vunpack.c.h.b16 %v638
    %v2871 = vunpack.c.l.b16 %v639
    %v2872 = vunpack.c.h.b16 %v639
    %v2873 = vunpack.c.l.b16 %v640
    %v2874 = vunpack.c.h.b16 %v640
    %v2875 = vunpack.c.l.b16 %v641
    %v2876 = vunpack.c.h.b16 %v641
    %v2877 = vunpack.c.l.b16 %v642
    %v2878 = vunpack.c.h.b16 %v642
    %v2879 = vunpack.c.l.b16 %v643
    %v2880 = vunpack.c.h.b16 %v643
    %v2881 = vunpack.c.l.b16 %v644
    %v2882 = vunpack.c.h.b16 %v644
    %v2883 = vunpack.c.l.b16 %v645
    %v2884 = vunpack.c.h.b16 %v645
    %v2885 = vunpack.c.l.b16 %v646
    %v2886 = vunpack.c.h.b16 %v646
    %v2887 = vunpack.c.l.b16 %v647
    %v2888 = vunpack.c.h.b16 %v647
    %v2889 = vunpack.c.l.b16 %v648
    %v2890 = vunpack.c.h.b16 %v648
    %v2891 = vunpack.c.l.b16 %v649
    %v2892 = vunpack.c.h.b16 %v649
    %v2893 = vunpack.c.l.b16 %v650
    %v2894 = vunpack.c.h.b16 %v650
    %v2895 = vunpack.c.l.b16 %v651
    %v2896 = vunpack.c.h.b16 %v651
    %v2897 = vunpack.c.l.b16 %v652
    %v2898 = vunpack.c.h.b16 %v652
    %v2899 = vunpack.c.l.b16 %v653
    %v2900 = vunpack.c.h.b16 %v653
    %v2901 = vpack.c.b16 %v1845, %v1669
    %v2902 = vpack.c.b16 %v1846, %v1670
    %v2903 = vpack.c.b16 %v1847, %v1671
    %v2904 = vpack.c.b16 %v1848, %v1672
    %v2905 = vpack.c.b16 %v1849, %v1673
    %v2906 = vpack.c.b16 %v1850, %v1674
    %v2907 = vpack.c.b16 %v1851, %v1675
    %v2908 = vpack.c.b16 %v1852, %v1676
    %v2909 = vpack.c.b16 %v1853, %v1677
    %v2910 = vpack.c.b16 %v1854, %v1678
    %v2911 = vpack.c.b16 %v1855, %v1679
    %v2912 = vpack.c.b16 %v1856, %v1680
    %v2913 = vpack.c.b16 %v1857, %v1681
    %v2914 = vpack.c.b16 %v1858, %v1682
    %v2915 = vpack.c.b16 %v1859, %v1683
    %v2916 = vpack.c.b16 %v1860, %v1684
    %v2917 = vpack.c.b16 %v1861, %v1685
    %v2918 = vpack.c.b16 %v1862, %v1686
    %v2919 = vpack.c.b16 %v1863, %v1687
    %v2920 = vpack.c.b16 %v1864, %v1688
    %v2921 = vpack.c.b16 %v1865, %v1689
    %v2922 = vpack.c.b16 %v1866, %v1690
    %v2923 = vpack.c.b16 %v1867, %v1691
    %v2924 = vpack.c.b16 %v1868, %v1692
    %v2925 = vpack.c.b16 %v1869, %v1693
    %v2926 = vpack.c.b16 %v1870, %v1694
    %v2927 = vpack.c.b16 %v1871, %v1695
    %v2928 = vpack.c.b16 %v1872, %v1696
    %v2929 = vpack.c.b16 %v1873, %v1697
    %v2930 = vpack.c.b16 %v1874, %v1698
    %v2931 = vpack.c.b16 %v1875, %v1699
    %v2932 = vpack.c.b16 %v1876, %v1700
    %v2933 = vpack.c.b16 %v1877, %v1701
    %v2934 = vpack.c.b16 %v1878, %v1702
    %v2935 = vpack.c.b16 %v1879, %v1703
    %v2936 = vpack.c.b16 %v1880, %v1704
    %v2937 = vpack.c.b16 %v1881, %v1705
    %v2938 = vpack.c.b16 %v1882, %v1706
    %v2939 = vpack.c.b16 %v1883, %v1707
    %v2940 = vpack.c.b16 %v1884, %v1708
    %v2941 = vpack.c.b16 %v1885, %v1709
    %v2942 = vpack.c.b16 %v1886, %v1710
    %v2943 = vpack.c.b16 %v1887, %v1711
    %v2944 = vpack.c.b16 %v1888, %v1712
    %v2945 = vpack.c.b16 %v1889, %v1713
    %v2946 = vpack.c.b16 %v1890, %v1714
    %v2947 = vpack.c.b16 %v1891, %v1715
    %v2948 = vpack.c.b16 %v1892, %v1716
    %v2949 = vpack.c.b16 %v1893, %v1717
    %v2950 = vpack.c.b16 %v1894, %v1718
    %v2951 = vpack.c.b16 %v1895, %v1719
    %v2952 = vpack.c.b16 %v1896, %v1720
    %v2953 = vpack.c.b16 %v1897, %v1721
    %v2954 = vpack.c.b16 %v1898, %v1722
    %v2955 = vpack.c.b16 %v1899, %v1723
    %v2956 = vpack.c.b16 %v1900, %v1724
    %v2957 = vpack.c.b16 %v1901, %v1725
    %v2958 = vpack.c.b16 %v1902, %v1726
    %v2959 = vpack.c.b16 %v1903, %v1727
    %v2960 = vpack.c.b16 %v1904, %v1728
    %v2961 = vpack.c.b16 %v1905, %v1729
    %v2962 = vpack.c.b16 %v1906, %v1730
    %v2963 = vpack.c.b16 %v1907, %v1731
    %v2964 = vpack.c.b16 %v1908, %v1732
    %v2965 = vpack.c.b16 %v1909, %v1733
    %v2966 = vpack.c.b16 %v1910, %v1734
    %v2967 = vpack.c.b16 %v1911, %v1735
    %v2968 = vpack.c.b16 %v1912, %v1736
    %v2969 = vpack.c.b16 %v1913, %v1737
    %v2970 = vpack.c.b16 %v1914, %v1738
    %v2971 = vpack.c.b16 %v1915, %v1739
    %v2972 = vpack.c.b16 %v1916, %v1740
    %v2973 = vpack.c.b16 %v1917, %v1741
    %v2974 = vpack.c.b16 %v1918, %v1742
    %v2975 = vpack.c.b16 %v1919, %v1743
    %v2976 = vpack.c.b16 %v1920, %v1744
    %v2977 = vpack.c.b16 %v1921, %v1745
    %v2978 = vpack.c.b16 %v1922, %v1746
    %v2979 = vpack.c.b16 %v1923, %v1747
    %v2980 = vpack.c.b16 %v1924, %v1748
    %v2981 = vpack.c.b16 %v1925, %v1749
    %v2982 = vpack.c.b16 %v1926, %v1750
    %v2983 = vpack.c.b16 %v1927, %v1751
    %v2984 = vpack.c.b16 %v1928, %v1752
    %v2985 = vpack.c.b16 %v1929, %v1753
    %v2986 = vpack.c.b16 %v1930, %v1754
    %v2987 = vpack.c.b16 %v1931, %v1755
    %v2988 = vpack.c.b16 %v1932, %v1756
    %v2989 = vpack.c.b16 %v1933, %v1757
    %v2990 = vpack.c.b16 %v1934, %v1758
    %v2991 = vpack.c.b16 %v1935, %v1759
    %v2992 = vpack.c.b16 %v1936, %v1760
    %v2993 = vpack.c.b16 %v1937, %v1761
    %v2994 = vpack.c.b16 %v1938, %v1762
    %v2995 = vpack.c.b16 %v1939, %v1763
    %v2996 = vpack.c.b16 %v1940, %v1764
    %v2997 = vpack.c.b16 %v1941, %v1765
    %v2998 = vpack.c.b16 %v1942, %v1766
    %v2999 = vpack.c.b16 %v1943, %v1767
    %v3000 = vpack.c.b16 %v1944, %v1768
    %v3001 = vpack.c.b16 %v1945, %v1769
    %v3002 = vpack.c.b16 %v1946, %v1770
    %v3003 = vpack.c.b16 %v1947, %v1771
    %v3004 = vpack.c.b16 %v1948, %v1772
    %v3005 = vpack.c.b16 %v1949, %v1773
    %v3006 = vpack.c.b16 %v1950, %v1774
    %v3007 = vpack.c.b16 %v1951, %v1775
    %v3008 = vpack.c.b16 %v1952, %v1776
    %v3009 = vpack.c.b16 %v1953, %v1777
    %v3010 = vpack.c.b16 %v1954, %v1778
    %v3011 = vpack.c.b16 %v1955, %v1779
    %v3012 = vpack.c.b16 %v1956, %v1780
    %v3013 = vpack.c.b16 %v1957, %v1781
    %v3014 = vpack.c.b16 %v1958, %v1782
    %v3015 = vpack.c.b16 %v1959, %v1783
    %v3016 = vpack.c.b16 %v1960, %v1784
    %v3017 = vpack.c.b16 %v1961, %v1785
    %v3018 = vpack.c.b16 %v1962, %v1786
    %v3019 = vpack.c.b16 %v1963, %v1787
    %v3020 = vpack.c.b16 %v1964, %v1788
    %v3021 = vpack.c.b16 %v1965, %v1789
    %v3022 = vpack.c.b16 %v1966, %v1790
    %v3023 = vpack.c.b16 %v1967, %v1791
    %v3024 = vpack.c.b16 %v1968, %v1792
    %v3025 = vpack.c.b16 %v1969, %v1793
    %v3026 = vpack.c.b16 %v1970, %v1794
    %v3027 = vpack.c.b16 %v1971, %v1795
    %v3028 = vpack.c.b16 %v1972, %v1796
    %v3029 = vpack.c.b16 %v1973, %v1797
    %v3030 = vpack.c.b16 %v1974, %v1798
    %v3031 = vpack.c.b16 %v1975, %v1799
    %v3032 = vpack.c.b16 %v1976, %v1800
    %v3033 = vpack.c.b16 %v1977, %v1801
    %v3034 = vpack.c.b16 %v1978, %v1802
    %v3035 = vpack.c.b16 %v1979, %v1803
    %v3036 = vpack.c.b16 %v1980, %v1804
    %v3037 = vpack.c.b16 %v1981, %v1805
    %v3038 = vpack.c.b16 %v1982, %v1806
    %v3039 = vpack.c.b16 %v1983, %v1807
    %v3040 = vpack.c.b16 %v1984, %v1808
    %v3041 = vpack.c.b16 %v1985, %v1809
    %v3042 = vpack.c.b16 %v1986, %v1810
    %v3043 = vpack.c.b16 %v1987, %v1811
    %v3044 = vpack.c.b16 %v1988, %v1812
    %v3045 = vpack.c.b16 %v1989, %v1813
    %v3046 = vpack.c.b16 %v1990, %v1814
    %v3047 = vpack.c.b16 %v1991, %v1815
    %v3048 = vpack.c.b16 %v1992, %v1816
    %v3049 = vpack.c.b16 %v1993, %v1817
    %v3050 = vpack.c.b16 %v1994, %v1818
    %v3051 = vpack.c.b16 %v1995, %v1819
    %v3052 = vpack.c.b16 %v1996, %v1820
    %v3053 = vpack.c.b16 %v1997, %v1821
    %v3054 = vpack.c.b16 %v1998, %v1822
    %v3055 = vpack.c.b16 %v1999, %v1823
    %v3056 = vpack.c.b16 %v2000, %v1824
    %v3057 = vpack.c.b16 %v2001, %v1825
    %v3058 = vpack.c.b16 %v2002, %v1826
    %v3059 = vpack.c.b16 %v2003, %v1827
    %v3060 = vpack.c.b16 %v2004, %v1828
    %v3061 = vpack.c.b16 %v2005, %v1829
    %v3062 = vpack.c.b16 %v2006, %v1830
    %v3063 = vpack.c.b16 %v2007, %v1831
    %v3064 = vpack.c.b16 %v2008, %v1832
    %v3065 = vpack.c.b16 %v2009, %v1833
    %v3066 = vpack.c.b16 %v2010, %v1834
    %v3067 = vpack.c.b16 %v2011, %v1835
    %v3068 = vpack.c.b16 %v2012, %v1836
    %v3069 = vpack.c.b16 %v2013, %v1837
    %v3070 = vpack.c.b16 %v2014, %v1838
    %v3071 = vpack.c.b16 %v2015, %v1839
    %v3072 = vpack.c.b16 %v2016, %v1840
    %v3073 = vpack.c.b16 %v2017, %v1841
    %v3074 = vpack.c.b16 %v2018, %v1842
    %v3075 = vpack.c.b16 %v2019, %v1843
    %v3076 = vpack.c.b16 %v2020, %v1844
    %v3077 = vpack.c.b16 %v2197, %v2021
    %v3078 = vpack.c.b16 %v2198, %v2022
    %v3079 = vpack.c.b16 %v2199, %v2023
    %v3080 = vpack.c.b16 %v2200, %v2024
    %v3081 = vpack.c.b16 %v2201, %v2025
    %v3082 = vpack.c.b16 %v2202, %v2026
    %v3083 = vpack.c.b16 %v2203, %v2027
    %v3084 = vpack.c.b16 %v2204, %v2028
    %v3085 = vpack.c.b16 %v2205, %v2029
    %v3086 = vpack.c.b16 %v2206, %v2030
    %v3087 = vpack.c.b16 %v2207, %v2031
    %v3088 = vpack.c.b16 %v2208, %v2032
    %v3089 = vpack.c.b16 %v2209, %v2033
    %v3090 = vpack.c.b16 %v2210, %v2034
    %v3091 = vpack.c.b16 %v2211, %v2035
    %v3092 = vpack.c.b16 %v2212, %v2036
    %v3093 = vpack.c.b16 %v2213, %v2037
    %v3094 = vpack.c.b16 %v2214, %v2038
    %v3095 = vpack.c.b16 %v2215, %v2039
    %v3096 = vpack.c.b16 %v2216, %v2040
    %v3097 = vpack.c.b16 %v2217, %v2041
    %v3098 = vpack.c.b16 %v2218, %v2042
    %v3099 = vpack.c.b16 %v2219, %v2043
    %v3100 = vpack.c.b16 %v2220, %v2044
    %v3101 = vpack.c.b16 %v2221, %v2045
    %v3102 = vpack.c.b16 %v2222, %v2046
    %v3103 = vpack.c.b16 %v2223, %v2047
    %v3104 = vpack.c.b16 %v2224, %v2048
    %v3105 = vpack.c.b16 %v2225, %v2049
    %v3106 = vpack.c.b16 %v2226, %v2050
    %v3107 = vpack.c.b16 %v2227, %v2051
    %v3108 = vpack.c.b16 %v2228, %v2052
    %v3109 = vpack.c.b16 %v2229, %v2053
    %v3110 = vpack.c.b16 %v2230, %v2054
    %v3111 = vpack.c.b16 %v2231, %v2055
    %v3112 = vpack.c.b16 %v2232, %v2056
    %v3113 = vpack.c.b16 %v2233, %v2057
    %v3114 = vpack.c.b16 %v2234, %v2058
    %v3115 = vpack.c.b16 %v2235, %v2059
    %v3116 = vpack.c.b16 %v2236, %v2060
    %v3117 = vpack.c.b16 %v2237, %v2061
    %v3118 = vpack.c.b16 %v2238, %v2062
    %v3119 = vpack.c.b16 %v2239, %v2063
    %v3120 = vpack.c.b16 %v2240, %v2064
    %v3121 = vpack.c.b16 %v2241, %v2065
    %v3122 = vpack.c.b16 %v2242, %v2066
    %v3123 = vpack.c.b16 %v2243, %v2067
    %v3124 = vpack.c.b16 %v2244, %v2068
    %v3125 = vpack.c.b16 %v2245, %v2069
    %v3126 = vpack.c.b16 %v2246, %v2070
    %v3127 = vpack.c.b16 %v2247, %v2071
    %v3128 = vpack.c.b16 %v2248, %v2072
    %v3129 = vpack.c.b16 %v2249, %v2073
    %v3130 = vpack.c.b16 %v2250, %v2074
    %v3131 = vpack.c.b16 %v2251, %v2075
    %v3132 = vpack.c.b16 %v2252, %v2076
    %v3133 = vpack.c.b16 %v2253, %v2077
    %v3134 = vpack.c.b16 %v2254, %v2078
    %v3135 = vpack.c.b16 %v2255, %v2079
    %v3136 = vpack.c.b16 %v2256, %v2080
    %v3137 = vpack.c.b16 %v2257, %v2081
    %v3138 = vpack.c.b16 %v2258, %v2082
    %v3139 = vpack.c.b16 %v2259, %v2083
    %v3140 = vpack.c.b16 %v2260, %v2084
    %v3141 = vpack.c.b16 %v2261, %v2085
    %v3142 = vpack.c.b16 %v2262, %v2086
    %v3143 = vpack.c.b16 %v2263, %v2087
    %v3144 = vpack.c.b16 %v2264, %v2088
    %v3145 = vpack.c.b16 %v2265, %v2089
    %v3146 = vpack.c.b16 %v2266, %v2090
    %v3147 = vpack.c.b16 %v2267, %v2091
    %v3148 = vpack.c.b16 %v2268, %v2092
    %v3149 = vpack.c.b16 %v2269, %v2093
    %v3150 = vpack.c.b16 %v2270, %v2094
    %v3151 = vpack.c.b16 %v2271, %v2095
    %v3152 = vpack.c.b16 %v2272, %v2096
    %v3153 = vpack.c.b16 %v2273, %v2097
    %v3154 = vpack.c.b16 %v2274, %v2098
    %v3155 = vpack.c.b16 %v2275, %v2099
    %v3156 = vpack.c.b16 %v2276, %v2100
    %v3157 = vpack.c.b16 %v2277, %v2101
    %v3158 = vpack.c.b16 %v2278, %v2102
    %v3159 = vpack.c.b16 %v2279, %v2103
    %v3160 = vpack.c.b16 %v2280, %v2104
    %v3161 = vpack.c.b16 %v2281, %v2105
    %v3162 = vpack.c.b16 %v2282, %v2106
    %v3163 = vpack.c.b16 %v2283, %v2107
    %v3164 = vpack.c.b16 %v2284, %v2108
    %v3165 = vpack.c.b16 %v2285, %v2109
    %v3166 = vpack.c.b16 %v2286, %v2110
    %v3167 = vpack.c.b16 %v2287, %v2111
    %v3168 = vpack.c.b16 %v2288, %v2112
    %v3169 = vpack.c.b16 %v2289, %v2113
    %v3170 = vpack.c.b16 %v2290, %v2114
    %v3171 = vpack.c.b16 %v2291, %v2115
    %v3172 = vpack.c.b16 %v2292, %v2116
    %v3173 = vpack.c.b16 %v2293, %v2117
    %v3174 = vpack.c.b16 %v2294, %v2118
    %v3175 = vpack.c.b16 %v2295, %v2119
    %v3176 = vpack.c.b16 %v2296, %v2120
    %v3177 = vpack.c.b16 %v2297, %v2121
    %v3178 = vpack.c.b16 %v2298, %v2122
    %v3179 = vpack.c.b16 %v2299, %v2123
    %v3180 = vpack.c.b16 %v2300, %v2124
    %v3181 = vpack.c.b16 %v2301, %v2125
    %v3182 = vpack.c.b16 %v2302, %v2126
    %v3183 = vpack.c.b16 %v2303, %v2127
    %v3184 = vpack.c.b16 %v2304, %v2128
    %v3185 = vpack.c.b16 %v2305, %v2129
    %v3186 = vpack.c.b16 %v2306, %v2130
    %v3187 = vpack.c.b16 %v2307, %v2131
    %v3188 = vpack.c.b16 %v2308, %v2132
    %v3189 = vpack.c.b16 %v2309, %v2133
    %v3190 = vpack.c.b16 %v2310, %v2134
    %v3191 = vpack.c.b16 %v2311, %v2135
    %v3192 = vpack.c.b16 %v2312, %v2136
    %v3193 = vpack.c.b16 %v2313, %v2137
    %v3194 = vpack.c.b16 %v2314, %v2138
    %v3195 = vpack.c.b16 %v2315, %v2139
    %v3196 = vpack.c.b16 %v2316, %v2140
    %v3197 = vpack.c.b16 %v2317, %v2141
    %v3198 = vpack.c.b16 %v2318, %v2142
    %v3199 = vpack.c.b16 %v2319, %v2143
    %v3200 = vpack.c.b16 %v2320, %v2144
    %v3201 = vpack.c.b16 %v2321, %v2145
    %v3202 = vpack.c.b16 %v2322, %v2146
    %v3203 = vpack.c.b16 %v2323, %v2147
    %v3204 = vpack.c.b16 %v2324, %v2148
    %v3205 = vpack.c.b16 %v2325, %v2149
    %v3206 = vpack.c.b16 %v2326, %v2150
    %v3207 = vpack.c.b16 %v2327, %v2151
    %v3208 = vpack.c.b16 %v2328, %v2152
    %v3209 = vpack.c.b16 %v2329, %v2153
    %v3210 = vpack.c.b16 %v2330, %v2154
    %v3211 = vpack.c.b16 %v2331, %v2155
    %v3212 = vpack.c.b16 %v2332, %v2156
    %v3213 = vpack.c.b16 %v2333, %v2157
    %v3214 = vpack.c.b16 %v2334, %v2158
    %v3215 = vpack.c.b16 %v2335, %v2159
    %v3216 = vpack.c.b16 %v2336, %v2160
    %v3217 = vpack.c.b16 %v2337, %v2161
    %v3218 = vpack.c.b16 %v2338, %v2162
    %v3219 = vpack.c.b16 %v2339, %v2163
    %v3220 = vpack.c.b16 %v2340, %v2164
    %v3221 = vpack.c.b16 %v2341, %v2165
    %v3222 = vpack.c.b16 %v2342, %v2166
    %v3223 = vpack.c.b16 %v2343, %v2167
    %v3224 = vpack.c.b16 %v2344, %v2168
    %v3225 = vpack.c.b16 %v2345, %v2169
    %v3226 = vpack.c.b16 %v2346, %v2170
    %v3227 = vpack.c.b16 %v2347, %v2171
    %v3228 = vpack.c.b16 %v2348, %v2172
    %v3229 = vpack.c.b16 %v2349, %v2173
    %v3230 = vpack.c.b16 %v2350, %v2174
    %v3231 = vpack.c.b16 %v2351, %v2175
    %v3232 = vpack.c.b16 %v2352, %v2176
    %v3233 = vpack.c.b16 %v2353, %v2177
    %v3234 = vpack.c.b16 %v2354, %v2178
    %v3235 = vpack.c.b16 %v2355, %v2179
    %v3236 = vpack.c.b16 %v2356, %v2180
    %v3237 = vpack.c.b16 %v2357, %v2181
    %v3238 = vpack.c.b16 %v2358, %v2182
    %v3239 = vpack.c.b16 %v2359, %v2183
    %v3240 = vpack.c.b16 %v2360, %v2184
    %v3241 = vpack.c.b16 %v2361, %v2185
    %v3242 = vpack.c.b16 %v2362, %v2186
    %v3243 = vpack.c.b16 %v2363, %v2187
    %v3244 = vpack.c.b16 %v2364, %v2188
    %v3245 = vpack.c.b16 %v2365, %v2189
    %v3246 = vpack.c.b16 %v2366, %v2190
    %v3247 = vpack.c.b16 %v2367, %v2191
    %v3248 = vpack.c.b16 %v2368, %v2192
    %v3249 = vpack.c.b16 %v2369, %v2193
    %v3250 = vpack.c.b16 %v2370, %v2194
    %v3251 = vpack.c.b16 %v2371, %v2195
    %v3252 = vpack.c.b16 %v2372, %v2196
    %v3253 = vpack.c.b16 %v2549, %v2373
    %v3254 = vpack.c.b16 %v2550, %v2374
    %v3255 = vpack.c.b16 %v2551, %v2375
    %v3256 = vpack.c.b16 %v2552, %v2376
    %v3257 = vpack.c.b16 %v2553, %v2377
    %v3258 = vpack.c.b16 %v2554, %v2378
    %v3259 = vpack.c.b16 %v2555, %v2379
    %v3260 = vpack.c.b16 %v2556, %v2380
    %v3261 = vpack.c.b16 %v2557, %v2381
    %v3262 = vpack.c.b16 %v2558, %v2382
    %v3263 = vpack.c.b16 %v2559, %v2383
    %v3264 = vpack.c.b16 %v2560, %v2384
    %v3265 = vpack.c.b16 %v2561, %v2385
    %v3266 = vpack.c.b16 %v2562, %v2386
    %v3267 = vpack.c.b16 %v2563, %v2387
    %v3268 = vpack.c.b16 %v2564, %v2388
    %v3269 = vpack.c.b16 %v2565, %v2389
    %v3270 = vpack.c.b16 %v2566, %v2390
    %v3271 = vpack.c.b16 %v2567, %v2391
    %v3272 = vpack.c.b16 %v2568, %v2392
    %v3273 = vpack.c.b16 %v2569, %v2393
    %v3274 = vpack.c.b16 %v2570, %v2394
    %v3275 = vpack.c.b16 %v2571, %v2395
    %v3276 = vpack.c.b16 %v2572, %v2396
    %v3277 = vpack.c.b16 %v2573, %v2397
    %v3278 = vpack.c.b16 %v2574, %v2398
    %v3279 = vpack.c.b16 %v2575, %v2399
    %v3280 = vpack.c.b16 %v2576, %v2400
    %v3281 = vpack.c.b16 %v2577, %v2401
    %v3282 = vpack.c.b16 %v2578, %v2402
    %v3283 = vpack.c.b16 %v2579, %v2403
    %v3284 = vpack.c.b16 %v2580, %v2404
    %v3285 = vpack.c.b16 %v2581, %v2405
    %v3286 = vpack.c.b16 %v2582, %v2406
    %v3287 = vpack.c.b16 %v2583, %v2407
    %v3288 = vpack.c.b16 %v2584, %v2408
    %v3289 = vpack.c.b16 %v2585, %v2409
    %v3290 = vpack.c.b16 %v2586, %v2410
    %v3291 = vpack.c.b16 %v2587, %v2411
    %v3292 = vpack.c.b16 %v2588, %v2412
    %v3293 = vpack.c.b16 %v2589, %v2413
    %v3294 = vpack.c.b16 %v2590, %v2414
    %v3295 = vpack.c.b16 %v2591, %v2415
    %v3296 = vpack.c.b16 %v2592, %v2416
    %v3297 = vpack.c.b16 %v2593, %v2417
    %v3298 = vpack.c.b16 %v2594, %v2418
    %v3299 = vpack.c.b16 %v2595, %v2419
    %v3300 = vpack.c.b16 %v2596, %v2420
    %v3301 = vpack.c.b16 %v2597, %v2421
    %v3302 = vpack.c.b16 %v2598, %v2422
    %v3303 = vpack.c.b16 %v2599, %v2423
    %v3304 = vpack.c.b16 %v2600, %v2424
    %v3305 = vpack.c.b16 %v2601, %v2425
    %v3306 = vpack.c.b16 %v2602, %v2426
    %v3307 = vpack.c.b16 %v2603, %v2427
    %v3308 = vpack.c.b16 %v2604, %v2428
    %v3309 = vpack.c.b16 %v2605, %v2429
    %v3310 = vpack.c.b16 %v2606, %v2430
    %v3311 = vpack.c.b16 %v2607, %v2431
    %v3312 = vpack.c.b16 %v2608, %v2432
    %v3313 = vpack.c.b16 %v2609, %v2433
    %v3314 = vpack.c.b16 %v2610, %v2434
    %v3315 = vpack.c.b16 %v2611, %v2435
    %v3316 = vpack.c.b16 %v2612, %v2436
    %v3317 = vpack.c.b16 %v2613, %v2437
    %v3318 = vpack.c.b16 %v2614, %v2438
    %v3319 = vpack.c.b16 %v2615, %v2439
    %v3320 = vpack.c.b16 %v2616, %v2440
    %v3321 = vpack.c.b16 %v2617, %v2441
    %v3322 = vpack.c.b16 %v2618, %v2442
    %v3323 = vpack.c.b16 %v2619, %v2443
    %v3324 = vpack.c.b16 %v2620, %v2444
    %v3325 = vpack.c.b16 %v2621, %v2445
    %v3326 = vpack.c.b16 %v2622, %v2446
    %v3327 = vpack.c.b16 %v2623, %v2447
    %v3328 = vpack.c.b16 %v2624, %v2448
    %v3329 = vpack.c.b16 %v2625, %v2449
    %v3330 = vpack.c.b16 %v2626, %v2450
    %v3331 = vpack.c.b16 %v2627, %v2451
    %v3332 = vpack.c.b16 %v2628, %v2452
    %v3333 = vpack.c.b16 %v2629, %v2453
    %v3334 = vpack.c.b16 %v2630, %v2454
    %v3335 = vpack.c.b16 %v2631, %v2455
    %v3336 = vpack.c.b16 %v2632, %v2456
    %v3337 = vpack.c.b16 %v2633, %v2457
    %v3338 = vpack.c.b16 %v2634, %v2458
    %v3339 = vpack.c.b16 %v2635, %v2459
    %v3340 = vpack.c.b16 %v2636, %v2460
    %v3341 = vpack.c.b16 %v2637, %v2461
    %v3342 = vpack.c.b16 %v2638, %v2462
    %v3343 = vpack.c.b16 %v2639, %v2463
    %v3344 = vpack.c.b16 %v2640, %v2464
    %v3345 = vpack.c.b16 %v2641, %v2465
    %v3346 = vpack.c.b16 %v2642, %v2466
    %v3347 = vpack.c.b16 %v2643, %v2467
    %v3348 = vpack.c.b16 %v2644, %v2468
    %v3349 = vpack.c.b16 %v2645, %v2469
    %v3350 = vpack.c.b16 %v2646, %v2470
    %v3351 = vpack.c.b16 %v2647, %v2471
    %v3352 = vpack.c.b16 %v2648, %v2472
    %v3353 = vpack.c.b16 %v2649, %v2473
    %v3354 = vpack.c.b16 %v2650, %v2474
    %v3355 = vpack.c.b16 %v2651, %v2475
    %v3356 = vpack.c.b16 %v2652, %v2476
    %v3357 = vpack.c.b16 %v2653, %v2477
    %v3358 = vpack.c.b16 %v2654, %v2478
    %v3359 = vpack.c.b16 %v2655, %v2479
    %v3360 = vpack.c.b16 %v2656, %v2480
    %v3361 = vpack.c.b16 %v2657, %v2481
    %v3362 = vpack.c.b16 %v2658, %v2482
    %v3363 = vpack.c.b16 %v2659, %v2483
    %v3364 = vpack.c.b16 %v2660, %v2484
    %v3365 = vpack.c.b16 %v2661, %v2485
    %v3366 = vpack.c.b16 %v2662, %v2486
    %v3367 = vpack.c.b16 %v2663, %v2487
    %v3368 = vpack.c.b16 %v2664, %v2488
    %v3369 = vpack.c.b16 %v2665, %v2489
    %v3370 = vpack.c.b16 %v2666, %v2490
    %v3371 = vpack.c.b16 %v2667, %v2491
    %v3372 = vpack.c.b16 %v2668, %v2492
    %v3373 = vpack.c.b16 %v2669, %v2493
    %v3374 = vpack.c.b16 %v2670, %v2494
    %v3375 = vpack.c.b16 %v2671, %v2495
    %v3376 = vpack.c.b16 %v2672, %v2496
    %v3377 = vpack.c.b16 %v2673, %v2497
    %v3378 = vpack.c.b16 %v2674, %v2498
    %v3379 = vpack.c.b16 %v2675, %v2499
    %v3380 = vpack.c.b16 %v2676, %v2500
    %v3381 = vpack.c.b16 %v2677, %v2501
    %v3382 = vpack.c.b16 %v2678, %v2502
    %v3383 = vpack.c.b16 %v2679, %v2503
    %v3384 = vpack.c.b16 %v2680, %v2504
    %v3385 = vpack.c.b16 %v2681, %v2505
    %v3386 = vpack.c.b16 %v2682, %v2506
    %v3387 = vpack.c.b16 %v2683, %v2507
    %v3388 = vpack.c.b16 %v2684, %v2508
    %v3389 = vpack.c.b16 %v2685, %v2509
    %v3390 = vpack.c.b16 %v2686, %v2510
    %v3391 = vpack.c.b16 %v2687, %v2511
    %v3392 = vpack.c.b16 %v2688, %v2512
    %v3393 = vpack.c.b16 %v2689, %v2513
    %v3394 = vpack.c.b16 %v2690, %v2514
    %v3395 = vpack.c.b16 %v2691, %v2515
    %v3396 = vpack.c.b16 %v2692, %v2516
    %v3397 = vpack.c.b16 %v2693, %v2517
    %v3398 = vpack.c.b16 %v2694, %v2518
    %v3399 = vpack.c.b16 %v2695, %v2519
    %v3400 = vpack.c.b16 %v2696, %v2520
    %v3401 = vpack.c.b16 %v2697, %v2521
    %v3402 = vpack.c.b16 %v2698, %v2522
    %v3403 = vpack.c.b16 %v2699, %v2523
    %v3404 = vpack.c.b16 %v2700, %v2524
    %v3405 = vpack.c.b16 %v2701, %v2525
    %v3406 = vpack.c.b16 %v2702, %v2526
    %v3407 = vpack.c.b16 %v2703, %v2527
    %v3408 = vpack.c.b16 %v2704, %v2528
    %v3409 = vpack.c.b16 %v2705, %v2529
    %v3410 = vpack.c.b16 %v2706, %v2530
    %v3411 = vpack.c.b16 %v2707, %v2531
    %v3412 = vpack.c.b16 %v2708, %v2532
    %v3413 = vpack.c.b16 %v2709, %v2533
    %v3414 = vpack.c.b16 %v2710, %v2534
    %v3415 = vpack.c.b16 %v2711, %v2535
    %v3416 = vpack.c.b16 %v2712, %v2536
    %v3417 = vpack.c.b16 %v2713, %v2537
    %v3418 = vpack.c.b16 %v2714, %v2538
    %v3419 = vpack.c.b16 %v2715, %v2539
    %v3420 = vpack.c.b16 %v2716, %v2540
    %v3421 = vpack.c.b16 %v2717, %v2541
    %v3422 = vpack.c.b16 %v2718, %v2542
    %v3423 = vpack.c.b16 %v2719, %v2543
    %v3424 = vpack.c.b16 %v2720, %v2544
    %v3425 = vpack.c.b16 %v2721, %v2545
    %v3426 = vpack.c.b16 %v2722, %v2546
    %v3427 = vpack.c.b16 %v2723, %v2547
    %v3428 = vpack.c.b16 %v2724, %v2548
    %v3429 = vpack.c.b16 %v2725, %v2725
    %v3430 = vpack.c.b16 %v2726, %v2726
    %v3431 = vpack.c.b16 %v2727, %v2727
    %v3432 = vpack.c.b16 %v2728, %v2728
    %v3433 = vpack.c.b16 %v2729, %v2729
    %v3434 = vpack.c.b16 %v2730, %v2730
    %v3435 = vpack.c.b16 %v2731, %v2731
    %v3436 = vpack.c.b16 %v2732, %v2732
    %v3437 = vpack.c.b16 %v2733, %v2733
    %v3438 = vpack.c.b16 %v2734, %v2734
    %v3439 = vpack.c.b16 %v2735, %v2735
    %v3440 = vpack.c.b16 %v2736, %v2736
    %v3441 = vpack.c.b16 %v2737, %v2737
    %v3442 = vpack.c.b16 %v2738, %v2738
    %v3443 = vpack.c.b16 %v2739, %v2739
    %v3444 = vpack.c.b16 %v2740, %v2740
    %v3445 = vpack.c.b16 %v2741, %v2741
    %v3446 = vpack.c.b16 %v2742, %v2742
    %v3447 = vpack.c.b16 %v2743, %v2743
    %v3448 = vpack.c.b16 %v2744, %v2744
    %v3449 = vpack.c.b16 %v2745, %v2745
    %v3450 = vpack.c.b16 %v2746, %v2746
    %v3451 = vpack.c.b16 %v2747, %v2747
    %v3452 = vpack.c.b16 %v2748, %v2748
    %v3453 = vpack.c.b16 %v2749, %v2749
    %v3454 = vpack.c.b16 %v2750, %v2750
    %v3455 = vpack.c.b16 %v2751, %v2751
    %v3456 = vpack.c.b16 %v2752, %v2752
    %v3457 = vpack.c.b16 %v2753, %v2753
    %v3458 = vpack.c.b16 %v2754, %v2754
    %v3459 = vpack.c.b16 %v2755, %v2755
    %v3460 = vpack.c.b16 %v2756, %v2756
    %v3461 = vpack.c.b16 %v2757, %v2757
    %v3462 = vpack.c.b16 %v2758, %v2758
    %v3463 = vpack.c.b16 %v2759, %v2759
    %v3464 = vpack.c.b16 %v2760, %v2760
    %v3465 = vpack.c.b16 %v2761, %v2761
    %v3466 = vpack.c.b16 %v2762, %v2762
    %v3467 = vpack.c.b16 %v2763, %v2763
    %v3468 = vpack.c.b16 %v2764, %v2764
    %v3469 = vpack.c.b16 %v2765, %v2765
    %v3470 = vpack.c.b16 %v2766, %v2766
    %v3471 = vpack.c.b16 %v2767, %v2767
    %v3472 = vpack.c.b16 %v2768, %v2768
    %v3473 = vpack.c.b16 %v2769, %v2769
    %v3474 = vpack.c.b16 %v2770, %v2770
    %v3475 = vpack.c.b16 %v2771, %v2771
    %v3476 = vpack.c.b16 %v2772, %v2772
    %v3477 = vpack.c.b16 %v2773, %v2773
    %v3478 = vpack.c.b16 %v2774, %v2774
    %v3479 = vpack.c.b16 %v2775, %v2775
    %v3480 = vpack.c.b16 %v2776, %v2776
    %v3481 = vpack.c.b16 %v2777, %v2777
    %v3482 = vpack.c.b16 %v2778, %v2778
    %v3483 = vpack.c.b16 %v2779, %v2779
    %v3484 = vpack.c.b16 %v2780, %v2780
    %v3485 = vpack.c.b16 %v2781, %v2781
    %v3486 = vpack.c.b16 %v2782, %v2782
    %v3487 = vpack.c.b16 %v2783, %v2783
    %v3488 = vpack.c.b16 %v2784, %v2784
    %v3489 = vpack.c.b16 %v2785, %v2785
    %v3490 = vpack.c.b16 %v2786, %v2786
    %v3491 = vpack.c.b16 %v2787, %v2787
    %v3492 = vpack.c.b16 %v2788, %v2788
    %v3493 = vpack.c.b16 %v2789, %v2789
    %v3494 = vpack.c.b16 %v2790, %v2790
    %v3495 = vpack.c.b16 %v2791, %v2791
    %v3496 = vpack.c.b16 %v2792, %v2792
    %v3497 = vpack.c.b16 %v2793, %v2793
    %v3498 = vpack.c.b16 %v2794, %v2794
    %v3499 = vpack.c.b16 %v2795, %v2795
    %v3500 = vpack.c.b16 %v2796, %v2796
    %v3501 = vpack.c.b16 %v2797, %v2797
    %v3502 = vpack.c.b16 %v2798, %v2798
    %v3503 = vpack.c.b16 %v2799, %v2799
    %v3504 = vpack.c.b16 %v2800, %v2800
    %v3505 = vpack.c.b16 %v2801, %v2801
    %v3506 = vpack.c.b16 %v2802, %v2802
    %v3507 = vpack.c.b16 %v2803, %v2803
    %v3508 = vpack.c.b16 %v2804, %v2804
    %v3509 = vpack.c.b16 %v2805, %v2805
    %v3510 = vpack.c.b16 %v2806, %v2806
    %v3511 = vpack.c.b16 %v2807, %v2807
    %v3512 = vpack.c.b16 %v2808, %v2808
    %v3513 = vpack.c.b16 %v2809, %v2809
    %v3514 = vpack.c.b16 %v2810, %v2810
    %v3515 = vpack.c.b16 %v2811, %v2811
    %v3516 = vpack.c.b16 %v2812, %v2812
    %v3517 = vpack.c.b16 %v2813, %v2813
    %v3518 = vpack.c.b16 %v2814, %v2814
    %v3519 = vpack.c.b16 %v2815, %v2815
    %v3520 = vpack.c.b16 %v2816, %v2816
    %v3521 = vpack.c.b16 %v2817, %v2817
    %v3522 = vpack.c.b16 %v2818, %v2818
    %v3523 = vpack.c.b16 %v2819, %v2819
    %v3524 = vpack.c.b16 %v2820, %v2820
    %v3525 = vpack.c.b16 %v2821, %v2821
    %v3526 = vpack.c.b16 %v2822, %v2822
    %v3527 = vpack.c.b16 %v2823, %v2823
    %v3528 = vpack.c.b16 %v2824, %v2824
    %v3529 = vpack.c.b16 %v2825, %v2825
    %v3530 = vpack.c.b16 %v2826, %v2826
    %v3531 = vpack.c.b16 %v2827, %v2827
    %v3532 = vpack.c.b16 %v2828, %v2828
    %v3533 = vpack.c.b16 %v2829, %v2829
    %v3534 = vpack.c.b16 %v2830, %v2830
    %v3535 = vpack.c.b16 %v2831, %v2831
    %v3536 = vpack.c.b16 %v2832, %v2832
    %v3537 = vpack.c.b16 %v2833, %v2833
    %v3538 = vpack.c.b16 %v2834, %v2834
    %v3539 = vpack.c.b16 %v2835, %v2835
    %v3540 = vpack.c.b16 %v2836, %v2836
    %v3541 = vpack.c.b16 %v2837, %v2837
    %v3542 = vpack.c.b16 %v2838, %v2838
    %v3543 = vpack.c.b16 %v2839, %v2839
    %v3544 = vpack.c.b16 %v2840, %v2840
    %v3545 = vpack.c.b16 %v2841, %v2841
    %v3546 = vpack.c.b16 %v2842, %v2842
    %v3547 = vpack.c.b16 %v2843, %v2843
    %v3548 = vpack.c.b16 %v2844, %v2844
    %v3549 = vpack.c.b16 %v2845, %v2845
    %v3550 = vpack.c.b16 %v2846, %v2846
    %v3551 = vpack.c.b16 %v2847, %v2847
    %v3552 = vpack.c.b16 %v2848, %v2848
    %v3553 = vpack.c.b16 %v2849, %v2849
    %v3554 = vpack.c.b16 %v2850, %v2850
    %v3555 = vpack.c.b16 %v2851, %v2851
    %v3556 = vpack.c.b16 %v2852, %v2852
    %v3557 = vpack.c.b16 %v2853, %v2853
    %v3558 = vpack.c.b16 %v2854, %v2854
    %v3559 = vpack.c.b16 %v2855, %v2855
    %v3560 = vpack.c.b16 %v2856, %v2856
    %v3561 = vpack.c.b16 %v2857, %v2857
    %v3562 = vpack.c.b16 %v2858, %v2858
    %v3563 = vpack.c.b16 %v2859, %v2859
    %v3564 = vpack.c.b16 %v2860, %v2860
    %v3565 = vpack.c.b16 %v2861, %v2861
    %v3566 = vpack.c.b16 %v2862, %v2862
    %v3567 = vpack.c.b16 %v2863, %v2863
    %v3568 = vpack.c.b16 %v2864, %v2864
    %v3569 = vpack.c.b16 %v2865, %v2865
    %v3570 = vpack.c.b16 %v2866, %v2866
    %v3571 = vpack.c.b16 %v2867, %v2867
    %v3572 = vpack.c.b16 %v2868, %v2868
    %v3573 = vpack.c.b16 %v2869, %v2869
    %v3574 = vpack.c.b16 %v2870, %v2870
    %v3575 = vpack.c.b16 %v2871, %v2871
    %v3576 = vpack.c.b16 %v2872, %v2872
    %v3577 = vpack.c.b16 %v2873, %v2873
    %v3578 = vpack.c.b16 %v2874, %v2874
    %v3579 = vpack.c.b16 %v2875, %v2875
    %v3580 = vpack.c.b16 %v2876, %v2876
    %v3581 = vpack.c.b16 %v2877, %v2877
    %v3582 = vpack.c.b16 %v2878, %v2878
    %v3583 = vpack.c.b16 %v2879, %v2879
    %v3584 = vpack.c.b16 %v2880, %v2880
    %v3585 = vpack.c.b16 %v2881, %v2881
    %v3586 = vpack.c.b16 %v2882, %v2882
    %v3587 = vpack.c.b16 %v2883, %v2883
    %v3588 = vpack.c.b16 %v2884, %v2884
    %v3589 = vpack.c.b16 %v2885, %v2885
    %v3590 = vpack.c.b16 %v2886, %v2886
    %v3591 = vpack.c.b16 %v2887, %v2887
    %v3592 = vpack.c.b16 %v2888, %v2888
    %v3593 = vpack.c.b16 %v2889, %v2889
    %v3594 = vpack.c.b16 %v2890, %v2890
    %v3595 = vpack.c.b16 %v2891, %v2891
    %v3596 = vpack.c.b16 %v2892, %v2892
    %v3597 = vpack.c.b16 %v2893, %v2893
    %v3598 = vpack.c.b16 %v2894, %v2894
    %v3599 = vpack.c.b16 %v2895, %v2895
    %v3600 = vpack.c.b16 %v2896, %v2896
    %v3601 = vpack.c.b16 %v2897, %v2897
    %v3602 = vpack.c.b16 %v2898, %v2898
    %v3603 = vpack.c.b16 %v2899, %v2899
    %v3604 = vpack.c.b16 %v2900, %v2900
    %vm4305 = vcmask 818176
    %v4306 = vsel %vm4305, %v877, 0
    %v4309 = vsel %vm4305, %v3076, 0
    %v4312 = vsel %vm4305, %v3252, 0
    %v4315 = vsel %vm4305, %v3428, 0
    %v4318 = vsel %vm4305, %v3604, 0
    %4320 = vmatpush.bf16.xpose.msra.mxu0 0
    %4321 = vmatpush.bf16.xpose.msra.mxu0 0
    %4322 = vmatpush.bf16.xpose.msra.mxu0 0
    %4323 = vmatpush.bf16.xpose.msra.mxu0 0
    %4324 = vmatpush.bf16.xpose.msra.mxu0 %v3429
    %4325 = vmatpush.bf16.xpose.msra.mxu0 %v3253
    %4326 = vmatpush.bf16.xpose.msra.mxu0 %v3077
    %4327 = vmatpush.bf16.xpose.msra.mxu0 %v2901
    %4328 = vmatmul.bf16.gmra.mxu0 %v660
    %v4329 = vpop.f32.mrf.mxu0
    %v4330 = vadd.f32 %v656, %v4329
    %v4331 = vpop.f32.mrf.mxu0
    %4332 = vdwg.mxu0
    %4333 = vmatpush.bf16.xpose.msra.mxu0 0
    %4334 = vmatpush.bf16.xpose.msra.mxu0 0
    %4335 = vmatpush.bf16.xpose.msra.mxu0 0
    %4336 = vmatpush.bf16.xpose.msra.mxu0 0
    %4337 = vmatpush.bf16.xpose.msra.mxu0 %v3430
    %4338 = vmatpush.bf16.xpose.msra.mxu0 %v3254
    %4339 = vmatpush.bf16.xpose.msra.mxu0 %v3078
    %4340 = vmatpush.bf16.xpose.msra.mxu0 %v2902
    %4341 = vmatmul.bf16.gmra.mxu0 %v661
    %v4342 = vpop.f32.mrf.mxu0
    %v4343 = vadd.f32 %v4330, %v4342
    %v4344 = vpop.f32.mrf.mxu0
    %4345 = vdwg.mxu0
    %4346 = vmatpush.bf16.xpose.msra.mxu0 0
    %4347 = vmatpush.bf16.xpose.msra.mxu0 0
    %4348 = vmatpush.bf16.xpose.msra.mxu0 0
    %4349 = vmatpush.bf16.xpose.msra.mxu0 0
    %4350 = vmatpush.bf16.xpose.msra.mxu0 %v3431
    %4351 = vmatpush.bf16.xpose.msra.mxu0 %v3255
    %4352 = vmatpush.bf16.xpose.msra.mxu0 %v3079
    %4353 = vmatpush.bf16.xpose.msra.mxu0 %v2903
    %4354 = vmatmul.bf16.gmra.mxu0 %v662
    %v4355 = vpop.f32.mrf.mxu0
    %v4356 = vadd.f32 %v4343, %v4355
    %v4357 = vpop.f32.mrf.mxu0
    %4358 = vdwg.mxu0
    %4359 = vmatpush.bf16.xpose.msra.mxu0 0
    %4360 = vmatpush.bf16.xpose.msra.mxu0 0
    %4361 = vmatpush.bf16.xpose.msra.mxu0 0
    %4362 = vmatpush.bf16.xpose.msra.mxu0 0
    %4363 = vmatpush.bf16.xpose.msra.mxu0 %v3432
    %4364 = vmatpush.bf16.xpose.msra.mxu0 %v3256
    %4365 = vmatpush.bf16.xpose.msra.mxu0 %v3080
    %4366 = vmatpush.bf16.xpose.msra.mxu0 %v2904
    %4367 = vmatmul.bf16.gmra.mxu0 %v663
    %v4368 = vpop.f32.mrf.mxu0
    %v4369 = vadd.f32 %v4356, %v4368
    %v4370 = vpop.f32.mrf.mxu0
    %4371 = vdwg.mxu0
    %4372 = vmatpush.bf16.xpose.msra.mxu0 0
    %4373 = vmatpush.bf16.xpose.msra.mxu0 0
    %4374 = vmatpush.bf16.xpose.msra.mxu0 0
    %4375 = vmatpush.bf16.xpose.msra.mxu0 0
    %4376 = vmatpush.bf16.xpose.msra.mxu0 %v3433
    %4377 = vmatpush.bf16.xpose.msra.mxu0 %v3257
    %4378 = vmatpush.bf16.xpose.msra.mxu0 %v3081
    %4379 = vmatpush.bf16.xpose.msra.mxu0 %v2905
    %4380 = vmatmul.bf16.gmra.mxu0 %v664
    %v4381 = vpop.f32.mrf.mxu0
    %v4382 = vadd.f32 %v4369, %v4381
    %v4383 = vpop.f32.mrf.mxu0
    %4384 = vdwg.mxu0
    %4385 = vmatpush.bf16.xpose.msra.mxu0 0
    %4386 = vmatpush.bf16.xpose.msra.mxu0 0
    %4387 = vmatpush.bf16.xpose.msra.mxu0 0
    %4388 = vmatpush.bf16.xpose.msra.mxu0 0
    %4389 = vmatpush.bf16.xpose.msra.mxu0 %v3434
    %4390 = vmatpush.bf16.xpose.msra.mxu0 %v3258
    %4391 = vmatpush.bf16.xpose.msra.mxu0 %v3082
    %4392 = vmatpush.bf16.xpose.msra.mxu0 %v2906
    %4393 = vmatmul.bf16.gmra.mxu0 %v665
    %v4394 = vpop.f32.mrf.mxu0
    %v4395 = vadd.f32 %v4382, %v4394
    %v4396 = vpop.f32.mrf.mxu0
    %4397 = vdwg.mxu0
    %4398 = vmatpush.bf16.xpose.msra.mxu0 0
    %4399 = vmatpush.bf16.xpose.msra.mxu0 0
    %4400 = vmatpush.bf16.xpose.msra.mxu0 0
    %4401 = vmatpush.bf16.xpose.msra.mxu0 0
    %4402 = vmatpush.bf16.xpose.msra.mxu0 %v3435
    %4403 = vmatpush.bf16.xpose.msra.mxu0 %v3259
    %4404 = vmatpush.bf16.xpose.msra.mxu0 %v3083
    %4405 = vmatpush.bf16.xpose.msra.mxu0 %v2907
    %4406 = vmatmul.bf16.gmra.mxu0 %v666
    %v4407 = vpop.f32.mrf.mxu0
    %v4408 = vadd.f32 %v4395, %v4407
    %v4409 = vpop.f32.mrf.mxu0
    %4410 = vdwg.mxu0
    %4411 = vmatpush.bf16.xpose.msra.mxu0 0
    %4412 = vmatpush.bf16.xpose.msra.mxu0 0
    %4413 = vmatpush.bf16.xpose.msra.mxu0 0
    %4414 = vmatpush.bf16.xpose.msra.mxu0 0
    %4415 = vmatpush.bf16.xpose.msra.mxu0 %v3436
    %4416 = vmatpush.bf16.xpose.msra.mxu0 %v3260
    %4417 = vmatpush.bf16.xpose.msra.mxu0 %v3084
    %4418 = vmatpush.bf16.xpose.msra.mxu0 %v2908
    %4419 = vmatmul.bf16.gmra.mxu0 %v667
    %v4420 = vpop.f32.mrf.mxu0
    %v4421 = vadd.f32 %v4408, %v4420
    %v4422 = vpop.f32.mrf.mxu0
    %4423 = vdwg.mxu0
    %4424 = vmatpush.bf16.xpose.msra.mxu0 0
    %4425 = vmatpush.bf16.xpose.msra.mxu0 0
    %4426 = vmatpush.bf16.xpose.msra.mxu0 0
    %4427 = vmatpush.bf16.xpose.msra.mxu0 0
    %4428 = vmatpush.bf16.xpose.msra.mxu0 %v3437
    %4429 = vmatpush.bf16.xpose.msra.mxu0 %v3261
    %4430 = vmatpush.bf16.xpose.msra.mxu0 %v3085
    %4431 = vmatpush.bf16.xpose.msra.mxu0 %v2909
    %4432 = vmatmul.bf16.gmra.mxu0 %v670
    %v4433 = vpop.f32.mrf.mxu0
    %v4434 = vadd.f32 %v4421, %v4433
    %v4435 = vpop.f32.mrf.mxu0
    %4436 = vdwg.mxu0
    %4437 = vmatpush.bf16.xpose.msra.mxu0 0
    %4438 = vmatpush.bf16.xpose.msra.mxu0 0
    %4439 = vmatpush.bf16.xpose.msra.mxu0 0
    %4440 = vmatpush.bf16.xpose.msra.mxu0 0
    %4441 = vmatpush.bf16.xpose.msra.mxu0 %v3438
    %4442 = vmatpush.bf16.xpose.msra.mxu0 %v3262
    %4443 = vmatpush.bf16.xpose.msra.mxu0 %v3086
    %4444 = vmatpush.bf16.xpose.msra.mxu0 %v2910
    %4445 = vmatmul.bf16.gmra.mxu0 %v671
    %v4446 = vpop.f32.mrf.mxu0
    %v4447 = vadd.f32 %v4434, %v4446
    %v4448 = vpop.f32.mrf.mxu0
    %4449 = vdwg.mxu0
    %4450 = vmatpush.bf16.xpose.msra.mxu0 0
    %4451 = vmatpush.bf16.xpose.msra.mxu0 0
    %4452 = vmatpush.bf16.xpose.msra.mxu0 0
    %4453 = vmatpush.bf16.xpose.msra.mxu0 0
    %4454 = vmatpush.bf16.xpose.msra.mxu0 %v3439
    %4455 = vmatpush.bf16.xpose.msra.mxu0 %v3263
    %4456 = vmatpush.bf16.xpose.msra.mxu0 %v3087
    %4457 = vmatpush.bf16.xpose.msra.mxu0 %v2911
    %4458 = vmatmul.bf16.gmra.mxu0 %v672
    %v4459 = vpop.f32.mrf.mxu0
    %v4460 = vadd.f32 %v4447, %v4459
    %v4461 = vpop.f32.mrf.mxu0
    %4462 = vdwg.mxu0
    %4463 = vmatpush.bf16.xpose.msra.mxu0 0
    %4464 = vmatpush.bf16.xpose.msra.mxu0 0
    %4465 = vmatpush.bf16.xpose.msra.mxu0 0
    %4466 = vmatpush.bf16.xpose.msra.mxu0 0
    %4467 = vmatpush.bf16.xpose.msra.mxu0 %v3440
    %4468 = vmatpush.bf16.xpose.msra.mxu0 %v3264
    %4469 = vmatpush.bf16.xpose.msra.mxu0 %v3088
    %4470 = vmatpush.bf16.xpose.msra.mxu0 %v2912
    %4471 = vmatmul.bf16.gmra.mxu0 %v673
    %v4472 = vpop.f32.mrf.mxu0
    %v4473 = vadd.f32 %v4460, %v4472
    %v4474 = vpop.f32.mrf.mxu0
    %4475 = vdwg.mxu0
    %4476 = vmatpush.bf16.xpose.msra.mxu0 0
    %4477 = vmatpush.bf16.xpose.msra.mxu0 0
    %4478 = vmatpush.bf16.xpose.msra.mxu0 0
    %4479 = vmatpush.bf16.xpose.msra.mxu0 0
    %4480 = vmatpush.bf16.xpose.msra.mxu0 %v3441
    %4481 = vmatpush.bf16.xpose.msra.mxu0 %v3265
    %4482 = vmatpush.bf16.xpose.msra.mxu0 %v3089
    %4483 = vmatpush.bf16.xpose.msra.mxu0 %v2913
    %4484 = vmatmul.bf16.gmra.mxu0 %v674
    %v4485 = vpop.f32.mrf.mxu0
    %v4486 = vadd.f32 %v4473, %v4485
    %v4487 = vpop.f32.mrf.mxu0
    %4488 = vdwg.mxu0
    %4489 = vmatpush.bf16.xpose.msra.mxu0 0
    %4490 = vmatpush.bf16.xpose.msra.mxu0 0
    %4491 = vmatpush.bf16.xpose.msra.mxu0 0
    %4492 = vmatpush.bf16.xpose.msra.mxu0 0
    %4493 = vmatpush.bf16.xpose.msra.mxu0 %v3442
    %4494 = vmatpush.bf16.xpose.msra.mxu0 %v3266
    %4495 = vmatpush.bf16.xpose.msra.mxu0 %v3090
    %4496 = vmatpush.bf16.xpose.msra.mxu0 %v2914
    %4497 = vmatmul.bf16.gmra.mxu0 %v675
    %v4498 = vpop.f32.mrf.mxu0
    %v4499 = vadd.f32 %v4486, %v4498
    %v4500 = vpop.f32.mrf.mxu0
    %4501 = vdwg.mxu0
    %4502 = vmatpush.bf16.xpose.msra.mxu0 0
    %4503 = vmatpush.bf16.xpose.msra.mxu0 0
    %4504 = vmatpush.bf16.xpose.msra.mxu0 0
    %4505 = vmatpush.bf16.xpose.msra.mxu0 0
    %4506 = vmatpush.bf16.xpose.msra.mxu0 %v3443
    %4507 = vmatpush.bf16.xpose.msra.mxu0 %v3267
    %4508 = vmatpush.bf16.xpose.msra.mxu0 %v3091
    %4509 = vmatpush.bf16.xpose.msra.mxu0 %v2915
    %4510 = vmatmul.bf16.gmra.mxu0 %v676
    %v4511 = vpop.f32.mrf.mxu0
    %v4512 = vadd.f32 %v4499, %v4511
    %v4513 = vpop.f32.mrf.mxu0
    %4514 = vdwg.mxu0
    %4515 = vmatpush.bf16.xpose.msra.mxu0 0
    %4516 = vmatpush.bf16.xpose.msra.mxu0 0
    %4517 = vmatpush.bf16.xpose.msra.mxu0 0
    %4518 = vmatpush.bf16.xpose.msra.mxu0 0
    %4519 = vmatpush.bf16.xpose.msra.mxu0 %v3444
    %4520 = vmatpush.bf16.xpose.msra.mxu0 %v3268
    %4521 = vmatpush.bf16.xpose.msra.mxu0 %v3092
    %4522 = vmatpush.bf16.xpose.msra.mxu0 %v2916
    %4523 = vmatmul.bf16.gmra.mxu0 %v677
    %v4524 = vpop.f32.mrf.mxu0
    %v4525 = vadd.f32 %v4512, %v4524
    %v4526 = vpop.f32.mrf.mxu0
    %4527 = vdwg.mxu0
    %4528 = vmatpush.bf16.xpose.msra.mxu0 0
    %4529 = vmatpush.bf16.xpose.msra.mxu0 0
    %4530 = vmatpush.bf16.xpose.msra.mxu0 0
    %4531 = vmatpush.bf16.xpose.msra.mxu0 0
    %4532 = vmatpush.bf16.xpose.msra.mxu0 %v3445
    %4533 = vmatpush.bf16.xpose.msra.mxu0 %v3269
    %4534 = vmatpush.bf16.xpose.msra.mxu0 %v3093
    %4535 = vmatpush.bf16.xpose.msra.mxu0 %v2917
    %4536 = vmatmul.bf16.gmra.mxu0 %v680
    %v4537 = vpop.f32.mrf.mxu0
    %v4538 = vadd.f32 %v4525, %v4537
    %v4539 = vpop.f32.mrf.mxu0
    %4540 = vdwg.mxu0
    %4541 = vmatpush.bf16.xpose.msra.mxu0 0
    %4542 = vmatpush.bf16.xpose.msra.mxu0 0
    %4543 = vmatpush.bf16.xpose.msra.mxu0 0
    %4544 = vmatpush.bf16.xpose.msra.mxu0 0
    %4545 = vmatpush.bf16.xpose.msra.mxu0 %v3446
    %4546 = vmatpush.bf16.xpose.msra.mxu0 %v3270
    %4547 = vmatpush.bf16.xpose.msra.mxu0 %v3094
    %4548 = vmatpush.bf16.xpose.msra.mxu0 %v2918
    %4549 = vmatmul.bf16.gmra.mxu0 %v681
    %v4550 = vpop.f32.mrf.mxu0
    %v4551 = vadd.f32 %v4538, %v4550
    %v4552 = vpop.f32.mrf.mxu0
    %4553 = vdwg.mxu0
    %4554 = vmatpush.bf16.xpose.msra.mxu0 0
    %4555 = vmatpush.bf16.xpose.msra.mxu0 0
    %4556 = vmatpush.bf16.xpose.msra.mxu0 0
    %4557 = vmatpush.bf16.xpose.msra.mxu0 0
    %4558 = vmatpush.bf16.xpose.msra.mxu0 %v3447
    %4559 = vmatpush.bf16.xpose.msra.mxu0 %v3271
    %4560 = vmatpush.bf16.xpose.msra.mxu0 %v3095
    %4561 = vmatpush.bf16.xpose.msra.mxu0 %v2919
    %4562 = vmatmul.bf16.gmra.mxu0 %v682
    %v4563 = vpop.f32.mrf.mxu0
    %v4564 = vadd.f32 %v4551, %v4563
    %v4565 = vpop.f32.mrf.mxu0
    %4566 = vdwg.mxu0
    %4567 = vmatpush.bf16.xpose.msra.mxu0 0
    %4568 = vmatpush.bf16.xpose.msra.mxu0 0
    %4569 = vmatpush.bf16.xpose.msra.mxu0 0
    %4570 = vmatpush.bf16.xpose.msra.mxu0 0
    %4571 = vmatpush.bf16.xpose.msra.mxu0 %v3448
    %4572 = vmatpush.bf16.xpose.msra.mxu0 %v3272
    %4573 = vmatpush.bf16.xpose.msra.mxu0 %v3096
    %4574 = vmatpush.bf16.xpose.msra.mxu0 %v2920
    %4575 = vmatmul.bf16.gmra.mxu0 %v683
    %v4576 = vpop.f32.mrf.mxu0
    %v4577 = vadd.f32 %v4564, %v4576
    %v4578 = vpop.f32.mrf.mxu0
    %4579 = vdwg.mxu0
    %4580 = vmatpush.bf16.xpose.msra.mxu0 0
    %4581 = vmatpush.bf16.xpose.msra.mxu0 0
    %4582 = vmatpush.bf16.xpose.msra.mxu0 0
    %4583 = vmatpush.bf16.xpose.msra.mxu0 0
    %4584 = vmatpush.bf16.xpose.msra.mxu0 %v3449
    %4585 = vmatpush.bf16.xpose.msra.mxu0 %v3273
    %4586 = vmatpush.bf16.xpose.msra.mxu0 %v3097
    %4587 = vmatpush.bf16.xpose.msra.mxu0 %v2921
    %4588 = vmatmul.bf16.gmra.mxu0 %v684
    %v4589 = vpop.f32.mrf.mxu0
    %v4590 = vadd.f32 %v4577, %v4589
    %v4591 = vpop.f32.mrf.mxu0
    %4592 = vdwg.mxu0
    %4593 = vmatpush.bf16.xpose.msra.mxu0 0
    %4594 = vmatpush.bf16.xpose.msra.mxu0 0
    %4595 = vmatpush.bf16.xpose.msra.mxu0 0
    %4596 = vmatpush.bf16.xpose.msra.mxu0 0
    %4597 = vmatpush.bf16.xpose.msra.mxu0 %v3450
    %4598 = vmatpush.bf16.xpose.msra.mxu0 %v3274
    %4599 = vmatpush.bf16.xpose.msra.mxu0 %v3098
    %4600 = vmatpush.bf16.xpose.msra.mxu0 %v2922
    %4601 = vmatmul.bf16.gmra.mxu0 %v685
    %v4602 = vpop.f32.mrf.mxu0
    %v4603 = vadd.f32 %v4590, %v4602
    %v4604 = vpop.f32.mrf.mxu0
    %4605 = vdwg.mxu0
    %4606 = vmatpush.bf16.xpose.msra.mxu0 0
    %4607 = vmatpush.bf16.xpose.msra.mxu0 0
    %4608 = vmatpush.bf16.xpose.msra.mxu0 0
    %4609 = vmatpush.bf16.xpose.msra.mxu0 0
    %4610 = vmatpush.bf16.xpose.msra.mxu0 %v3451
    %4611 = vmatpush.bf16.xpose.msra.mxu0 %v3275
    %4612 = vmatpush.bf16.xpose.msra.mxu0 %v3099
    %4613 = vmatpush.bf16.xpose.msra.mxu0 %v2923
    %4614 = vmatmul.bf16.gmra.mxu0 %v686
    %v4615 = vpop.f32.mrf.mxu0
    %v4616 = vadd.f32 %v4603, %v4615
    %v4617 = vpop.f32.mrf.mxu0
    %4618 = vdwg.mxu0
    %4619 = vmatpush.bf16.xpose.msra.mxu0 0
    %4620 = vmatpush.bf16.xpose.msra.mxu0 0
    %4621 = vmatpush.bf16.xpose.msra.mxu0 0
    %4622 = vmatpush.bf16.xpose.msra.mxu0 0
    %4623 = vmatpush.bf16.xpose.msra.mxu0 %v3452
    %4624 = vmatpush.bf16.xpose.msra.mxu0 %v3276
    %4625 = vmatpush.bf16.xpose.msra.mxu0 %v3100
    %4626 = vmatpush.bf16.xpose.msra.mxu0 %v2924
    %4627 = vmatmul.bf16.gmra.mxu0 %v687
    %v4628 = vpop.f32.mrf.mxu0
    %v4629 = vadd.f32 %v4616, %v4628
    %v4630 = vpop.f32.mrf.mxu0
    %4631 = vdwg.mxu0
    %4632 = vmatpush.bf16.xpose.msra.mxu0 0
    %4633 = vmatpush.bf16.xpose.msra.mxu0 0
    %4634 = vmatpush.bf16.xpose.msra.mxu0 0
    %4635 = vmatpush.bf16.xpose.msra.mxu0 0
    %4636 = vmatpush.bf16.xpose.msra.mxu0 %v3453
    %4637 = vmatpush.bf16.xpose.msra.mxu0 %v3277
    %4638 = vmatpush.bf16.xpose.msra.mxu0 %v3101
    %4639 = vmatpush.bf16.xpose.msra.mxu0 %v2925
    %4640 = vmatmul.bf16.gmra.mxu0 %v690
    %v4641 = vpop.f32.mrf.mxu0
    %v4642 = vadd.f32 %v4629, %v4641
    %v4643 = vpop.f32.mrf.mxu0
    %4644 = vdwg.mxu0
    %4645 = vmatpush.bf16.xpose.msra.mxu0 0
    %4646 = vmatpush.bf16.xpose.msra.mxu0 0
    %4647 = vmatpush.bf16.xpose.msra.mxu0 0
    %4648 = vmatpush.bf16.xpose.msra.mxu0 0
    %4649 = vmatpush.bf16.xpose.msra.mxu0 %v3454
    %4650 = vmatpush.bf16.xpose.msra.mxu0 %v3278
    %4651 = vmatpush.bf16.xpose.msra.mxu0 %v3102
    %4652 = vmatpush.bf16.xpose.msra.mxu0 %v2926
    %4653 = vmatmul.bf16.gmra.mxu0 %v691
    %v4654 = vpop.f32.mrf.mxu0
    %v4655 = vadd.f32 %v4642, %v4654
    %v4656 = vpop.f32.mrf.mxu0
    %4657 = vdwg.mxu0
    %4658 = vmatpush.bf16.xpose.msra.mxu0 0
    %4659 = vmatpush.bf16.xpose.msra.mxu0 0
    %4660 = vmatpush.bf16.xpose.msra.mxu0 0
    %4661 = vmatpush.bf16.xpose.msra.mxu0 0
    %4662 = vmatpush.bf16.xpose.msra.mxu0 %v3455
    %4663 = vmatpush.bf16.xpose.msra.mxu0 %v3279
    %4664 = vmatpush.bf16.xpose.msra.mxu0 %v3103
    %4665 = vmatpush.bf16.xpose.msra.mxu0 %v2927
    %4666 = vmatmul.bf16.gmra.mxu0 %v692
    %v4667 = vpop.f32.mrf.mxu0
    %v4668 = vadd.f32 %v4655, %v4667
    %v4669 = vpop.f32.mrf.mxu0
    %4670 = vdwg.mxu0
    %4671 = vmatpush.bf16.xpose.msra.mxu0 0
    %4672 = vmatpush.bf16.xpose.msra.mxu0 0
    %4673 = vmatpush.bf16.xpose.msra.mxu0 0
    %4674 = vmatpush.bf16.xpose.msra.mxu0 0
    %4675 = vmatpush.bf16.xpose.msra.mxu0 %v3456
    %4676 = vmatpush.bf16.xpose.msra.mxu0 %v3280
    %4677 = vmatpush.bf16.xpose.msra.mxu0 %v3104
    %4678 = vmatpush.bf16.xpose.msra.mxu0 %v2928
    %4679 = vmatmul.bf16.gmra.mxu0 %v693
    %v4680 = vpop.f32.mrf.mxu0
    %v4681 = vadd.f32 %v4668, %v4680
    %v4682 = vpop.f32.mrf.mxu0
    %4683 = vdwg.mxu0
    %4684 = vmatpush.bf16.xpose.msra.mxu0 0
    %4685 = vmatpush.bf16.xpose.msra.mxu0 0
    %4686 = vmatpush.bf16.xpose.msra.mxu0 0
    %4687 = vmatpush.bf16.xpose.msra.mxu0 0
    %4688 = vmatpush.bf16.xpose.msra.mxu0 %v3457
    %4689 = vmatpush.bf16.xpose.msra.mxu0 %v3281
    %4690 = vmatpush.bf16.xpose.msra.mxu0 %v3105
    %4691 = vmatpush.bf16.xpose.msra.mxu0 %v2929
    %4692 = vmatmul.bf16.gmra.mxu0 %v694
    %v4693 = vpop.f32.mrf.mxu0
    %v4694 = vadd.f32 %v4681, %v4693
    %v4695 = vpop.f32.mrf.mxu0
    %4696 = vdwg.mxu0
    %4697 = vmatpush.bf16.xpose.msra.mxu0 0
    %4698 = vmatpush.bf16.xpose.msra.mxu0 0
    %4699 = vmatpush.bf16.xpose.msra.mxu0 0
    %4700 = vmatpush.bf16.xpose.msra.mxu0 0
    %4701 = vmatpush.bf16.xpose.msra.mxu0 %v3458
    %4702 = vmatpush.bf16.xpose.msra.mxu0 %v3282
    %4703 = vmatpush.bf16.xpose.msra.mxu0 %v3106
    %4704 = vmatpush.bf16.xpose.msra.mxu0 %v2930
    %4705 = vmatmul.bf16.gmra.mxu0 %v695
    %v4706 = vpop.f32.mrf.mxu0
    %v4707 = vadd.f32 %v4694, %v4706
    %v4708 = vpop.f32.mrf.mxu0
    %4709 = vdwg.mxu0
    %4710 = vmatpush.bf16.xpose.msra.mxu0 0
    %4711 = vmatpush.bf16.xpose.msra.mxu0 0
    %4712 = vmatpush.bf16.xpose.msra.mxu0 0
    %4713 = vmatpush.bf16.xpose.msra.mxu0 0
    %4714 = vmatpush.bf16.xpose.msra.mxu0 %v3459
    %4715 = vmatpush.bf16.xpose.msra.mxu0 %v3283
    %4716 = vmatpush.bf16.xpose.msra.mxu0 %v3107
    %4717 = vmatpush.bf16.xpose.msra.mxu0 %v2931
    %4718 = vmatmul.bf16.gmra.mxu0 %v696
    %v4719 = vpop.f32.mrf.mxu0
    %v4720 = vadd.f32 %v4707, %v4719
    %v4721 = vpop.f32.mrf.mxu0
    %4722 = vdwg.mxu0
    %4723 = vmatpush.bf16.xpose.msra.mxu0 0
    %4724 = vmatpush.bf16.xpose.msra.mxu0 0
    %4725 = vmatpush.bf16.xpose.msra.mxu0 0
    %4726 = vmatpush.bf16.xpose.msra.mxu0 0
    %4727 = vmatpush.bf16.xpose.msra.mxu0 %v3460
    %4728 = vmatpush.bf16.xpose.msra.mxu0 %v3284
    %4729 = vmatpush.bf16.xpose.msra.mxu0 %v3108
    %4730 = vmatpush.bf16.xpose.msra.mxu0 %v2932
    %4731 = vmatmul.bf16.gmra.mxu0 %v697
    %v4732 = vpop.f32.mrf.mxu0
    %v4733 = vadd.f32 %v4720, %v4732
    %v4734 = vpop.f32.mrf.mxu0
    %4735 = vdwg.mxu0
    %4736 = vmatpush.bf16.xpose.msra.mxu0 0
    %4737 = vmatpush.bf16.xpose.msra.mxu0 0
    %4738 = vmatpush.bf16.xpose.msra.mxu0 0
    %4739 = vmatpush.bf16.xpose.msra.mxu0 0
    %4740 = vmatpush.bf16.xpose.msra.mxu0 %v3461
    %4741 = vmatpush.bf16.xpose.msra.mxu0 %v3285
    %4742 = vmatpush.bf16.xpose.msra.mxu0 %v3109
    %4743 = vmatpush.bf16.xpose.msra.mxu0 %v2933
    %4744 = vmatmul.bf16.gmra.mxu0 %v700
    %v4745 = vpop.f32.mrf.mxu0
    %v4746 = vadd.f32 %v4733, %v4745
    %v4747 = vpop.f32.mrf.mxu0
    %4748 = vdwg.mxu0
    %4749 = vmatpush.bf16.xpose.msra.mxu0 0
    %4750 = vmatpush.bf16.xpose.msra.mxu0 0
    %4751 = vmatpush.bf16.xpose.msra.mxu0 0
    %4752 = vmatpush.bf16.xpose.msra.mxu0 0
    %4753 = vmatpush.bf16.xpose.msra.mxu0 %v3462
    %4754 = vmatpush.bf16.xpose.msra.mxu0 %v3286
    %4755 = vmatpush.bf16.xpose.msra.mxu0 %v3110
    %4756 = vmatpush.bf16.xpose.msra.mxu0 %v2934
    %4757 = vmatmul.bf16.gmra.mxu0 %v701
    %v4758 = vpop.f32.mrf.mxu0
    %v4759 = vadd.f32 %v4746, %v4758
    %v4760 = vpop.f32.mrf.mxu0
    %4761 = vdwg.mxu0
    %4762 = vmatpush.bf16.xpose.msra.mxu0 0
    %4763 = vmatpush.bf16.xpose.msra.mxu0 0
    %4764 = vmatpush.bf16.xpose.msra.mxu0 0
    %4765 = vmatpush.bf16.xpose.msra.mxu0 0
    %4766 = vmatpush.bf16.xpose.msra.mxu0 %v3463
    %4767 = vmatpush.bf16.xpose.msra.mxu0 %v3287
    %4768 = vmatpush.bf16.xpose.msra.mxu0 %v3111
    %4769 = vmatpush.bf16.xpose.msra.mxu0 %v2935
    %4770 = vmatmul.bf16.gmra.mxu0 %v702
    %v4771 = vpop.f32.mrf.mxu0
    %v4772 = vadd.f32 %v4759, %v4771
    %v4773 = vpop.f32.mrf.mxu0
    %4774 = vdwg.mxu0
    %4775 = vmatpush.bf16.xpose.msra.mxu0 0
    %4776 = vmatpush.bf16.xpose.msra.mxu0 0
    %4777 = vmatpush.bf16.xpose.msra.mxu0 0
    %4778 = vmatpush.bf16.xpose.msra.mxu0 0
    %4779 = vmatpush.bf16.xpose.msra.mxu0 %v3464
    %4780 = vmatpush.bf16.xpose.msra.mxu0 %v3288
    %4781 = vmatpush.bf16.xpose.msra.mxu0 %v3112
    %4782 = vmatpush.bf16.xpose.msra.mxu0 %v2936
    %4783 = vmatmul.bf16.gmra.mxu0 %v703
    %v4784 = vpop.f32.mrf.mxu0
    %v4785 = vadd.f32 %v4772, %v4784
    %v4786 = vpop.f32.mrf.mxu0
    %4787 = vdwg.mxu0
    %4788 = vmatpush.bf16.xpose.msra.mxu0 0
    %4789 = vmatpush.bf16.xpose.msra.mxu0 0
    %4790 = vmatpush.bf16.xpose.msra.mxu0 0
    %4791 = vmatpush.bf16.xpose.msra.mxu0 0
    %4792 = vmatpush.bf16.xpose.msra.mxu0 %v3465
    %4793 = vmatpush.bf16.xpose.msra.mxu0 %v3289
    %4794 = vmatpush.bf16.xpose.msra.mxu0 %v3113
    %4795 = vmatpush.bf16.xpose.msra.mxu0 %v2937
    %4796 = vmatmul.bf16.gmra.mxu0 %v704
    %v4797 = vpop.f32.mrf.mxu0
    %v4798 = vadd.f32 %v4785, %v4797
    %v4799 = vpop.f32.mrf.mxu0
    %4800 = vdwg.mxu0
    %4801 = vmatpush.bf16.xpose.msra.mxu0 0
    %4802 = vmatpush.bf16.xpose.msra.mxu0 0
    %4803 = vmatpush.bf16.xpose.msra.mxu0 0
    %4804 = vmatpush.bf16.xpose.msra.mxu0 0
    %4805 = vmatpush.bf16.xpose.msra.mxu0 %v3466
    %4806 = vmatpush.bf16.xpose.msra.mxu0 %v3290
    %4807 = vmatpush.bf16.xpose.msra.mxu0 %v3114
    %4808 = vmatpush.bf16.xpose.msra.mxu0 %v2938
    %4809 = vmatmul.bf16.gmra.mxu0 %v705
    %v4810 = vpop.f32.mrf.mxu0
    %v4811 = vadd.f32 %v4798, %v4810
    %v4812 = vpop.f32.mrf.mxu0
    %4813 = vdwg.mxu0
    %4814 = vmatpush.bf16.xpose.msra.mxu0 0
    %4815 = vmatpush.bf16.xpose.msra.mxu0 0
    %4816 = vmatpush.bf16.xpose.msra.mxu0 0
    %4817 = vmatpush.bf16.xpose.msra.mxu0 0
    %4818 = vmatpush.bf16.xpose.msra.mxu0 %v3467
    %4819 = vmatpush.bf16.xpose.msra.mxu0 %v3291
    %4820 = vmatpush.bf16.xpose.msra.mxu0 %v3115
    %4821 = vmatpush.bf16.xpose.msra.mxu0 %v2939
    %4822 = vmatmul.bf16.gmra.mxu0 %v706
    %v4823 = vpop.f32.mrf.mxu0
    %v4824 = vadd.f32 %v4811, %v4823
    %v4825 = vpop.f32.mrf.mxu0
    %4826 = vdwg.mxu0
    %4827 = vmatpush.bf16.xpose.msra.mxu0 0
    %4828 = vmatpush.bf16.xpose.msra.mxu0 0
    %4829 = vmatpush.bf16.xpose.msra.mxu0 0
    %4830 = vmatpush.bf16.xpose.msra.mxu0 0
    %4831 = vmatpush.bf16.xpose.msra.mxu0 %v3468
    %4832 = vmatpush.bf16.xpose.msra.mxu0 %v3292
    %4833 = vmatpush.bf16.xpose.msra.mxu0 %v3116
    %4834 = vmatpush.bf16.xpose.msra.mxu0 %v2940
    %4835 = vmatmul.bf16.gmra.mxu0 %v707
    %v4836 = vpop.f32.mrf.mxu0
    %v4837 = vadd.f32 %v4824, %v4836
    %v4838 = vpop.f32.mrf.mxu0
    %4839 = vdwg.mxu0
    %4840 = vmatpush.bf16.xpose.msra.mxu0 0
    %4841 = vmatpush.bf16.xpose.msra.mxu0 0
    %4842 = vmatpush.bf16.xpose.msra.mxu0 0
    %4843 = vmatpush.bf16.xpose.msra.mxu0 0
    %4844 = vmatpush.bf16.xpose.msra.mxu0 %v3469
    %4845 = vmatpush.bf16.xpose.msra.mxu0 %v3293
    %4846 = vmatpush.bf16.xpose.msra.mxu0 %v3117
    %4847 = vmatpush.bf16.xpose.msra.mxu0 %v2941
    %4848 = vmatmul.bf16.gmra.mxu0 %v710
    %v4849 = vpop.f32.mrf.mxu0
    %v4850 = vadd.f32 %v4837, %v4849
    %v4851 = vpop.f32.mrf.mxu0
    %4852 = vdwg.mxu0
    %4853 = vmatpush.bf16.xpose.msra.mxu0 0
    %4854 = vmatpush.bf16.xpose.msra.mxu0 0
    %4855 = vmatpush.bf16.xpose.msra.mxu0 0
    %4856 = vmatpush.bf16.xpose.msra.mxu0 0
    %4857 = vmatpush.bf16.xpose.msra.mxu0 %v3470
    %4858 = vmatpush.bf16.xpose.msra.mxu0 %v3294
    %4859 = vmatpush.bf16.xpose.msra.mxu0 %v3118
    %4860 = vmatpush.bf16.xpose.msra.mxu0 %v2942
    %4861 = vmatmul.bf16.gmra.mxu0 %v711
    %v4862 = vpop.f32.mrf.mxu0
    %v4863 = vadd.f32 %v4850, %v4862
    %v4864 = vpop.f32.mrf.mxu0
    %4865 = vdwg.mxu0
    %4866 = vmatpush.bf16.xpose.msra.mxu0 0
    %4867 = vmatpush.bf16.xpose.msra.mxu0 0
    %4868 = vmatpush.bf16.xpose.msra.mxu0 0
    %4869 = vmatpush.bf16.xpose.msra.mxu0 0
    %4870 = vmatpush.bf16.xpose.msra.mxu0 %v3471
    %4871 = vmatpush.bf16.xpose.msra.mxu0 %v3295
    %4872 = vmatpush.bf16.xpose.msra.mxu0 %v3119
    %4873 = vmatpush.bf16.xpose.msra.mxu0 %v2943
    %4874 = vmatmul.bf16.gmra.mxu0 %v712
    %v4875 = vpop.f32.mrf.mxu0
    %v4876 = vadd.f32 %v4863, %v4875
    %v4877 = vpop.f32.mrf.mxu0
    %4878 = vdwg.mxu0
    %4879 = vmatpush.bf16.xpose.msra.mxu0 0
    %4880 = vmatpush.bf16.xpose.msra.mxu0 0
    %4881 = vmatpush.bf16.xpose.msra.mxu0 0
    %4882 = vmatpush.bf16.xpose.msra.mxu0 0
    %4883 = vmatpush.bf16.xpose.msra.mxu0 %v3472
    %4884 = vmatpush.bf16.xpose.msra.mxu0 %v3296
    %4885 = vmatpush.bf16.xpose.msra.mxu0 %v3120
    %4886 = vmatpush.bf16.xpose.msra.mxu0 %v2944
    %4887 = vmatmul.bf16.gmra.mxu0 %v713
    %v4888 = vpop.f32.mrf.mxu0
    %v4889 = vadd.f32 %v4876, %v4888
    %v4890 = vpop.f32.mrf.mxu0
    %4891 = vdwg.mxu0
    %4892 = vmatpush.bf16.xpose.msra.mxu0 0
    %4893 = vmatpush.bf16.xpose.msra.mxu0 0
    %4894 = vmatpush.bf16.xpose.msra.mxu0 0
    %4895 = vmatpush.bf16.xpose.msra.mxu0 0
    %4896 = vmatpush.bf16.xpose.msra.mxu0 %v3473
    %4897 = vmatpush.bf16.xpose.msra.mxu0 %v3297
    %4898 = vmatpush.bf16.xpose.msra.mxu0 %v3121
    %4899 = vmatpush.bf16.xpose.msra.mxu0 %v2945
    %4900 = vmatmul.bf16.gmra.mxu0 %v714
    %v4901 = vpop.f32.mrf.mxu0
    %v4902 = vadd.f32 %v4889, %v4901
    %v4903 = vpop.f32.mrf.mxu0
    %4904 = vdwg.mxu0
    %4905 = vmatpush.bf16.xpose.msra.mxu0 0
    %4906 = vmatpush.bf16.xpose.msra.mxu0 0
    %4907 = vmatpush.bf16.xpose.msra.mxu0 0
    %4908 = vmatpush.bf16.xpose.msra.mxu0 0
    %4909 = vmatpush.bf16.xpose.msra.mxu0 %v3474
    %4910 = vmatpush.bf16.xpose.msra.mxu0 %v3298
    %4911 = vmatpush.bf16.xpose.msra.mxu0 %v3122
    %4912 = vmatpush.bf16.xpose.msra.mxu0 %v2946
    %4913 = vmatmul.bf16.gmra.mxu0 %v715
    %v4914 = vpop.f32.mrf.mxu0
    %v4915 = vadd.f32 %v4902, %v4914
    %v4916 = vpop.f32.mrf.mxu0
    %4917 = vdwg.mxu0
    %4918 = vmatpush.bf16.xpose.msra.mxu0 0
    %4919 = vmatpush.bf16.xpose.msra.mxu0 0
    %4920 = vmatpush.bf16.xpose.msra.mxu0 0
    %4921 = vmatpush.bf16.xpose.msra.mxu0 0
    %4922 = vmatpush.bf16.xpose.msra.mxu0 %v3475
    %4923 = vmatpush.bf16.xpose.msra.mxu0 %v3299
    %4924 = vmatpush.bf16.xpose.msra.mxu0 %v3123
    %4925 = vmatpush.bf16.xpose.msra.mxu0 %v2947
    %4926 = vmatmul.bf16.gmra.mxu0 %v716
    %v4927 = vpop.f32.mrf.mxu0
    %v4928 = vadd.f32 %v4915, %v4927
    %v4929 = vpop.f32.mrf.mxu0
    %4930 = vdwg.mxu0
    %4931 = vmatpush.bf16.xpose.msra.mxu0 0
    %4932 = vmatpush.bf16.xpose.msra.mxu0 0
    %4933 = vmatpush.bf16.xpose.msra.mxu0 0
    %4934 = vmatpush.bf16.xpose.msra.mxu0 0
    %4935 = vmatpush.bf16.xpose.msra.mxu0 %v3476
    %4936 = vmatpush.bf16.xpose.msra.mxu0 %v3300
    %4937 = vmatpush.bf16.xpose.msra.mxu0 %v3124
    %4938 = vmatpush.bf16.xpose.msra.mxu0 %v2948
    %4939 = vmatmul.bf16.gmra.mxu0 %v717
    %v4940 = vpop.f32.mrf.mxu0
    %v4941 = vadd.f32 %v4928, %v4940
    %v4942 = vpop.f32.mrf.mxu0
    %4943 = vdwg.mxu0
    %4944 = vmatpush.bf16.xpose.msra.mxu0 0
    %4945 = vmatpush.bf16.xpose.msra.mxu0 0
    %4946 = vmatpush.bf16.xpose.msra.mxu0 0
    %4947 = vmatpush.bf16.xpose.msra.mxu0 0
    %4948 = vmatpush.bf16.xpose.msra.mxu0 %v3477
    %4949 = vmatpush.bf16.xpose.msra.mxu0 %v3301
    %4950 = vmatpush.bf16.xpose.msra.mxu0 %v3125
    %4951 = vmatpush.bf16.xpose.msra.mxu0 %v2949
    %4952 = vmatmul.bf16.gmra.mxu0 %v720
    %v4953 = vpop.f32.mrf.mxu0
    %v4954 = vadd.f32 %v4941, %v4953
    %v4955 = vpop.f32.mrf.mxu0
    %4956 = vdwg.mxu0
    %4957 = vmatpush.bf16.xpose.msra.mxu0 0
    %4958 = vmatpush.bf16.xpose.msra.mxu0 0
    %4959 = vmatpush.bf16.xpose.msra.mxu0 0
    %4960 = vmatpush.bf16.xpose.msra.mxu0 0
    %4961 = vmatpush.bf16.xpose.msra.mxu0 %v3478
    %4962 = vmatpush.bf16.xpose.msra.mxu0 %v3302
    %4963 = vmatpush.bf16.xpose.msra.mxu0 %v3126
    %4964 = vmatpush.bf16.xpose.msra.mxu0 %v2950
    %4965 = vmatmul.bf16.gmra.mxu0 %v721
    %v4966 = vpop.f32.mrf.mxu0
    %v4967 = vadd.f32 %v4954, %v4966
    %v4968 = vpop.f32.mrf.mxu0
    %4969 = vdwg.mxu0
    %4970 = vmatpush.bf16.xpose.msra.mxu0 0
    %4971 = vmatpush.bf16.xpose.msra.mxu0 0
    %4972 = vmatpush.bf16.xpose.msra.mxu0 0
    %4973 = vmatpush.bf16.xpose.msra.mxu0 0
    %4974 = vmatpush.bf16.xpose.msra.mxu0 %v3479
    %4975 = vmatpush.bf16.xpose.msra.mxu0 %v3303
    %4976 = vmatpush.bf16.xpose.msra.mxu0 %v3127
    %4977 = vmatpush.bf16.xpose.msra.mxu0 %v2951
    %4978 = vmatmul.bf16.gmra.mxu0 %v722
    %v4979 = vpop.f32.mrf.mxu0
    %v4980 = vadd.f32 %v4967, %v4979
    %v4981 = vpop.f32.mrf.mxu0
    %4982 = vdwg.mxu0
    %4983 = vmatpush.bf16.xpose.msra.mxu0 0
    %4984 = vmatpush.bf16.xpose.msra.mxu0 0
    %4985 = vmatpush.bf16.xpose.msra.mxu0 0
    %4986 = vmatpush.bf16.xpose.msra.mxu0 0
    %4987 = vmatpush.bf16.xpose.msra.mxu0 %v3480
    %4988 = vmatpush.bf16.xpose.msra.mxu0 %v3304
    %4989 = vmatpush.bf16.xpose.msra.mxu0 %v3128
    %4990 = vmatpush.bf16.xpose.msra.mxu0 %v2952
    %4991 = vmatmul.bf16.gmra.mxu0 %v723
    %v4992 = vpop.f32.mrf.mxu0
    %v4993 = vadd.f32 %v4980, %v4992
    %v4994 = vpop.f32.mrf.mxu0
    %4995 = vdwg.mxu0
    %4996 = vmatpush.bf16.xpose.msra.mxu0 0
    %4997 = vmatpush.bf16.xpose.msra.mxu0 0
    %4998 = vmatpush.bf16.xpose.msra.mxu0 0
    %4999 = vmatpush.bf16.xpose.msra.mxu0 0
    %5000 = vmatpush.bf16.xpose.msra.mxu0 %v3481
    %5001 = vmatpush.bf16.xpose.msra.mxu0 %v3305
    %5002 = vmatpush.bf16.xpose.msra.mxu0 %v3129
    %5003 = vmatpush.bf16.xpose.msra.mxu0 %v2953
    %5004 = vmatmul.bf16.gmra.mxu0 %v724
    %v5005 = vpop.f32.mrf.mxu0
    %v5006 = vadd.f32 %v4993, %v5005
    %v5007 = vpop.f32.mrf.mxu0
    %5008 = vdwg.mxu0
    %5009 = vmatpush.bf16.xpose.msra.mxu0 0
    %5010 = vmatpush.bf16.xpose.msra.mxu0 0
    %5011 = vmatpush.bf16.xpose.msra.mxu0 0
    %5012 = vmatpush.bf16.xpose.msra.mxu0 0
    %5013 = vmatpush.bf16.xpose.msra.mxu0 %v3482
    %5014 = vmatpush.bf16.xpose.msra.mxu0 %v3306
    %5015 = vmatpush.bf16.xpose.msra.mxu0 %v3130
    %5016 = vmatpush.bf16.xpose.msra.mxu0 %v2954
    %5017 = vmatmul.bf16.gmra.mxu0 %v725
    %v5018 = vpop.f32.mrf.mxu0
    %v5019 = vadd.f32 %v5006, %v5018
    %v5020 = vpop.f32.mrf.mxu0
    %5021 = vdwg.mxu0
    %5022 = vmatpush.bf16.xpose.msra.mxu0 0
    %5023 = vmatpush.bf16.xpose.msra.mxu0 0
    %5024 = vmatpush.bf16.xpose.msra.mxu0 0
    %5025 = vmatpush.bf16.xpose.msra.mxu0 0
    %5026 = vmatpush.bf16.xpose.msra.mxu0 %v3483
    %5027 = vmatpush.bf16.xpose.msra.mxu0 %v3307
    %5028 = vmatpush.bf16.xpose.msra.mxu0 %v3131
    %5029 = vmatpush.bf16.xpose.msra.mxu0 %v2955
    %5030 = vmatmul.bf16.gmra.mxu0 %v726
    %v5031 = vpop.f32.mrf.mxu0
    %v5032 = vadd.f32 %v5019, %v5031
    %v5033 = vpop.f32.mrf.mxu0
    %5034 = vdwg.mxu0
    %5035 = vmatpush.bf16.xpose.msra.mxu0 0
    %5036 = vmatpush.bf16.xpose.msra.mxu0 0
    %5037 = vmatpush.bf16.xpose.msra.mxu0 0
    %5038 = vmatpush.bf16.xpose.msra.mxu0 0
    %5039 = vmatpush.bf16.xpose.msra.mxu0 %v3484
    %5040 = vmatpush.bf16.xpose.msra.mxu0 %v3308
    %5041 = vmatpush.bf16.xpose.msra.mxu0 %v3132
    %5042 = vmatpush.bf16.xpose.msra.mxu0 %v2956
    %5043 = vmatmul.bf16.gmra.mxu0 %v727
    %v5044 = vpop.f32.mrf.mxu0
    %v5045 = vadd.f32 %v5032, %v5044
    %v5046 = vpop.f32.mrf.mxu0
    %5047 = vdwg.mxu0
    %5048 = vmatpush.bf16.xpose.msra.mxu0 0
    %5049 = vmatpush.bf16.xpose.msra.mxu0 0
    %5050 = vmatpush.bf16.xpose.msra.mxu0 0
    %5051 = vmatpush.bf16.xpose.msra.mxu0 0
    %5052 = vmatpush.bf16.xpose.msra.mxu0 %v3485
    %5053 = vmatpush.bf16.xpose.msra.mxu0 %v3309
    %5054 = vmatpush.bf16.xpose.msra.mxu0 %v3133
    %5055 = vmatpush.bf16.xpose.msra.mxu0 %v2957
    %5056 = vmatmul.bf16.gmra.mxu0 %v730
    %v5057 = vpop.f32.mrf.mxu0
    %v5058 = vadd.f32 %v5045, %v5057
    %v5059 = vpop.f32.mrf.mxu0
    %5060 = vdwg.mxu0
    %5061 = vmatpush.bf16.xpose.msra.mxu0 0
    %5062 = vmatpush.bf16.xpose.msra.mxu0 0
    %5063 = vmatpush.bf16.xpose.msra.mxu0 0
    %5064 = vmatpush.bf16.xpose.msra.mxu0 0
    %5065 = vmatpush.bf16.xpose.msra.mxu0 %v3486
    %5066 = vmatpush.bf16.xpose.msra.mxu0 %v3310
    %5067 = vmatpush.bf16.xpose.msra.mxu0 %v3134
    %5068 = vmatpush.bf16.xpose.msra.mxu0 %v2958
    %5069 = vmatmul.bf16.gmra.mxu0 %v731
    %v5070 = vpop.f32.mrf.mxu0
    %v5071 = vadd.f32 %v5058, %v5070
    %v5072 = vpop.f32.mrf.mxu0
    %5073 = vdwg.mxu0
    %5074 = vmatpush.bf16.xpose.msra.mxu0 0
    %5075 = vmatpush.bf16.xpose.msra.mxu0 0
    %5076 = vmatpush.bf16.xpose.msra.mxu0 0
    %5077 = vmatpush.bf16.xpose.msra.mxu0 0
    %5078 = vmatpush.bf16.xpose.msra.mxu0 %v3487
    %5079 = vmatpush.bf16.xpose.msra.mxu0 %v3311
    %5080 = vmatpush.bf16.xpose.msra.mxu0 %v3135
    %5081 = vmatpush.bf16.xpose.msra.mxu0 %v2959
    %5082 = vmatmul.bf16.gmra.mxu0 %v732
    %v5083 = vpop.f32.mrf.mxu0
    %v5084 = vadd.f32 %v5071, %v5083
    %v5085 = vpop.f32.mrf.mxu0
    %5086 = vdwg.mxu0
    %5087 = vmatpush.bf16.xpose.msra.mxu0 0
    %5088 = vmatpush.bf16.xpose.msra.mxu0 0
    %5089 = vmatpush.bf16.xpose.msra.mxu0 0
    %5090 = vmatpush.bf16.xpose.msra.mxu0 0
    %5091 = vmatpush.bf16.xpose.msra.mxu0 %v3488
    %5092 = vmatpush.bf16.xpose.msra.mxu0 %v3312
    %5093 = vmatpush.bf16.xpose.msra.mxu0 %v3136
    %5094 = vmatpush.bf16.xpose.msra.mxu0 %v2960
    %5095 = vmatmul.bf16.gmra.mxu0 %v733
    %v5096 = vpop.f32.mrf.mxu0
    %v5097 = vadd.f32 %v5084, %v5096
    %v5098 = vpop.f32.mrf.mxu0
    %5099 = vdwg.mxu0
    %5100 = vmatpush.bf16.xpose.msra.mxu0 0
    %5101 = vmatpush.bf16.xpose.msra.mxu0 0
    %5102 = vmatpush.bf16.xpose.msra.mxu0 0
    %5103 = vmatpush.bf16.xpose.msra.mxu0 0
    %5104 = vmatpush.bf16.xpose.msra.mxu0 %v3489
    %5105 = vmatpush.bf16.xpose.msra.mxu0 %v3313
    %5106 = vmatpush.bf16.xpose.msra.mxu0 %v3137
    %5107 = vmatpush.bf16.xpose.msra.mxu0 %v2961
    %5108 = vmatmul.bf16.gmra.mxu0 %v734
    %v5109 = vpop.f32.mrf.mxu0
    %v5110 = vadd.f32 %v5097, %v5109
    %v5111 = vpop.f32.mrf.mxu0
    %5112 = vdwg.mxu0
    %5113 = vmatpush.bf16.xpose.msra.mxu0 0
    %5114 = vmatpush.bf16.xpose.msra.mxu0 0
    %5115 = vmatpush.bf16.xpose.msra.mxu0 0
    %5116 = vmatpush.bf16.xpose.msra.mxu0 0
    %5117 = vmatpush.bf16.xpose.msra.mxu0 %v3490
    %5118 = vmatpush.bf16.xpose.msra.mxu0 %v3314
    %5119 = vmatpush.bf16.xpose.msra.mxu0 %v3138
    %5120 = vmatpush.bf16.xpose.msra.mxu0 %v2962
    %5121 = vmatmul.bf16.gmra.mxu0 %v735
    %v5122 = vpop.f32.mrf.mxu0
    %v5123 = vadd.f32 %v5110, %v5122
    %v5124 = vpop.f32.mrf.mxu0
    %5125 = vdwg.mxu0
    %5126 = vmatpush.bf16.xpose.msra.mxu0 0
    %5127 = vmatpush.bf16.xpose.msra.mxu0 0
    %5128 = vmatpush.bf16.xpose.msra.mxu0 0
    %5129 = vmatpush.bf16.xpose.msra.mxu0 0
    %5130 = vmatpush.bf16.xpose.msra.mxu0 %v3491
    %5131 = vmatpush.bf16.xpose.msra.mxu0 %v3315
    %5132 = vmatpush.bf16.xpose.msra.mxu0 %v3139
    %5133 = vmatpush.bf16.xpose.msra.mxu0 %v2963
    %5134 = vmatmul.bf16.gmra.mxu0 %v736
    %v5135 = vpop.f32.mrf.mxu0
    %v5136 = vadd.f32 %v5123, %v5135
    %v5137 = vpop.f32.mrf.mxu0
    %5138 = vdwg.mxu0
    %5139 = vmatpush.bf16.xpose.msra.mxu0 0
    %5140 = vmatpush.bf16.xpose.msra.mxu0 0
    %5141 = vmatpush.bf16.xpose.msra.mxu0 0
    %5142 = vmatpush.bf16.xpose.msra.mxu0 0
    %5143 = vmatpush.bf16.xpose.msra.mxu0 %v3492
    %5144 = vmatpush.bf16.xpose.msra.mxu0 %v3316
    %5145 = vmatpush.bf16.xpose.msra.mxu0 %v3140
    %5146 = vmatpush.bf16.xpose.msra.mxu0 %v2964
    %5147 = vmatmul.bf16.gmra.mxu0 %v737
    %v5148 = vpop.f32.mrf.mxu0
    %v5149 = vadd.f32 %v5136, %v5148
    %v5150 = vpop.f32.mrf.mxu0
    %5151 = vdwg.mxu0
    %5152 = vmatpush.bf16.xpose.msra.mxu0 0
    %5153 = vmatpush.bf16.xpose.msra.mxu0 0
    %5154 = vmatpush.bf16.xpose.msra.mxu0 0
    %5155 = vmatpush.bf16.xpose.msra.mxu0 0
    %5156 = vmatpush.bf16.xpose.msra.mxu0 %v3493
    %5157 = vmatpush.bf16.xpose.msra.mxu0 %v3317
    %5158 = vmatpush.bf16.xpose.msra.mxu0 %v3141
    %5159 = vmatpush.bf16.xpose.msra.mxu0 %v2965
    %5160 = vmatmul.bf16.gmra.mxu0 %v740
    %v5161 = vpop.f32.mrf.mxu0
    %v5162 = vadd.f32 %v5149, %v5161
    %v5163 = vpop.f32.mrf.mxu0
    %5164 = vdwg.mxu0
    %5165 = vmatpush.bf16.xpose.msra.mxu0 0
    %5166 = vmatpush.bf16.xpose.msra.mxu0 0
    %5167 = vmatpush.bf16.xpose.msra.mxu0 0
    %5168 = vmatpush.bf16.xpose.msra.mxu0 0
    %5169 = vmatpush.bf16.xpose.msra.mxu0 %v3494
    %5170 = vmatpush.bf16.xpose.msra.mxu0 %v3318
    %5171 = vmatpush.bf16.xpose.msra.mxu0 %v3142
    %5172 = vmatpush.bf16.xpose.msra.mxu0 %v2966
    %5173 = vmatmul.bf16.gmra.mxu0 %v741
    %v5174 = vpop.f32.mrf.mxu0
    %v5175 = vadd.f32 %v5162, %v5174
    %v5176 = vpop.f32.mrf.mxu0
    %5177 = vdwg.mxu0
    %5178 = vmatpush.bf16.xpose.msra.mxu0 0
    %5179 = vmatpush.bf16.xpose.msra.mxu0 0
    %5180 = vmatpush.bf16.xpose.msra.mxu0 0
    %5181 = vmatpush.bf16.xpose.msra.mxu0 0
    %5182 = vmatpush.bf16.xpose.msra.mxu0 %v3495
    %5183 = vmatpush.bf16.xpose.msra.mxu0 %v3319
    %5184 = vmatpush.bf16.xpose.msra.mxu0 %v3143
    %5185 = vmatpush.bf16.xpose.msra.mxu0 %v2967
    %5186 = vmatmul.bf16.gmra.mxu0 %v742
    %v5187 = vpop.f32.mrf.mxu0
    %v5188 = vadd.f32 %v5175, %v5187
    %v5189 = vpop.f32.mrf.mxu0
    %5190 = vdwg.mxu0
    %5191 = vmatpush.bf16.xpose.msra.mxu0 0
    %5192 = vmatpush.bf16.xpose.msra.mxu0 0
    %5193 = vmatpush.bf16.xpose.msra.mxu0 0
    %5194 = vmatpush.bf16.xpose.msra.mxu0 0
    %5195 = vmatpush.bf16.xpose.msra.mxu0 %v3496
    %5196 = vmatpush.bf16.xpose.msra.mxu0 %v3320
    %5197 = vmatpush.bf16.xpose.msra.mxu0 %v3144
    %5198 = vmatpush.bf16.xpose.msra.mxu0 %v2968
    %5199 = vmatmul.bf16.gmra.mxu0 %v743
    %v5200 = vpop.f32.mrf.mxu0
    %v5201 = vadd.f32 %v5188, %v5200
    %v5202 = vpop.f32.mrf.mxu0
    %5203 = vdwg.mxu0
    %5204 = vmatpush.bf16.xpose.msra.mxu0 0
    %5205 = vmatpush.bf16.xpose.msra.mxu0 0
    %5206 = vmatpush.bf16.xpose.msra.mxu0 0
    %5207 = vmatpush.bf16.xpose.msra.mxu0 0
    %5208 = vmatpush.bf16.xpose.msra.mxu0 %v3497
    %5209 = vmatpush.bf16.xpose.msra.mxu0 %v3321
    %5210 = vmatpush.bf16.xpose.msra.mxu0 %v3145
    %5211 = vmatpush.bf16.xpose.msra.mxu0 %v2969
    %5212 = vmatmul.bf16.gmra.mxu0 %v744
    %v5213 = vpop.f32.mrf.mxu0
    %v5214 = vadd.f32 %v5201, %v5213
    %v5215 = vpop.f32.mrf.mxu0
    %5216 = vdwg.mxu0
    %5217 = vmatpush.bf16.xpose.msra.mxu0 0
    %5218 = vmatpush.bf16.xpose.msra.mxu0 0
    %5219 = vmatpush.bf16.xpose.msra.mxu0 0
    %5220 = vmatpush.bf16.xpose.msra.mxu0 0
    %5221 = vmatpush.bf16.xpose.msra.mxu0 %v3498
    %5222 = vmatpush.bf16.xpose.msra.mxu0 %v3322
    %5223 = vmatpush.bf16.xpose.msra.mxu0 %v3146
    %5224 = vmatpush.bf16.xpose.msra.mxu0 %v2970
    %5225 = vmatmul.bf16.gmra.mxu0 %v745
    %v5226 = vpop.f32.mrf.mxu0
    %v5227 = vadd.f32 %v5214, %v5226
    %v5228 = vpop.f32.mrf.mxu0
    %5229 = vdwg.mxu0
    %5230 = vmatpush.bf16.xpose.msra.mxu0 0
    %5231 = vmatpush.bf16.xpose.msra.mxu0 0
    %5232 = vmatpush.bf16.xpose.msra.mxu0 0
    %5233 = vmatpush.bf16.xpose.msra.mxu0 0
    %5234 = vmatpush.bf16.xpose.msra.mxu0 %v3499
    %5235 = vmatpush.bf16.xpose.msra.mxu0 %v3323
    %5236 = vmatpush.bf16.xpose.msra.mxu0 %v3147
    %5237 = vmatpush.bf16.xpose.msra.mxu0 %v2971
    %5238 = vmatmul.bf16.gmra.mxu0 %v746
    %v5239 = vpop.f32.mrf.mxu0
    %v5240 = vadd.f32 %v5227, %v5239
    %v5241 = vpop.f32.mrf.mxu0
    %5242 = vdwg.mxu0
    %5243 = vmatpush.bf16.xpose.msra.mxu0 0
    %5244 = vmatpush.bf16.xpose.msra.mxu0 0
    %5245 = vmatpush.bf16.xpose.msra.mxu0 0
    %5246 = vmatpush.bf16.xpose.msra.mxu0 0
    %5247 = vmatpush.bf16.xpose.msra.mxu0 %v3500
    %5248 = vmatpush.bf16.xpose.msra.mxu0 %v3324
    %5249 = vmatpush.bf16.xpose.msra.mxu0 %v3148
    %5250 = vmatpush.bf16.xpose.msra.mxu0 %v2972
    %5251 = vmatmul.bf16.gmra.mxu0 %v747
    %v5252 = vpop.f32.mrf.mxu0
    %v5253 = vadd.f32 %v5240, %v5252
    %v5254 = vpop.f32.mrf.mxu0
    %5255 = vdwg.mxu0
    %5256 = vmatpush.bf16.xpose.msra.mxu0 0
    %5257 = vmatpush.bf16.xpose.msra.mxu0 0
    %5258 = vmatpush.bf16.xpose.msra.mxu0 0
    %5259 = vmatpush.bf16.xpose.msra.mxu0 0
    %5260 = vmatpush.bf16.xpose.msra.mxu0 %v3501
    %5261 = vmatpush.bf16.xpose.msra.mxu0 %v3325
    %5262 = vmatpush.bf16.xpose.msra.mxu0 %v3149
    %5263 = vmatpush.bf16.xpose.msra.mxu0 %v2973
    %5264 = vmatmul.bf16.gmra.mxu0 %v750
    %v5265 = vpop.f32.mrf.mxu0
    %v5266 = vadd.f32 %v5253, %v5265
    %v5267 = vpop.f32.mrf.mxu0
    %5268 = vdwg.mxu0
    %5269 = vmatpush.bf16.xpose.msra.mxu0 0
    %5270 = vmatpush.bf16.xpose.msra.mxu0 0
    %5271 = vmatpush.bf16.xpose.msra.mxu0 0
    %5272 = vmatpush.bf16.xpose.msra.mxu0 0
    %5273 = vmatpush.bf16.xpose.msra.mxu0 %v3502
    %5274 = vmatpush.bf16.xpose.msra.mxu0 %v3326
    %5275 = vmatpush.bf16.xpose.msra.mxu0 %v3150
    %5276 = vmatpush.bf16.xpose.msra.mxu0 %v2974
    %5277 = vmatmul.bf16.gmra.mxu0 %v751
    %v5278 = vpop.f32.mrf.mxu0
    %v5279 = vadd.f32 %v5266, %v5278
    %v5280 = vpop.f32.mrf.mxu0
    %5281 = vdwg.mxu0
    %5282 = vmatpush.bf16.xpose.msra.mxu0 0
    %5283 = vmatpush.bf16.xpose.msra.mxu0 0
    %5284 = vmatpush.bf16.xpose.msra.mxu0 0
    %5285 = vmatpush.bf16.xpose.msra.mxu0 0
    %5286 = vmatpush.bf16.xpose.msra.mxu0 %v3503
    %5287 = vmatpush.bf16.xpose.msra.mxu0 %v3327
    %5288 = vmatpush.bf16.xpose.msra.mxu0 %v3151
    %5289 = vmatpush.bf16.xpose.msra.mxu0 %v2975
    %5290 = vmatmul.bf16.gmra.mxu0 %v752
    %v5291 = vpop.f32.mrf.mxu0
    %v5292 = vadd.f32 %v5279, %v5291
    %v5293 = vpop.f32.mrf.mxu0
    %5294 = vdwg.mxu0
    %5295 = vmatpush.bf16.xpose.msra.mxu0 0
    %5296 = vmatpush.bf16.xpose.msra.mxu0 0
    %5297 = vmatpush.bf16.xpose.msra.mxu0 0
    %5298 = vmatpush.bf16.xpose.msra.mxu0 0
    %5299 = vmatpush.bf16.xpose.msra.mxu0 %v3504
    %5300 = vmatpush.bf16.xpose.msra.mxu0 %v3328
    %5301 = vmatpush.bf16.xpose.msra.mxu0 %v3152
    %5302 = vmatpush.bf16.xpose.msra.mxu0 %v2976
    %5303 = vmatmul.bf16.gmra.mxu0 %v753
    %v5304 = vpop.f32.mrf.mxu0
    %v5305 = vadd.f32 %v5292, %v5304
    %v5306 = vpop.f32.mrf.mxu0
    %5307 = vdwg.mxu0
    %5308 = vmatpush.bf16.xpose.msra.mxu0 0
    %5309 = vmatpush.bf16.xpose.msra.mxu0 0
    %5310 = vmatpush.bf16.xpose.msra.mxu0 0
    %5311 = vmatpush.bf16.xpose.msra.mxu0 0
    %5312 = vmatpush.bf16.xpose.msra.mxu0 %v3505
    %5313 = vmatpush.bf16.xpose.msra.mxu0 %v3329
    %5314 = vmatpush.bf16.xpose.msra.mxu0 %v3153
    %5315 = vmatpush.bf16.xpose.msra.mxu0 %v2977
    %5316 = vmatmul.bf16.gmra.mxu0 %v754
    %v5317 = vpop.f32.mrf.mxu0
    %v5318 = vadd.f32 %v5305, %v5317
    %v5319 = vpop.f32.mrf.mxu0
    %5320 = vdwg.mxu0
    %5321 = vmatpush.bf16.xpose.msra.mxu0 0
    %5322 = vmatpush.bf16.xpose.msra.mxu0 0
    %5323 = vmatpush.bf16.xpose.msra.mxu0 0
    %5324 = vmatpush.bf16.xpose.msra.mxu0 0
    %5325 = vmatpush.bf16.xpose.msra.mxu0 %v3506
    %5326 = vmatpush.bf16.xpose.msra.mxu0 %v3330
    %5327 = vmatpush.bf16.xpose.msra.mxu0 %v3154
    %5328 = vmatpush.bf16.xpose.msra.mxu0 %v2978
    %5329 = vmatmul.bf16.gmra.mxu0 %v755
    %v5330 = vpop.f32.mrf.mxu0
    %v5331 = vadd.f32 %v5318, %v5330
    %v5332 = vpop.f32.mrf.mxu0
    %5333 = vdwg.mxu0
    %5334 = vmatpush.bf16.xpose.msra.mxu0 0
    %5335 = vmatpush.bf16.xpose.msra.mxu0 0
    %5336 = vmatpush.bf16.xpose.msra.mxu0 0
    %5337 = vmatpush.bf16.xpose.msra.mxu0 0
    %5338 = vmatpush.bf16.xpose.msra.mxu0 %v3507
    %5339 = vmatpush.bf16.xpose.msra.mxu0 %v3331
    %5340 = vmatpush.bf16.xpose.msra.mxu0 %v3155
    %5341 = vmatpush.bf16.xpose.msra.mxu0 %v2979
    %5342 = vmatmul.bf16.gmra.mxu0 %v756
    %v5343 = vpop.f32.mrf.mxu0
    %v5344 = vadd.f32 %v5331, %v5343
    %v5345 = vpop.f32.mrf.mxu0
    %5346 = vdwg.mxu0
    %5347 = vmatpush.bf16.xpose.msra.mxu0 0
    %5348 = vmatpush.bf16.xpose.msra.mxu0 0
    %5349 = vmatpush.bf16.xpose.msra.mxu0 0
    %5350 = vmatpush.bf16.xpose.msra.mxu0 0
    %5351 = vmatpush.bf16.xpose.msra.mxu0 %v3508
    %5352 = vmatpush.bf16.xpose.msra.mxu0 %v3332
    %5353 = vmatpush.bf16.xpose.msra.mxu0 %v3156
    %5354 = vmatpush.bf16.xpose.msra.mxu0 %v2980
    %5355 = vmatmul.bf16.gmra.mxu0 %v757
    %v5356 = vpop.f32.mrf.mxu0
    %v5357 = vadd.f32 %v5344, %v5356
    %v5358 = vpop.f32.mrf.mxu0
    %5359 = vdwg.mxu0
    %5360 = vmatpush.bf16.xpose.msra.mxu0 0
    %5361 = vmatpush.bf16.xpose.msra.mxu0 0
    %5362 = vmatpush.bf16.xpose.msra.mxu0 0
    %5363 = vmatpush.bf16.xpose.msra.mxu0 0
    %5364 = vmatpush.bf16.xpose.msra.mxu0 %v3509
    %5365 = vmatpush.bf16.xpose.msra.mxu0 %v3333
    %5366 = vmatpush.bf16.xpose.msra.mxu0 %v3157
    %5367 = vmatpush.bf16.xpose.msra.mxu0 %v2981
    %5368 = vmatmul.bf16.gmra.mxu0 %v760
    %v5369 = vpop.f32.mrf.mxu0
    %v5370 = vadd.f32 %v5357, %v5369
    %v5371 = vpop.f32.mrf.mxu0
    %5372 = vdwg.mxu0
    %5373 = vmatpush.bf16.xpose.msra.mxu0 0
    %5374 = vmatpush.bf16.xpose.msra.mxu0 0
    %5375 = vmatpush.bf16.xpose.msra.mxu0 0
    %5376 = vmatpush.bf16.xpose.msra.mxu0 0
    %5377 = vmatpush.bf16.xpose.msra.mxu0 %v3510
    %5378 = vmatpush.bf16.xpose.msra.mxu0 %v3334
    %5379 = vmatpush.bf16.xpose.msra.mxu0 %v3158
    %5380 = vmatpush.bf16.xpose.msra.mxu0 %v2982
    %5381 = vmatmul.bf16.gmra.mxu0 %v761
    %v5382 = vpop.f32.mrf.mxu0
    %v5383 = vadd.f32 %v5370, %v5382
    %v5384 = vpop.f32.mrf.mxu0
    %5385 = vdwg.mxu0
    %5386 = vmatpush.bf16.xpose.msra.mxu0 0
    %5387 = vmatpush.bf16.xpose.msra.mxu0 0
    %5388 = vmatpush.bf16.xpose.msra.mxu0 0
    %5389 = vmatpush.bf16.xpose.msra.mxu0 0
    %5390 = vmatpush.bf16.xpose.msra.mxu0 %v3511
    %5391 = vmatpush.bf16.xpose.msra.mxu0 %v3335
    %5392 = vmatpush.bf16.xpose.msra.mxu0 %v3159
    %5393 = vmatpush.bf16.xpose.msra.mxu0 %v2983
    %5394 = vmatmul.bf16.gmra.mxu0 %v762
    %v5395 = vpop.f32.mrf.mxu0
    %v5396 = vadd.f32 %v5383, %v5395
    %v5397 = vpop.f32.mrf.mxu0
    %5398 = vdwg.mxu0
    %5399 = vmatpush.bf16.xpose.msra.mxu0 0
    %5400 = vmatpush.bf16.xpose.msra.mxu0 0
    %5401 = vmatpush.bf16.xpose.msra.mxu0 0
    %5402 = vmatpush.bf16.xpose.msra.mxu0 0
    %5403 = vmatpush.bf16.xpose.msra.mxu0 %v3512
    %5404 = vmatpush.bf16.xpose.msra.mxu0 %v3336
    %5405 = vmatpush.bf16.xpose.msra.mxu0 %v3160
    %5406 = vmatpush.bf16.xpose.msra.mxu0 %v2984
    %5407 = vmatmul.bf16.gmra.mxu0 %v763
    %v5408 = vpop.f32.mrf.mxu0
    %v5409 = vadd.f32 %v5396, %v5408
    %v5410 = vpop.f32.mrf.mxu0
    %5411 = vdwg.mxu0
    %5412 = vmatpush.bf16.xpose.msra.mxu0 0
    %5413 = vmatpush.bf16.xpose.msra.mxu0 0
    %5414 = vmatpush.bf16.xpose.msra.mxu0 0
    %5415 = vmatpush.bf16.xpose.msra.mxu0 0
    %5416 = vmatpush.bf16.xpose.msra.mxu0 %v3513
    %5417 = vmatpush.bf16.xpose.msra.mxu0 %v3337
    %5418 = vmatpush.bf16.xpose.msra.mxu0 %v3161
    %5419 = vmatpush.bf16.xpose.msra.mxu0 %v2985
    %5420 = vmatmul.bf16.gmra.mxu0 %v764
    %v5421 = vpop.f32.mrf.mxu0
    %v5422 = vadd.f32 %v5409, %v5421
    %v5423 = vpop.f32.mrf.mxu0
    %5424 = vdwg.mxu0
    %5425 = vmatpush.bf16.xpose.msra.mxu0 0
    %5426 = vmatpush.bf16.xpose.msra.mxu0 0
    %5427 = vmatpush.bf16.xpose.msra.mxu0 0
    %5428 = vmatpush.bf16.xpose.msra.mxu0 0
    %5429 = vmatpush.bf16.xpose.msra.mxu0 %v3514
    %5430 = vmatpush.bf16.xpose.msra.mxu0 %v3338
    %5431 = vmatpush.bf16.xpose.msra.mxu0 %v3162
    %5432 = vmatpush.bf16.xpose.msra.mxu0 %v2986
    %5433 = vmatmul.bf16.gmra.mxu0 %v765
    %v5434 = vpop.f32.mrf.mxu0
    %v5435 = vadd.f32 %v5422, %v5434
    %v5436 = vpop.f32.mrf.mxu0
    %5437 = vdwg.mxu0
    %5438 = vmatpush.bf16.xpose.msra.mxu0 0
    %5439 = vmatpush.bf16.xpose.msra.mxu0 0
    %5440 = vmatpush.bf16.xpose.msra.mxu0 0
    %5441 = vmatpush.bf16.xpose.msra.mxu0 0
    %5442 = vmatpush.bf16.xpose.msra.mxu0 %v3515
    %5443 = vmatpush.bf16.xpose.msra.mxu0 %v3339
    %5444 = vmatpush.bf16.xpose.msra.mxu0 %v3163
    %5445 = vmatpush.bf16.xpose.msra.mxu0 %v2987
    %5446 = vmatmul.bf16.gmra.mxu0 %v766
    %v5447 = vpop.f32.mrf.mxu0
    %v5448 = vadd.f32 %v5435, %v5447
    %v5449 = vpop.f32.mrf.mxu0
    %5450 = vdwg.mxu0
    %5451 = vmatpush.bf16.xpose.msra.mxu0 0
    %5452 = vmatpush.bf16.xpose.msra.mxu0 0
    %5453 = vmatpush.bf16.xpose.msra.mxu0 0
    %5454 = vmatpush.bf16.xpose.msra.mxu0 0
    %5455 = vmatpush.bf16.xpose.msra.mxu0 %v3516
    %5456 = vmatpush.bf16.xpose.msra.mxu0 %v3340
    %5457 = vmatpush.bf16.xpose.msra.mxu0 %v3164
    %5458 = vmatpush.bf16.xpose.msra.mxu0 %v2988
    %5459 = vmatmul.bf16.gmra.mxu0 %v767
    %v5460 = vpop.f32.mrf.mxu0
    %v5461 = vadd.f32 %v5448, %v5460
    %v5462 = vpop.f32.mrf.mxu0
    %5463 = vdwg.mxu0
    %5464 = vmatpush.bf16.xpose.msra.mxu0 0
    %5465 = vmatpush.bf16.xpose.msra.mxu0 0
    %5466 = vmatpush.bf16.xpose.msra.mxu0 0
    %5467 = vmatpush.bf16.xpose.msra.mxu0 0
    %5468 = vmatpush.bf16.xpose.msra.mxu0 %v3517
    %5469 = vmatpush.bf16.xpose.msra.mxu0 %v3341
    %5470 = vmatpush.bf16.xpose.msra.mxu0 %v3165
    %5471 = vmatpush.bf16.xpose.msra.mxu0 %v2989
    %5472 = vmatmul.bf16.gmra.mxu0 %v770
    %v5473 = vpop.f32.mrf.mxu0
    %v5474 = vadd.f32 %v5461, %v5473
    %v5475 = vpop.f32.mrf.mxu0
    %5476 = vdwg.mxu0
    %5477 = vmatpush.bf16.xpose.msra.mxu0 0
    %5478 = vmatpush.bf16.xpose.msra.mxu0 0
    %5479 = vmatpush.bf16.xpose.msra.mxu0 0
    %5480 = vmatpush.bf16.xpose.msra.mxu0 0
    %5481 = vmatpush.bf16.xpose.msra.mxu0 %v3518
    %5482 = vmatpush.bf16.xpose.msra.mxu0 %v3342
    %5483 = vmatpush.bf16.xpose.msra.mxu0 %v3166
    %5484 = vmatpush.bf16.xpose.msra.mxu0 %v2990
    %5485 = vmatmul.bf16.gmra.mxu0 %v771
    %v5486 = vpop.f32.mrf.mxu0
    %v5487 = vadd.f32 %v5474, %v5486
    %v5488 = vpop.f32.mrf.mxu0
    %5489 = vdwg.mxu0
    %5490 = vmatpush.bf16.xpose.msra.mxu0 0
    %5491 = vmatpush.bf16.xpose.msra.mxu0 0
    %5492 = vmatpush.bf16.xpose.msra.mxu0 0
    %5493 = vmatpush.bf16.xpose.msra.mxu0 0
    %5494 = vmatpush.bf16.xpose.msra.mxu0 %v3519
    %5495 = vmatpush.bf16.xpose.msra.mxu0 %v3343
    %5496 = vmatpush.bf16.xpose.msra.mxu0 %v3167
    %5497 = vmatpush.bf16.xpose.msra.mxu0 %v2991
    %5498 = vmatmul.bf16.gmra.mxu0 %v772
    %v5499 = vpop.f32.mrf.mxu0
    %v5500 = vadd.f32 %v5487, %v5499
    %v5501 = vpop.f32.mrf.mxu0
    %5502 = vdwg.mxu0
    %5503 = vmatpush.bf16.xpose.msra.mxu0 0
    %5504 = vmatpush.bf16.xpose.msra.mxu0 0
    %5505 = vmatpush.bf16.xpose.msra.mxu0 0
    %5506 = vmatpush.bf16.xpose.msra.mxu0 0
    %5507 = vmatpush.bf16.xpose.msra.mxu0 %v3520
    %5508 = vmatpush.bf16.xpose.msra.mxu0 %v3344
    %5509 = vmatpush.bf16.xpose.msra.mxu0 %v3168
    %5510 = vmatpush.bf16.xpose.msra.mxu0 %v2992
    %5511 = vmatmul.bf16.gmra.mxu0 %v773
    %v5512 = vpop.f32.mrf.mxu0
    %v5513 = vadd.f32 %v5500, %v5512
    %v5514 = vpop.f32.mrf.mxu0
    %5515 = vdwg.mxu0
    %5516 = vmatpush.bf16.xpose.msra.mxu0 0
    %5517 = vmatpush.bf16.xpose.msra.mxu0 0
    %5518 = vmatpush.bf16.xpose.msra.mxu0 0
    %5519 = vmatpush.bf16.xpose.msra.mxu0 0
    %5520 = vmatpush.bf16.xpose.msra.mxu0 %v3521
    %5521 = vmatpush.bf16.xpose.msra.mxu0 %v3345
    %5522 = vmatpush.bf16.xpose.msra.mxu0 %v3169
    %5523 = vmatpush.bf16.xpose.msra.mxu0 %v2993
    %5524 = vmatmul.bf16.gmra.mxu0 %v774
    %v5525 = vpop.f32.mrf.mxu0
    %v5526 = vadd.f32 %v5513, %v5525
    %v5527 = vpop.f32.mrf.mxu0
    %5528 = vdwg.mxu0
    %5529 = vmatpush.bf16.xpose.msra.mxu0 0
    %5530 = vmatpush.bf16.xpose.msra.mxu0 0
    %5531 = vmatpush.bf16.xpose.msra.mxu0 0
    %5532 = vmatpush.bf16.xpose.msra.mxu0 0
    %5533 = vmatpush.bf16.xpose.msra.mxu0 %v3522
    %5534 = vmatpush.bf16.xpose.msra.mxu0 %v3346
    %5535 = vmatpush.bf16.xpose.msra.mxu0 %v3170
    %5536 = vmatpush.bf16.xpose.msra.mxu0 %v2994
    %5537 = vmatmul.bf16.gmra.mxu0 %v775
    %v5538 = vpop.f32.mrf.mxu0
    %v5539 = vadd.f32 %v5526, %v5538
    %v5540 = vpop.f32.mrf.mxu0
    %5541 = vdwg.mxu0
    %5542 = vmatpush.bf16.xpose.msra.mxu0 0
    %5543 = vmatpush.bf16.xpose.msra.mxu0 0
    %5544 = vmatpush.bf16.xpose.msra.mxu0 0
    %5545 = vmatpush.bf16.xpose.msra.mxu0 0
    %5546 = vmatpush.bf16.xpose.msra.mxu0 %v3523
    %5547 = vmatpush.bf16.xpose.msra.mxu0 %v3347
    %5548 = vmatpush.bf16.xpose.msra.mxu0 %v3171
    %5549 = vmatpush.bf16.xpose.msra.mxu0 %v2995
    %5550 = vmatmul.bf16.gmra.mxu0 %v776
    %v5551 = vpop.f32.mrf.mxu0
    %v5552 = vadd.f32 %v5539, %v5551
    %v5553 = vpop.f32.mrf.mxu0
    %5554 = vdwg.mxu0
    %5555 = vmatpush.bf16.xpose.msra.mxu0 0
    %5556 = vmatpush.bf16.xpose.msra.mxu0 0
    %5557 = vmatpush.bf16.xpose.msra.mxu0 0
    %5558 = vmatpush.bf16.xpose.msra.mxu0 0
    %5559 = vmatpush.bf16.xpose.msra.mxu0 %v3524
    %5560 = vmatpush.bf16.xpose.msra.mxu0 %v3348
    %5561 = vmatpush.bf16.xpose.msra.mxu0 %v3172
    %5562 = vmatpush.bf16.xpose.msra.mxu0 %v2996
    %5563 = vmatmul.bf16.gmra.mxu0 %v777
    %v5564 = vpop.f32.mrf.mxu0
    %v5565 = vadd.f32 %v5552, %v5564
    %v5566 = vpop.f32.mrf.mxu0
    %5567 = vdwg.mxu0
    %5568 = vmatpush.bf16.xpose.msra.mxu0 0
    %5569 = vmatpush.bf16.xpose.msra.mxu0 0
    %5570 = vmatpush.bf16.xpose.msra.mxu0 0
    %5571 = vmatpush.bf16.xpose.msra.mxu0 0
    %5572 = vmatpush.bf16.xpose.msra.mxu0 %v3525
    %5573 = vmatpush.bf16.xpose.msra.mxu0 %v3349
    %5574 = vmatpush.bf16.xpose.msra.mxu0 %v3173
    %5575 = vmatpush.bf16.xpose.msra.mxu0 %v2997
    %5576 = vmatmul.bf16.gmra.mxu0 %v780
    %v5577 = vpop.f32.mrf.mxu0
    %v5578 = vadd.f32 %v5565, %v5577
    %v5579 = vpop.f32.mrf.mxu0
    %5580 = vdwg.mxu0
    %5581 = vmatpush.bf16.xpose.msra.mxu0 0
    %5582 = vmatpush.bf16.xpose.msra.mxu0 0
    %5583 = vmatpush.bf16.xpose.msra.mxu0 0
    %5584 = vmatpush.bf16.xpose.msra.mxu0 0
    %5585 = vmatpush.bf16.xpose.msra.mxu0 %v3526
    %5586 = vmatpush.bf16.xpose.msra.mxu0 %v3350
    %5587 = vmatpush.bf16.xpose.msra.mxu0 %v3174
    %5588 = vmatpush.bf16.xpose.msra.mxu0 %v2998
    %5589 = vmatmul.bf16.gmra.mxu0 %v781
    %v5590 = vpop.f32.mrf.mxu0
    %v5591 = vadd.f32 %v5578, %v5590
    %v5592 = vpop.f32.mrf.mxu0
    %5593 = vdwg.mxu0
    %5594 = vmatpush.bf16.xpose.msra.mxu0 0
    %5595 = vmatpush.bf16.xpose.msra.mxu0 0
    %5596 = vmatpush.bf16.xpose.msra.mxu0 0
    %5597 = vmatpush.bf16.xpose.msra.mxu0 0
    %5598 = vmatpush.bf16.xpose.msra.mxu0 %v3527
    %5599 = vmatpush.bf16.xpose.msra.mxu0 %v3351
    %5600 = vmatpush.bf16.xpose.msra.mxu0 %v3175
    %5601 = vmatpush.bf16.xpose.msra.mxu0 %v2999
    %5602 = vmatmul.bf16.gmra.mxu0 %v782
    %v5603 = vpop.f32.mrf.mxu0
    %v5604 = vadd.f32 %v5591, %v5603
    %v5605 = vpop.f32.mrf.mxu0
    %5606 = vdwg.mxu0
    %5607 = vmatpush.bf16.xpose.msra.mxu0 0
    %5608 = vmatpush.bf16.xpose.msra.mxu0 0
    %5609 = vmatpush.bf16.xpose.msra.mxu0 0
    %5610 = vmatpush.bf16.xpose.msra.mxu0 0
    %5611 = vmatpush.bf16.xpose.msra.mxu0 %v3528
    %5612 = vmatpush.bf16.xpose.msra.mxu0 %v3352
    %5613 = vmatpush.bf16.xpose.msra.mxu0 %v3176
    %5614 = vmatpush.bf16.xpose.msra.mxu0 %v3000
    %5615 = vmatmul.bf16.gmra.mxu0 %v783
    %v5616 = vpop.f32.mrf.mxu0
    %v5617 = vadd.f32 %v5604, %v5616
    %v5618 = vpop.f32.mrf.mxu0
    %5619 = vdwg.mxu0
    %5620 = vmatpush.bf16.xpose.msra.mxu0 0
    %5621 = vmatpush.bf16.xpose.msra.mxu0 0
    %5622 = vmatpush.bf16.xpose.msra.mxu0 0
    %5623 = vmatpush.bf16.xpose.msra.mxu0 0
    %5624 = vmatpush.bf16.xpose.msra.mxu0 %v3529
    %5625 = vmatpush.bf16.xpose.msra.mxu0 %v3353
    %5626 = vmatpush.bf16.xpose.msra.mxu0 %v3177
    %5627 = vmatpush.bf16.xpose.msra.mxu0 %v3001
    %5628 = vmatmul.bf16.gmra.mxu0 %v784
    %v5629 = vpop.f32.mrf.mxu0
    %v5630 = vadd.f32 %v5617, %v5629
    %v5631 = vpop.f32.mrf.mxu0
    %5632 = vdwg.mxu0
    %5633 = vmatpush.bf16.xpose.msra.mxu0 0
    %5634 = vmatpush.bf16.xpose.msra.mxu0 0
    %5635 = vmatpush.bf16.xpose.msra.mxu0 0
    %5636 = vmatpush.bf16.xpose.msra.mxu0 0
    %5637 = vmatpush.bf16.xpose.msra.mxu0 %v3530
    %5638 = vmatpush.bf16.xpose.msra.mxu0 %v3354
    %5639 = vmatpush.bf16.xpose.msra.mxu0 %v3178
    %5640 = vmatpush.bf16.xpose.msra.mxu0 %v3002
    %5641 = vmatmul.bf16.gmra.mxu0 %v785
    %v5642 = vpop.f32.mrf.mxu0
    %v5643 = vadd.f32 %v5630, %v5642
    %v5644 = vpop.f32.mrf.mxu0
    %5645 = vdwg.mxu0
    %5646 = vmatpush.bf16.xpose.msra.mxu0 0
    %5647 = vmatpush.bf16.xpose.msra.mxu0 0
    %5648 = vmatpush.bf16.xpose.msra.mxu0 0
    %5649 = vmatpush.bf16.xpose.msra.mxu0 0
    %5650 = vmatpush.bf16.xpose.msra.mxu0 %v3531
    %5651 = vmatpush.bf16.xpose.msra.mxu0 %v3355
    %5652 = vmatpush.bf16.xpose.msra.mxu0 %v3179
    %5653 = vmatpush.bf16.xpose.msra.mxu0 %v3003
    %5654 = vmatmul.bf16.gmra.mxu0 %v786
    %v5655 = vpop.f32.mrf.mxu0
    %v5656 = vadd.f32 %v5643, %v5655
    %v5657 = vpop.f32.mrf.mxu0
    %5658 = vdwg.mxu0
    %5659 = vmatpush.bf16.xpose.msra.mxu0 0
    %5660 = vmatpush.bf16.xpose.msra.mxu0 0
    %5661 = vmatpush.bf16.xpose.msra.mxu0 0
    %5662 = vmatpush.bf16.xpose.msra.mxu0 0
    %5663 = vmatpush.bf16.xpose.msra.mxu0 %v3532
    %5664 = vmatpush.bf16.xpose.msra.mxu0 %v3356
    %5665 = vmatpush.bf16.xpose.msra.mxu0 %v3180
    %5666 = vmatpush.bf16.xpose.msra.mxu0 %v3004
    %5667 = vmatmul.bf16.gmra.mxu0 %v787
    %v5668 = vpop.f32.mrf.mxu0
    %v5669 = vadd.f32 %v5656, %v5668
    %v5670 = vpop.f32.mrf.mxu0
    %5671 = vdwg.mxu0
    %5672 = vmatpush.bf16.xpose.msra.mxu0 0
    %5673 = vmatpush.bf16.xpose.msra.mxu0 0
    %5674 = vmatpush.bf16.xpose.msra.mxu0 0
    %5675 = vmatpush.bf16.xpose.msra.mxu0 0
    %5676 = vmatpush.bf16.xpose.msra.mxu0 %v3533
    %5677 = vmatpush.bf16.xpose.msra.mxu0 %v3357
    %5678 = vmatpush.bf16.xpose.msra.mxu0 %v3181
    %5679 = vmatpush.bf16.xpose.msra.mxu0 %v3005
    %5680 = vmatmul.bf16.gmra.mxu0 %v790
    %v5681 = vpop.f32.mrf.mxu0
    %v5682 = vadd.f32 %v5669, %v5681
    %v5683 = vpop.f32.mrf.mxu0
    %5684 = vdwg.mxu0
    %5685 = vmatpush.bf16.xpose.msra.mxu0 0
    %5686 = vmatpush.bf16.xpose.msra.mxu0 0
    %5687 = vmatpush.bf16.xpose.msra.mxu0 0
    %5688 = vmatpush.bf16.xpose.msra.mxu0 0
    %5689 = vmatpush.bf16.xpose.msra.mxu0 %v3534
    %5690 = vmatpush.bf16.xpose.msra.mxu0 %v3358
    %5691 = vmatpush.bf16.xpose.msra.mxu0 %v3182
    %5692 = vmatpush.bf16.xpose.msra.mxu0 %v3006
    %5693 = vmatmul.bf16.gmra.mxu0 %v791
    %v5694 = vpop.f32.mrf.mxu0
    %v5695 = vadd.f32 %v5682, %v5694
    %v5696 = vpop.f32.mrf.mxu0
    %5697 = vdwg.mxu0
    %5698 = vmatpush.bf16.xpose.msra.mxu0 0
    %5699 = vmatpush.bf16.xpose.msra.mxu0 0
    %5700 = vmatpush.bf16.xpose.msra.mxu0 0
    %5701 = vmatpush.bf16.xpose.msra.mxu0 0
    %5702 = vmatpush.bf16.xpose.msra.mxu0 %v3535
    %5703 = vmatpush.bf16.xpose.msra.mxu0 %v3359
    %5704 = vmatpush.bf16.xpose.msra.mxu0 %v3183
    %5705 = vmatpush.bf16.xpose.msra.mxu0 %v3007
    %5706 = vmatmul.bf16.gmra.mxu0 %v792
    %v5707 = vpop.f32.mrf.mxu0
    %v5708 = vadd.f32 %v5695, %v5707
    %v5709 = vpop.f32.mrf.mxu0
    %5710 = vdwg.mxu0
    %5711 = vmatpush.bf16.xpose.msra.mxu0 0
    %5712 = vmatpush.bf16.xpose.msra.mxu0 0
    %5713 = vmatpush.bf16.xpose.msra.mxu0 0
    %5714 = vmatpush.bf16.xpose.msra.mxu0 0
    %5715 = vmatpush.bf16.xpose.msra.mxu0 %v3536
    %5716 = vmatpush.bf16.xpose.msra.mxu0 %v3360
    %5717 = vmatpush.bf16.xpose.msra.mxu0 %v3184
    %5718 = vmatpush.bf16.xpose.msra.mxu0 %v3008
    %5719 = vmatmul.bf16.gmra.mxu0 %v793
    %v5720 = vpop.f32.mrf.mxu0
    %v5721 = vadd.f32 %v5708, %v5720
    %v5722 = vpop.f32.mrf.mxu0
    %5723 = vdwg.mxu0
    %5724 = vmatpush.bf16.xpose.msra.mxu0 0
    %5725 = vmatpush.bf16.xpose.msra.mxu0 0
    %5726 = vmatpush.bf16.xpose.msra.mxu0 0
    %5727 = vmatpush.bf16.xpose.msra.mxu0 0
    %5728 = vmatpush.bf16.xpose.msra.mxu0 %v3537
    %5729 = vmatpush.bf16.xpose.msra.mxu0 %v3361
    %5730 = vmatpush.bf16.xpose.msra.mxu0 %v3185
    %5731 = vmatpush.bf16.xpose.msra.mxu0 %v3009
    %5732 = vmatmul.bf16.gmra.mxu0 %v794
    %v5733 = vpop.f32.mrf.mxu0
    %v5734 = vadd.f32 %v5721, %v5733
    %v5735 = vpop.f32.mrf.mxu0
    %5736 = vdwg.mxu0
    %5737 = vmatpush.bf16.xpose.msra.mxu0 0
    %5738 = vmatpush.bf16.xpose.msra.mxu0 0
    %5739 = vmatpush.bf16.xpose.msra.mxu0 0
    %5740 = vmatpush.bf16.xpose.msra.mxu0 0
    %5741 = vmatpush.bf16.xpose.msra.mxu0 %v3538
    %5742 = vmatpush.bf16.xpose.msra.mxu0 %v3362
    %5743 = vmatpush.bf16.xpose.msra.mxu0 %v3186
    %5744 = vmatpush.bf16.xpose.msra.mxu0 %v3010
    %5745 = vmatmul.bf16.gmra.mxu0 %v795
    %v5746 = vpop.f32.mrf.mxu0
    %v5747 = vadd.f32 %v5734, %v5746
    %v5748 = vpop.f32.mrf.mxu0
    %5749 = vdwg.mxu0
    %5750 = vmatpush.bf16.xpose.msra.mxu0 0
    %5751 = vmatpush.bf16.xpose.msra.mxu0 0
    %5752 = vmatpush.bf16.xpose.msra.mxu0 0
    %5753 = vmatpush.bf16.xpose.msra.mxu0 0
    %5754 = vmatpush.bf16.xpose.msra.mxu0 %v3539
    %5755 = vmatpush.bf16.xpose.msra.mxu0 %v3363
    %5756 = vmatpush.bf16.xpose.msra.mxu0 %v3187
    %5757 = vmatpush.bf16.xpose.msra.mxu0 %v3011
    %5758 = vmatmul.bf16.gmra.mxu0 %v796
    %v5759 = vpop.f32.mrf.mxu0
    %v5760 = vadd.f32 %v5747, %v5759
    %v5761 = vpop.f32.mrf.mxu0
    %5762 = vdwg.mxu0
    %5763 = vmatpush.bf16.xpose.msra.mxu0 0
    %5764 = vmatpush.bf16.xpose.msra.mxu0 0
    %5765 = vmatpush.bf16.xpose.msra.mxu0 0
    %5766 = vmatpush.bf16.xpose.msra.mxu0 0
    %5767 = vmatpush.bf16.xpose.msra.mxu0 %v3540
    %5768 = vmatpush.bf16.xpose.msra.mxu0 %v3364
    %5769 = vmatpush.bf16.xpose.msra.mxu0 %v3188
    %5770 = vmatpush.bf16.xpose.msra.mxu0 %v3012
    %5771 = vmatmul.bf16.gmra.mxu0 %v797
    %v5772 = vpop.f32.mrf.mxu0
    %v5773 = vadd.f32 %v5760, %v5772
    %v5774 = vpop.f32.mrf.mxu0
    %5775 = vdwg.mxu0
    %5776 = vmatpush.bf16.xpose.msra.mxu0 0
    %5777 = vmatpush.bf16.xpose.msra.mxu0 0
    %5778 = vmatpush.bf16.xpose.msra.mxu0 0
    %5779 = vmatpush.bf16.xpose.msra.mxu0 0
    %5780 = vmatpush.bf16.xpose.msra.mxu0 %v3541
    %5781 = vmatpush.bf16.xpose.msra.mxu0 %v3365
    %5782 = vmatpush.bf16.xpose.msra.mxu0 %v3189
    %5783 = vmatpush.bf16.xpose.msra.mxu0 %v3013
    %5784 = vmatmul.bf16.gmra.mxu0 %v800
    %v5785 = vpop.f32.mrf.mxu0
    %v5786 = vadd.f32 %v5773, %v5785
    %v5787 = vpop.f32.mrf.mxu0
    %5788 = vdwg.mxu0
    %5789 = vmatpush.bf16.xpose.msra.mxu0 0
    %5790 = vmatpush.bf16.xpose.msra.mxu0 0
    %5791 = vmatpush.bf16.xpose.msra.mxu0 0
    %5792 = vmatpush.bf16.xpose.msra.mxu0 0
    %5793 = vmatpush.bf16.xpose.msra.mxu0 %v3542
    %5794 = vmatpush.bf16.xpose.msra.mxu0 %v3366
    %5795 = vmatpush.bf16.xpose.msra.mxu0 %v3190
    %5796 = vmatpush.bf16.xpose.msra.mxu0 %v3014
    %5797 = vmatmul.bf16.gmra.mxu0 %v801
    %v5798 = vpop.f32.mrf.mxu0
    %v5799 = vadd.f32 %v5786, %v5798
    %v5800 = vpop.f32.mrf.mxu0
    %5801 = vdwg.mxu0
    %5802 = vmatpush.bf16.xpose.msra.mxu0 0
    %5803 = vmatpush.bf16.xpose.msra.mxu0 0
    %5804 = vmatpush.bf16.xpose.msra.mxu0 0
    %5805 = vmatpush.bf16.xpose.msra.mxu0 0
    %5806 = vmatpush.bf16.xpose.msra.mxu0 %v3543
    %5807 = vmatpush.bf16.xpose.msra.mxu0 %v3367
    %5808 = vmatpush.bf16.xpose.msra.mxu0 %v3191
    %5809 = vmatpush.bf16.xpose.msra.mxu0 %v3015
    %5810 = vmatmul.bf16.gmra.mxu0 %v802
    %v5811 = vpop.f32.mrf.mxu0
    %v5812 = vadd.f32 %v5799, %v5811
    %v5813 = vpop.f32.mrf.mxu0
    %5814 = vdwg.mxu0
    %5815 = vmatpush.bf16.xpose.msra.mxu0 0
    %5816 = vmatpush.bf16.xpose.msra.mxu0 0
    %5817 = vmatpush.bf16.xpose.msra.mxu0 0
    %5818 = vmatpush.bf16.xpose.msra.mxu0 0
    %5819 = vmatpush.bf16.xpose.msra.mxu0 %v3544
    %5820 = vmatpush.bf16.xpose.msra.mxu0 %v3368
    %5821 = vmatpush.bf16.xpose.msra.mxu0 %v3192
    %5822 = vmatpush.bf16.xpose.msra.mxu0 %v3016
    %5823 = vmatmul.bf16.gmra.mxu0 %v803
    %v5824 = vpop.f32.mrf.mxu0
    %v5825 = vadd.f32 %v5812, %v5824
    %v5826 = vpop.f32.mrf.mxu0
    %5827 = vdwg.mxu0
    %5828 = vmatpush.bf16.xpose.msra.mxu0 0
    %5829 = vmatpush.bf16.xpose.msra.mxu0 0
    %5830 = vmatpush.bf16.xpose.msra.mxu0 0
    %5831 = vmatpush.bf16.xpose.msra.mxu0 0
    %5832 = vmatpush.bf16.xpose.msra.mxu0 %v3545
    %5833 = vmatpush.bf16.xpose.msra.mxu0 %v3369
    %5834 = vmatpush.bf16.xpose.msra.mxu0 %v3193
    %5835 = vmatpush.bf16.xpose.msra.mxu0 %v3017
    %5836 = vmatmul.bf16.gmra.mxu0 %v804
    %v5837 = vpop.f32.mrf.mxu0
    %v5838 = vadd.f32 %v5825, %v5837
    %v5839 = vpop.f32.mrf.mxu0
    %5840 = vdwg.mxu0
    %5841 = vmatpush.bf16.xpose.msra.mxu0 0
    %5842 = vmatpush.bf16.xpose.msra.mxu0 0
    %5843 = vmatpush.bf16.xpose.msra.mxu0 0
    %5844 = vmatpush.bf16.xpose.msra.mxu0 0
    %5845 = vmatpush.bf16.xpose.msra.mxu0 %v3546
    %5846 = vmatpush.bf16.xpose.msra.mxu0 %v3370
    %5847 = vmatpush.bf16.xpose.msra.mxu0 %v3194
    %5848 = vmatpush.bf16.xpose.msra.mxu0 %v3018
    %5849 = vmatmul.bf16.gmra.mxu0 %v805
    %v5850 = vpop.f32.mrf.mxu0
    %v5851 = vadd.f32 %v5838, %v5850
    %v5852 = vpop.f32.mrf.mxu0
    %5853 = vdwg.mxu0
    %5854 = vmatpush.bf16.xpose.msra.mxu0 0
    %5855 = vmatpush.bf16.xpose.msra.mxu0 0
    %5856 = vmatpush.bf16.xpose.msra.mxu0 0
    %5857 = vmatpush.bf16.xpose.msra.mxu0 0
    %5858 = vmatpush.bf16.xpose.msra.mxu0 %v3547
    %5859 = vmatpush.bf16.xpose.msra.mxu0 %v3371
    %5860 = vmatpush.bf16.xpose.msra.mxu0 %v3195
    %5861 = vmatpush.bf16.xpose.msra.mxu0 %v3019
    %5862 = vmatmul.bf16.gmra.mxu0 %v806
    %v5863 = vpop.f32.mrf.mxu0
    %v5864 = vadd.f32 %v5851, %v5863
    %v5865 = vpop.f32.mrf.mxu0
    %5866 = vdwg.mxu0
    %5867 = vmatpush.bf16.xpose.msra.mxu0 0
    %5868 = vmatpush.bf16.xpose.msra.mxu0 0
    %5869 = vmatpush.bf16.xpose.msra.mxu0 0
    %5870 = vmatpush.bf16.xpose.msra.mxu0 0
    %5871 = vmatpush.bf16.xpose.msra.mxu0 %v3548
    %5872 = vmatpush.bf16.xpose.msra.mxu0 %v3372
    %5873 = vmatpush.bf16.xpose.msra.mxu0 %v3196
    %5874 = vmatpush.bf16.xpose.msra.mxu0 %v3020
    %5875 = vmatmul.bf16.gmra.mxu0 %v807
    %v5876 = vpop.f32.mrf.mxu0
    %v5877 = vadd.f32 %v5864, %v5876
    %v5878 = vpop.f32.mrf.mxu0
    %5879 = vdwg.mxu0
    %5880 = vmatpush.bf16.xpose.msra.mxu0 0
    %5881 = vmatpush.bf16.xpose.msra.mxu0 0
    %5882 = vmatpush.bf16.xpose.msra.mxu0 0
    %5883 = vmatpush.bf16.xpose.msra.mxu0 0
    %5884 = vmatpush.bf16.xpose.msra.mxu0 %v3549
    %5885 = vmatpush.bf16.xpose.msra.mxu0 %v3373
    %5886 = vmatpush.bf16.xpose.msra.mxu0 %v3197
    %5887 = vmatpush.bf16.xpose.msra.mxu0 %v3021
    %5888 = vmatmul.bf16.gmra.mxu0 %v810
    %v5889 = vpop.f32.mrf.mxu0
    %v5890 = vadd.f32 %v5877, %v5889
    %v5891 = vpop.f32.mrf.mxu0
    %5892 = vdwg.mxu0
    %5893 = vmatpush.bf16.xpose.msra.mxu0 0
    %5894 = vmatpush.bf16.xpose.msra.mxu0 0
    %5895 = vmatpush.bf16.xpose.msra.mxu0 0
    %5896 = vmatpush.bf16.xpose.msra.mxu0 0
    %5897 = vmatpush.bf16.xpose.msra.mxu0 %v3550
    %5898 = vmatpush.bf16.xpose.msra.mxu0 %v3374
    %5899 = vmatpush.bf16.xpose.msra.mxu0 %v3198
    %5900 = vmatpush.bf16.xpose.msra.mxu0 %v3022
    %5901 = vmatmul.bf16.gmra.mxu0 %v811
    %v5902 = vpop.f32.mrf.mxu0
    %v5903 = vadd.f32 %v5890, %v5902
    %v5904 = vpop.f32.mrf.mxu0
    %5905 = vdwg.mxu0
    %5906 = vmatpush.bf16.xpose.msra.mxu0 0
    %5907 = vmatpush.bf16.xpose.msra.mxu0 0
    %5908 = vmatpush.bf16.xpose.msra.mxu0 0
    %5909 = vmatpush.bf16.xpose.msra.mxu0 0
    %5910 = vmatpush.bf16.xpose.msra.mxu0 %v3551
    %5911 = vmatpush.bf16.xpose.msra.mxu0 %v3375
    %5912 = vmatpush.bf16.xpose.msra.mxu0 %v3199
    %5913 = vmatpush.bf16.xpose.msra.mxu0 %v3023
    %5914 = vmatmul.bf16.gmra.mxu0 %v812
    %v5915 = vpop.f32.mrf.mxu0
    %v5916 = vadd.f32 %v5903, %v5915
    %v5917 = vpop.f32.mrf.mxu0
    %5918 = vdwg.mxu0
    %5919 = vmatpush.bf16.xpose.msra.mxu0 0
    %5920 = vmatpush.bf16.xpose.msra.mxu0 0
    %5921 = vmatpush.bf16.xpose.msra.mxu0 0
    %5922 = vmatpush.bf16.xpose.msra.mxu0 0
    %5923 = vmatpush.bf16.xpose.msra.mxu0 %v3552
    %5924 = vmatpush.bf16.xpose.msra.mxu0 %v3376
    %5925 = vmatpush.bf16.xpose.msra.mxu0 %v3200
    %5926 = vmatpush.bf16.xpose.msra.mxu0 %v3024
    %5927 = vmatmul.bf16.gmra.mxu0 %v813
    %v5928 = vpop.f32.mrf.mxu0
    %v5929 = vadd.f32 %v5916, %v5928
    %v5930 = vpop.f32.mrf.mxu0
    %5931 = vdwg.mxu0
    %5932 = vmatpush.bf16.xpose.msra.mxu0 0
    %5933 = vmatpush.bf16.xpose.msra.mxu0 0
    %5934 = vmatpush.bf16.xpose.msra.mxu0 0
    %5935 = vmatpush.bf16.xpose.msra.mxu0 0
    %5936 = vmatpush.bf16.xpose.msra.mxu0 %v3553
    %5937 = vmatpush.bf16.xpose.msra.mxu0 %v3377
    %5938 = vmatpush.bf16.xpose.msra.mxu0 %v3201
    %5939 = vmatpush.bf16.xpose.msra.mxu0 %v3025
    %5940 = vmatmul.bf16.gmra.mxu0 %v814
    %v5941 = vpop.f32.mrf.mxu0
    %v5942 = vadd.f32 %v5929, %v5941
    %v5943 = vpop.f32.mrf.mxu0
    %5944 = vdwg.mxu0
    %5945 = vmatpush.bf16.xpose.msra.mxu0 0
    %5946 = vmatpush.bf16.xpose.msra.mxu0 0
    %5947 = vmatpush.bf16.xpose.msra.mxu0 0
    %5948 = vmatpush.bf16.xpose.msra.mxu0 0
    %5949 = vmatpush.bf16.xpose.msra.mxu0 %v3554
    %5950 = vmatpush.bf16.xpose.msra.mxu0 %v3378
    %5951 = vmatpush.bf16.xpose.msra.mxu0 %v3202
    %5952 = vmatpush.bf16.xpose.msra.mxu0 %v3026
    %5953 = vmatmul.bf16.gmra.mxu0 %v815
    %v5954 = vpop.f32.mrf.mxu0
    %v5955 = vadd.f32 %v5942, %v5954
    %v5956 = vpop.f32.mrf.mxu0
    %5957 = vdwg.mxu0
    %5958 = vmatpush.bf16.xpose.msra.mxu0 0
    %5959 = vmatpush.bf16.xpose.msra.mxu0 0
    %5960 = vmatpush.bf16.xpose.msra.mxu0 0
    %5961 = vmatpush.bf16.xpose.msra.mxu0 0
    %5962 = vmatpush.bf16.xpose.msra.mxu0 %v3555
    %5963 = vmatpush.bf16.xpose.msra.mxu0 %v3379
    %5964 = vmatpush.bf16.xpose.msra.mxu0 %v3203
    %5965 = vmatpush.bf16.xpose.msra.mxu0 %v3027
    %5966 = vmatmul.bf16.gmra.mxu0 %v816
    %v5967 = vpop.f32.mrf.mxu0
    %v5968 = vadd.f32 %v5955, %v5967
    %v5969 = vpop.f32.mrf.mxu0
    %5970 = vdwg.mxu0
    %5971 = vmatpush.bf16.xpose.msra.mxu0 0
    %5972 = vmatpush.bf16.xpose.msra.mxu0 0
    %5973 = vmatpush.bf16.xpose.msra.mxu0 0
    %5974 = vmatpush.bf16.xpose.msra.mxu0 0
    %5975 = vmatpush.bf16.xpose.msra.mxu0 %v3556
    %5976 = vmatpush.bf16.xpose.msra.mxu0 %v3380
    %5977 = vmatpush.bf16.xpose.msra.mxu0 %v3204
    %5978 = vmatpush.bf16.xpose.msra.mxu0 %v3028
    %5979 = vmatmul.bf16.gmra.mxu0 %v817
    %v5980 = vpop.f32.mrf.mxu0
    %v5981 = vadd.f32 %v5968, %v5980
    %v5982 = vpop.f32.mrf.mxu0
    %5983 = vdwg.mxu0
    %5984 = vmatpush.bf16.xpose.msra.mxu0 0
    %5985 = vmatpush.bf16.xpose.msra.mxu0 0
    %5986 = vmatpush.bf16.xpose.msra.mxu0 0
    %5987 = vmatpush.bf16.xpose.msra.mxu0 0
    %5988 = vmatpush.bf16.xpose.msra.mxu0 %v3557
    %5989 = vmatpush.bf16.xpose.msra.mxu0 %v3381
    %5990 = vmatpush.bf16.xpose.msra.mxu0 %v3205
    %5991 = vmatpush.bf16.xpose.msra.mxu0 %v3029
    %5992 = vmatmul.bf16.gmra.mxu0 %v820
    %v5993 = vpop.f32.mrf.mxu0
    %v5994 = vadd.f32 %v5981, %v5993
    %v5995 = vpop.f32.mrf.mxu0
    %5996 = vdwg.mxu0
    %5997 = vmatpush.bf16.xpose.msra.mxu0 0
    %5998 = vmatpush.bf16.xpose.msra.mxu0 0
    %5999 = vmatpush.bf16.xpose.msra.mxu0 0
    %6000 = vmatpush.bf16.xpose.msra.mxu0 0
    %6001 = vmatpush.bf16.xpose.msra.mxu0 %v3558
    %6002 = vmatpush.bf16.xpose.msra.mxu0 %v3382
    %6003 = vmatpush.bf16.xpose.msra.mxu0 %v3206
    %6004 = vmatpush.bf16.xpose.msra.mxu0 %v3030
    %6005 = vmatmul.bf16.gmra.mxu0 %v821
    %v6006 = vpop.f32.mrf.mxu0
    %v6007 = vadd.f32 %v5994, %v6006
    %v6008 = vpop.f32.mrf.mxu0
    %6009 = vdwg.mxu0
    %6010 = vmatpush.bf16.xpose.msra.mxu0 0
    %6011 = vmatpush.bf16.xpose.msra.mxu0 0
    %6012 = vmatpush.bf16.xpose.msra.mxu0 0
    %6013 = vmatpush.bf16.xpose.msra.mxu0 0
    %6014 = vmatpush.bf16.xpose.msra.mxu0 %v3559
    %6015 = vmatpush.bf16.xpose.msra.mxu0 %v3383
    %6016 = vmatpush.bf16.xpose.msra.mxu0 %v3207
    %6017 = vmatpush.bf16.xpose.msra.mxu0 %v3031
    %6018 = vmatmul.bf16.gmra.mxu0 %v822
    %v6019 = vpop.f32.mrf.mxu0
    %v6020 = vadd.f32 %v6007, %v6019
    %v6021 = vpop.f32.mrf.mxu0
    %6022 = vdwg.mxu0
    %6023 = vmatpush.bf16.xpose.msra.mxu0 0
    %6024 = vmatpush.bf16.xpose.msra.mxu0 0
    %6025 = vmatpush.bf16.xpose.msra.mxu0 0
    %6026 = vmatpush.bf16.xpose.msra.mxu0 0
    %6027 = vmatpush.bf16.xpose.msra.mxu0 %v3560
    %6028 = vmatpush.bf16.xpose.msra.mxu0 %v3384
    %6029 = vmatpush.bf16.xpose.msra.mxu0 %v3208
    %6030 = vmatpush.bf16.xpose.msra.mxu0 %v3032
    %6031 = vmatmul.bf16.gmra.mxu0 %v823
    %v6032 = vpop.f32.mrf.mxu0
    %v6033 = vadd.f32 %v6020, %v6032
    %v6034 = vpop.f32.mrf.mxu0
    %6035 = vdwg.mxu0
    %6036 = vmatpush.bf16.xpose.msra.mxu0 0
    %6037 = vmatpush.bf16.xpose.msra.mxu0 0
    %6038 = vmatpush.bf16.xpose.msra.mxu0 0
    %6039 = vmatpush.bf16.xpose.msra.mxu0 0
    %6040 = vmatpush.bf16.xpose.msra.mxu0 %v3561
    %6041 = vmatpush.bf16.xpose.msra.mxu0 %v3385
    %6042 = vmatpush.bf16.xpose.msra.mxu0 %v3209
    %6043 = vmatpush.bf16.xpose.msra.mxu0 %v3033
    %6044 = vmatmul.bf16.gmra.mxu0 %v824
    %v6045 = vpop.f32.mrf.mxu0
    %v6046 = vadd.f32 %v6033, %v6045
    %v6047 = vpop.f32.mrf.mxu0
    %6048 = vdwg.mxu0
    %6049 = vmatpush.bf16.xpose.msra.mxu0 0
    %6050 = vmatpush.bf16.xpose.msra.mxu0 0
    %6051 = vmatpush.bf16.xpose.msra.mxu0 0
    %6052 = vmatpush.bf16.xpose.msra.mxu0 0
    %6053 = vmatpush.bf16.xpose.msra.mxu0 %v3562
    %6054 = vmatpush.bf16.xpose.msra.mxu0 %v3386
    %6055 = vmatpush.bf16.xpose.msra.mxu0 %v3210
    %6056 = vmatpush.bf16.xpose.msra.mxu0 %v3034
    %6057 = vmatmul.bf16.gmra.mxu0 %v825
    %v6058 = vpop.f32.mrf.mxu0
    %v6059 = vadd.f32 %v6046, %v6058
    %v6060 = vpop.f32.mrf.mxu0
    %6061 = vdwg.mxu0
    %6062 = vmatpush.bf16.xpose.msra.mxu0 0
    %6063 = vmatpush.bf16.xpose.msra.mxu0 0
    %6064 = vmatpush.bf16.xpose.msra.mxu0 0
    %6065 = vmatpush.bf16.xpose.msra.mxu0 0
    %6066 = vmatpush.bf16.xpose.msra.mxu0 %v3563
    %6067 = vmatpush.bf16.xpose.msra.mxu0 %v3387
    %6068 = vmatpush.bf16.xpose.msra.mxu0 %v3211
    %6069 = vmatpush.bf16.xpose.msra.mxu0 %v3035
    %6070 = vmatmul.bf16.gmra.mxu0 %v826
    %v6071 = vpop.f32.mrf.mxu0
    %v6072 = vadd.f32 %v6059, %v6071
    %v6073 = vpop.f32.mrf.mxu0
    %6074 = vdwg.mxu0
    %6075 = vmatpush.bf16.xpose.msra.mxu0 0
    %6076 = vmatpush.bf16.xpose.msra.mxu0 0
    %6077 = vmatpush.bf16.xpose.msra.mxu0 0
    %6078 = vmatpush.bf16.xpose.msra.mxu0 0
    %6079 = vmatpush.bf16.xpose.msra.mxu0 %v3564
    %6080 = vmatpush.bf16.xpose.msra.mxu0 %v3388
    %6081 = vmatpush.bf16.xpose.msra.mxu0 %v3212
    %6082 = vmatpush.bf16.xpose.msra.mxu0 %v3036
    %6083 = vmatmul.bf16.gmra.mxu0 %v827
    %v6084 = vpop.f32.mrf.mxu0
    %v6085 = vadd.f32 %v6072, %v6084
    %v6086 = vpop.f32.mrf.mxu0
    %6087 = vdwg.mxu0
    %6088 = vmatpush.bf16.xpose.msra.mxu0 0
    %6089 = vmatpush.bf16.xpose.msra.mxu0 0
    %6090 = vmatpush.bf16.xpose.msra.mxu0 0
    %6091 = vmatpush.bf16.xpose.msra.mxu0 0
    %6092 = vmatpush.bf16.xpose.msra.mxu0 %v3565
    %6093 = vmatpush.bf16.xpose.msra.mxu0 %v3389
    %6094 = vmatpush.bf16.xpose.msra.mxu0 %v3213
    %6095 = vmatpush.bf16.xpose.msra.mxu0 %v3037
    %6096 = vmatmul.bf16.gmra.mxu0 %v830
    %v6097 = vpop.f32.mrf.mxu0
    %v6098 = vadd.f32 %v6085, %v6097
    %v6099 = vpop.f32.mrf.mxu0
    %6100 = vdwg.mxu0
    %6101 = vmatpush.bf16.xpose.msra.mxu0 0
    %6102 = vmatpush.bf16.xpose.msra.mxu0 0
    %6103 = vmatpush.bf16.xpose.msra.mxu0 0
    %6104 = vmatpush.bf16.xpose.msra.mxu0 0
    %6105 = vmatpush.bf16.xpose.msra.mxu0 %v3566
    %6106 = vmatpush.bf16.xpose.msra.mxu0 %v3390
    %6107 = vmatpush.bf16.xpose.msra.mxu0 %v3214
    %6108 = vmatpush.bf16.xpose.msra.mxu0 %v3038
    %6109 = vmatmul.bf16.gmra.mxu0 %v831
    %v6110 = vpop.f32.mrf.mxu0
    %v6111 = vadd.f32 %v6098, %v6110
    %v6112 = vpop.f32.mrf.mxu0
    %6113 = vdwg.mxu0
    %6114 = vmatpush.bf16.xpose.msra.mxu0 0
    %6115 = vmatpush.bf16.xpose.msra.mxu0 0
    %6116 = vmatpush.bf16.xpose.msra.mxu0 0
    %6117 = vmatpush.bf16.xpose.msra.mxu0 0
    %6118 = vmatpush.bf16.xpose.msra.mxu0 %v3567
    %6119 = vmatpush.bf16.xpose.msra.mxu0 %v3391
    %6120 = vmatpush.bf16.xpose.msra.mxu0 %v3215
    %6121 = vmatpush.bf16.xpose.msra.mxu0 %v3039
    %6122 = vmatmul.bf16.gmra.mxu0 %v832
    %v6123 = vpop.f32.mrf.mxu0
    %v6124 = vadd.f32 %v6111, %v6123
    %v6125 = vpop.f32.mrf.mxu0
    %6126 = vdwg.mxu0
    %6127 = vmatpush.bf16.xpose.msra.mxu0 0
    %6128 = vmatpush.bf16.xpose.msra.mxu0 0
    %6129 = vmatpush.bf16.xpose.msra.mxu0 0
    %6130 = vmatpush.bf16.xpose.msra.mxu0 0
    %6131 = vmatpush.bf16.xpose.msra.mxu0 %v3568
    %6132 = vmatpush.bf16.xpose.msra.mxu0 %v3392
    %6133 = vmatpush.bf16.xpose.msra.mxu0 %v3216
    %6134 = vmatpush.bf16.xpose.msra.mxu0 %v3040
    %6135 = vmatmul.bf16.gmra.mxu0 %v833
    %v6136 = vpop.f32.mrf.mxu0
    %v6137 = vadd.f32 %v6124, %v6136
    %v6138 = vpop.f32.mrf.mxu0
    %6139 = vdwg.mxu0
    %6140 = vmatpush.bf16.xpose.msra.mxu0 0
    %6141 = vmatpush.bf16.xpose.msra.mxu0 0
    %6142 = vmatpush.bf16.xpose.msra.mxu0 0
    %6143 = vmatpush.bf16.xpose.msra.mxu0 0
    %6144 = vmatpush.bf16.xpose.msra.mxu0 %v3569
    %6145 = vmatpush.bf16.xpose.msra.mxu0 %v3393
    %6146 = vmatpush.bf16.xpose.msra.mxu0 %v3217
    %6147 = vmatpush.bf16.xpose.msra.mxu0 %v3041
    %6148 = vmatmul.bf16.gmra.mxu0 %v834
    %v6149 = vpop.f32.mrf.mxu0
    %v6150 = vadd.f32 %v6137, %v6149
    %v6151 = vpop.f32.mrf.mxu0
    %6152 = vdwg.mxu0
    %6153 = vmatpush.bf16.xpose.msra.mxu0 0
    %6154 = vmatpush.bf16.xpose.msra.mxu0 0
    %6155 = vmatpush.bf16.xpose.msra.mxu0 0
    %6156 = vmatpush.bf16.xpose.msra.mxu0 0
    %6157 = vmatpush.bf16.xpose.msra.mxu0 %v3570
    %6158 = vmatpush.bf16.xpose.msra.mxu0 %v3394
    %6159 = vmatpush.bf16.xpose.msra.mxu0 %v3218
    %6160 = vmatpush.bf16.xpose.msra.mxu0 %v3042
    %6161 = vmatmul.bf16.gmra.mxu0 %v835
    %v6162 = vpop.f32.mrf.mxu0
    %v6163 = vadd.f32 %v6150, %v6162
    %v6164 = vpop.f32.mrf.mxu0
    %6165 = vdwg.mxu0
    %6166 = vmatpush.bf16.xpose.msra.mxu0 0
    %6167 = vmatpush.bf16.xpose.msra.mxu0 0
    %6168 = vmatpush.bf16.xpose.msra.mxu0 0
    %6169 = vmatpush.bf16.xpose.msra.mxu0 0
    %6170 = vmatpush.bf16.xpose.msra.mxu0 %v3571
    %6171 = vmatpush.bf16.xpose.msra.mxu0 %v3395
    %6172 = vmatpush.bf16.xpose.msra.mxu0 %v3219
    %6173 = vmatpush.bf16.xpose.msra.mxu0 %v3043
    %6174 = vmatmul.bf16.gmra.mxu0 %v836
    %v6175 = vpop.f32.mrf.mxu0
    %v6176 = vadd.f32 %v6163, %v6175
    %v6177 = vpop.f32.mrf.mxu0
    %6178 = vdwg.mxu0
    %6179 = vmatpush.bf16.xpose.msra.mxu0 0
    %6180 = vmatpush.bf16.xpose.msra.mxu0 0
    %6181 = vmatpush.bf16.xpose.msra.mxu0 0
    %6182 = vmatpush.bf16.xpose.msra.mxu0 0
    %6183 = vmatpush.bf16.xpose.msra.mxu0 %v3572
    %6184 = vmatpush.bf16.xpose.msra.mxu0 %v3396
    %6185 = vmatpush.bf16.xpose.msra.mxu0 %v3220
    %6186 = vmatpush.bf16.xpose.msra.mxu0 %v3044
    %6187 = vmatmul.bf16.gmra.mxu0 %v837
    %v6188 = vpop.f32.mrf.mxu0
    %v6189 = vadd.f32 %v6176, %v6188
    %v6190 = vpop.f32.mrf.mxu0
    %6191 = vdwg.mxu0
    %6192 = vmatpush.bf16.xpose.msra.mxu0 0
    %6193 = vmatpush.bf16.xpose.msra.mxu0 0
    %6194 = vmatpush.bf16.xpose.msra.mxu0 0
    %6195 = vmatpush.bf16.xpose.msra.mxu0 0
    %6196 = vmatpush.bf16.xpose.msra.mxu0 %v3573
    %6197 = vmatpush.bf16.xpose.msra.mxu0 %v3397
    %6198 = vmatpush.bf16.xpose.msra.mxu0 %v3221
    %6199 = vmatpush.bf16.xpose.msra.mxu0 %v3045
    %6200 = vmatmul.bf16.gmra.mxu0 %v840
    %v6201 = vpop.f32.mrf.mxu0
    %v6202 = vadd.f32 %v6189, %v6201
    %v6203 = vpop.f32.mrf.mxu0
    %6204 = vdwg.mxu0
    %6205 = vmatpush.bf16.xpose.msra.mxu0 0
    %6206 = vmatpush.bf16.xpose.msra.mxu0 0
    %6207 = vmatpush.bf16.xpose.msra.mxu0 0
    %6208 = vmatpush.bf16.xpose.msra.mxu0 0
    %6209 = vmatpush.bf16.xpose.msra.mxu0 %v3574
    %6210 = vmatpush.bf16.xpose.msra.mxu0 %v3398
    %6211 = vmatpush.bf16.xpose.msra.mxu0 %v3222
    %6212 = vmatpush.bf16.xpose.msra.mxu0 %v3046
    %6213 = vmatmul.bf16.gmra.mxu0 %v841
    %v6214 = vpop.f32.mrf.mxu0
    %v6215 = vadd.f32 %v6202, %v6214
    %v6216 = vpop.f32.mrf.mxu0
    %6217 = vdwg.mxu0
    %6218 = vmatpush.bf16.xpose.msra.mxu0 0
    %6219 = vmatpush.bf16.xpose.msra.mxu0 0
    %6220 = vmatpush.bf16.xpose.msra.mxu0 0
    %6221 = vmatpush.bf16.xpose.msra.mxu0 0
    %6222 = vmatpush.bf16.xpose.msra.mxu0 %v3575
    %6223 = vmatpush.bf16.xpose.msra.mxu0 %v3399
    %6224 = vmatpush.bf16.xpose.msra.mxu0 %v3223
    %6225 = vmatpush.bf16.xpose.msra.mxu0 %v3047
    %6226 = vmatmul.bf16.gmra.mxu0 %v842
    %v6227 = vpop.f32.mrf.mxu0
    %v6228 = vadd.f32 %v6215, %v6227
    %v6229 = vpop.f32.mrf.mxu0
    %6230 = vdwg.mxu0
    %6231 = vmatpush.bf16.xpose.msra.mxu0 0
    %6232 = vmatpush.bf16.xpose.msra.mxu0 0
    %6233 = vmatpush.bf16.xpose.msra.mxu0 0
    %6234 = vmatpush.bf16.xpose.msra.mxu0 0
    %6235 = vmatpush.bf16.xpose.msra.mxu0 %v3576
    %6236 = vmatpush.bf16.xpose.msra.mxu0 %v3400
    %6237 = vmatpush.bf16.xpose.msra.mxu0 %v3224
    %6238 = vmatpush.bf16.xpose.msra.mxu0 %v3048
    %6239 = vmatmul.bf16.gmra.mxu0 %v843
    %v6240 = vpop.f32.mrf.mxu0
    %v6241 = vadd.f32 %v6228, %v6240
    %v6242 = vpop.f32.mrf.mxu0
    %6243 = vdwg.mxu0
    %6244 = vmatpush.bf16.xpose.msra.mxu0 0
    %6245 = vmatpush.bf16.xpose.msra.mxu0 0
    %6246 = vmatpush.bf16.xpose.msra.mxu0 0
    %6247 = vmatpush.bf16.xpose.msra.mxu0 0
    %6248 = vmatpush.bf16.xpose.msra.mxu0 %v3577
    %6249 = vmatpush.bf16.xpose.msra.mxu0 %v3401
    %6250 = vmatpush.bf16.xpose.msra.mxu0 %v3225
    %6251 = vmatpush.bf16.xpose.msra.mxu0 %v3049
    %6252 = vmatmul.bf16.gmra.mxu0 %v844
    %v6253 = vpop.f32.mrf.mxu0
    %v6254 = vadd.f32 %v6241, %v6253
    %v6255 = vpop.f32.mrf.mxu0
    %6256 = vdwg.mxu0
    %6257 = vmatpush.bf16.xpose.msra.mxu0 0
    %6258 = vmatpush.bf16.xpose.msra.mxu0 0
    %6259 = vmatpush.bf16.xpose.msra.mxu0 0
    %6260 = vmatpush.bf16.xpose.msra.mxu0 0
    %6261 = vmatpush.bf16.xpose.msra.mxu0 %v3578
    %6262 = vmatpush.bf16.xpose.msra.mxu0 %v3402
    %6263 = vmatpush.bf16.xpose.msra.mxu0 %v3226
    %6264 = vmatpush.bf16.xpose.msra.mxu0 %v3050
    %6265 = vmatmul.bf16.gmra.mxu0 %v845
    %v6266 = vpop.f32.mrf.mxu0
    %v6267 = vadd.f32 %v6254, %v6266
    %v6268 = vpop.f32.mrf.mxu0
    %6269 = vdwg.mxu0
    %6270 = vmatpush.bf16.xpose.msra.mxu0 0
    %6271 = vmatpush.bf16.xpose.msra.mxu0 0
    %6272 = vmatpush.bf16.xpose.msra.mxu0 0
    %6273 = vmatpush.bf16.xpose.msra.mxu0 0
    %6274 = vmatpush.bf16.xpose.msra.mxu0 %v3579
    %6275 = vmatpush.bf16.xpose.msra.mxu0 %v3403
    %6276 = vmatpush.bf16.xpose.msra.mxu0 %v3227
    %6277 = vmatpush.bf16.xpose.msra.mxu0 %v3051
    %6278 = vmatmul.bf16.gmra.mxu0 %v846
    %v6279 = vpop.f32.mrf.mxu0
    %v6280 = vadd.f32 %v6267, %v6279
    %v6281 = vpop.f32.mrf.mxu0
    %6282 = vdwg.mxu0
    %6283 = vmatpush.bf16.xpose.msra.mxu0 0
    %6284 = vmatpush.bf16.xpose.msra.mxu0 0
    %6285 = vmatpush.bf16.xpose.msra.mxu0 0
    %6286 = vmatpush.bf16.xpose.msra.mxu0 0
    %6287 = vmatpush.bf16.xpose.msra.mxu0 %v3580
    %6288 = vmatpush.bf16.xpose.msra.mxu0 %v3404
    %6289 = vmatpush.bf16.xpose.msra.mxu0 %v3228
    %6290 = vmatpush.bf16.xpose.msra.mxu0 %v3052
    %6291 = vmatmul.bf16.gmra.mxu0 %v847
    %v6292 = vpop.f32.mrf.mxu0
    %v6293 = vadd.f32 %v6280, %v6292
    %v6294 = vpop.f32.mrf.mxu0
    %6295 = vdwg.mxu0
    %6296 = vmatpush.bf16.xpose.msra.mxu0 0
    %6297 = vmatpush.bf16.xpose.msra.mxu0 0
    %6298 = vmatpush.bf16.xpose.msra.mxu0 0
    %6299 = vmatpush.bf16.xpose.msra.mxu0 0
    %6300 = vmatpush.bf16.xpose.msra.mxu0 %v3581
    %6301 = vmatpush.bf16.xpose.msra.mxu0 %v3405
    %6302 = vmatpush.bf16.xpose.msra.mxu0 %v3229
    %6303 = vmatpush.bf16.xpose.msra.mxu0 %v3053
    %6304 = vmatmul.bf16.gmra.mxu0 %v850
    %v6305 = vpop.f32.mrf.mxu0
    %v6306 = vadd.f32 %v6293, %v6305
    %v6307 = vpop.f32.mrf.mxu0
    %6308 = vdwg.mxu0
    %6309 = vmatpush.bf16.xpose.msra.mxu0 0
    %6310 = vmatpush.bf16.xpose.msra.mxu0 0
    %6311 = vmatpush.bf16.xpose.msra.mxu0 0
    %6312 = vmatpush.bf16.xpose.msra.mxu0 0
    %6313 = vmatpush.bf16.xpose.msra.mxu0 %v3582
    %6314 = vmatpush.bf16.xpose.msra.mxu0 %v3406
    %6315 = vmatpush.bf16.xpose.msra.mxu0 %v3230
    %6316 = vmatpush.bf16.xpose.msra.mxu0 %v3054
    %6317 = vmatmul.bf16.gmra.mxu0 %v851
    %v6318 = vpop.f32.mrf.mxu0
    %v6319 = vadd.f32 %v6306, %v6318
    %v6320 = vpop.f32.mrf.mxu0
    %6321 = vdwg.mxu0
    %6322 = vmatpush.bf16.xpose.msra.mxu0 0
    %6323 = vmatpush.bf16.xpose.msra.mxu0 0
    %6324 = vmatpush.bf16.xpose.msra.mxu0 0
    %6325 = vmatpush.bf16.xpose.msra.mxu0 0
    %6326 = vmatpush.bf16.xpose.msra.mxu0 %v3583
    %6327 = vmatpush.bf16.xpose.msra.mxu0 %v3407
    %6328 = vmatpush.bf16.xpose.msra.mxu0 %v3231
    %6329 = vmatpush.bf16.xpose.msra.mxu0 %v3055
    %6330 = vmatmul.bf16.gmra.mxu0 %v852
    %v6331 = vpop.f32.mrf.mxu0
    %v6332 = vadd.f32 %v6319, %v6331
    %v6333 = vpop.f32.mrf.mxu0
    %6334 = vdwg.mxu0
    %6335 = vmatpush.bf16.xpose.msra.mxu0 0
    %6336 = vmatpush.bf16.xpose.msra.mxu0 0
    %6337 = vmatpush.bf16.xpose.msra.mxu0 0
    %6338 = vmatpush.bf16.xpose.msra.mxu0 0
    %6339 = vmatpush.bf16.xpose.msra.mxu0 %v3584
    %6340 = vmatpush.bf16.xpose.msra.mxu0 %v3408
    %6341 = vmatpush.bf16.xpose.msra.mxu0 %v3232
    %6342 = vmatpush.bf16.xpose.msra.mxu0 %v3056
    %6343 = vmatmul.bf16.gmra.mxu0 %v853
    %v6344 = vpop.f32.mrf.mxu0
    %v6345 = vadd.f32 %v6332, %v6344
    %v6346 = vpop.f32.mrf.mxu0
    %6347 = vdwg.mxu0
    %6348 = vmatpush.bf16.xpose.msra.mxu0 0
    %6349 = vmatpush.bf16.xpose.msra.mxu0 0
    %6350 = vmatpush.bf16.xpose.msra.mxu0 0
    %6351 = vmatpush.bf16.xpose.msra.mxu0 0
    %6352 = vmatpush.bf16.xpose.msra.mxu0 %v3585
    %6353 = vmatpush.bf16.xpose.msra.mxu0 %v3409
    %6354 = vmatpush.bf16.xpose.msra.mxu0 %v3233
    %6355 = vmatpush.bf16.xpose.msra.mxu0 %v3057
    %6356 = vmatmul.bf16.gmra.mxu0 %v854
    %v6357 = vpop.f32.mrf.mxu0
    %v6358 = vadd.f32 %v6345, %v6357
    %v6359 = vpop.f32.mrf.mxu0
    %6360 = vdwg.mxu0
    %6361 = vmatpush.bf16.xpose.msra.mxu0 0
    %6362 = vmatpush.bf16.xpose.msra.mxu0 0
    %6363 = vmatpush.bf16.xpose.msra.mxu0 0
    %6364 = vmatpush.bf16.xpose.msra.mxu0 0
    %6365 = vmatpush.bf16.xpose.msra.mxu0 %v3586
    %6366 = vmatpush.bf16.xpose.msra.mxu0 %v3410
    %6367 = vmatpush.bf16.xpose.msra.mxu0 %v3234
    %6368 = vmatpush.bf16.xpose.msra.mxu0 %v3058
    %6369 = vmatmul.bf16.gmra.mxu0 %v855
    %v6370 = vpop.f32.mrf.mxu0
    %v6371 = vadd.f32 %v6358, %v6370
    %v6372 = vpop.f32.mrf.mxu0
    %6373 = vdwg.mxu0
    %6374 = vmatpush.bf16.xpose.msra.mxu0 0
    %6375 = vmatpush.bf16.xpose.msra.mxu0 0
    %6376 = vmatpush.bf16.xpose.msra.mxu0 0
    %6377 = vmatpush.bf16.xpose.msra.mxu0 0
    %6378 = vmatpush.bf16.xpose.msra.mxu0 %v3587
    %6379 = vmatpush.bf16.xpose.msra.mxu0 %v3411
    %6380 = vmatpush.bf16.xpose.msra.mxu0 %v3235
    %6381 = vmatpush.bf16.xpose.msra.mxu0 %v3059
    %6382 = vmatmul.bf16.gmra.mxu0 %v856
    %v6383 = vpop.f32.mrf.mxu0
    %v6384 = vadd.f32 %v6371, %v6383
    %v6385 = vpop.f32.mrf.mxu0
    %6386 = vdwg.mxu0
    %6387 = vmatpush.bf16.xpose.msra.mxu0 0
    %6388 = vmatpush.bf16.xpose.msra.mxu0 0
    %6389 = vmatpush.bf16.xpose.msra.mxu0 0
    %6390 = vmatpush.bf16.xpose.msra.mxu0 0
    %6391 = vmatpush.bf16.xpose.msra.mxu0 %v3588
    %6392 = vmatpush.bf16.xpose.msra.mxu0 %v3412
    %6393 = vmatpush.bf16.xpose.msra.mxu0 %v3236
    %6394 = vmatpush.bf16.xpose.msra.mxu0 %v3060
    %6395 = vmatmul.bf16.gmra.mxu0 %v857
    %v6396 = vpop.f32.mrf.mxu0
    %v6397 = vadd.f32 %v6384, %v6396
    %v6398 = vpop.f32.mrf.mxu0
    %6399 = vdwg.mxu0
    %6400 = vmatpush.bf16.xpose.msra.mxu0 0
    %6401 = vmatpush.bf16.xpose.msra.mxu0 0
    %6402 = vmatpush.bf16.xpose.msra.mxu0 0
    %6403 = vmatpush.bf16.xpose.msra.mxu0 0
    %6404 = vmatpush.bf16.xpose.msra.mxu0 %v3589
    %6405 = vmatpush.bf16.xpose.msra.mxu0 %v3413
    %6406 = vmatpush.bf16.xpose.msra.mxu0 %v3237
    %6407 = vmatpush.bf16.xpose.msra.mxu0 %v3061
    %6408 = vmatmul.bf16.gmra.mxu0 %v860
    %v6409 = vpop.f32.mrf.mxu0
    %v6410 = vadd.f32 %v6397, %v6409
    %v6411 = vpop.f32.mrf.mxu0
    %6412 = vdwg.mxu0
    %6413 = vmatpush.bf16.xpose.msra.mxu0 0
    %6414 = vmatpush.bf16.xpose.msra.mxu0 0
    %6415 = vmatpush.bf16.xpose.msra.mxu0 0
    %6416 = vmatpush.bf16.xpose.msra.mxu0 0
    %6417 = vmatpush.bf16.xpose.msra.mxu0 %v3590
    %6418 = vmatpush.bf16.xpose.msra.mxu0 %v3414
    %6419 = vmatpush.bf16.xpose.msra.mxu0 %v3238
    %6420 = vmatpush.bf16.xpose.msra.mxu0 %v3062
    %6421 = vmatmul.bf16.gmra.mxu0 %v861
    %v6422 = vpop.f32.mrf.mxu0
    %v6423 = vadd.f32 %v6410, %v6422
    %v6424 = vpop.f32.mrf.mxu0
    %6425 = vdwg.mxu0
    %6426 = vmatpush.bf16.xpose.msra.mxu0 0
    %6427 = vmatpush.bf16.xpose.msra.mxu0 0
    %6428 = vmatpush.bf16.xpose.msra.mxu0 0
    %6429 = vmatpush.bf16.xpose.msra.mxu0 0
    %6430 = vmatpush.bf16.xpose.msra.mxu0 %v3591
    %6431 = vmatpush.bf16.xpose.msra.mxu0 %v3415
    %6432 = vmatpush.bf16.xpose.msra.mxu0 %v3239
    %6433 = vmatpush.bf16.xpose.msra.mxu0 %v3063
    %6434 = vmatmul.bf16.gmra.mxu0 %v862
    %v6435 = vpop.f32.mrf.mxu0
    %v6436 = vadd.f32 %v6423, %v6435
    %v6437 = vpop.f32.mrf.mxu0
    %6438 = vdwg.mxu0
    %6439 = vmatpush.bf16.xpose.msra.mxu0 0
    %6440 = vmatpush.bf16.xpose.msra.mxu0 0
    %6441 = vmatpush.bf16.xpose.msra.mxu0 0
    %6442 = vmatpush.bf16.xpose.msra.mxu0 0
    %6443 = vmatpush.bf16.xpose.msra.mxu0 %v3592
    %6444 = vmatpush.bf16.xpose.msra.mxu0 %v3416
    %6445 = vmatpush.bf16.xpose.msra.mxu0 %v3240
    %6446 = vmatpush.bf16.xpose.msra.mxu0 %v3064
    %6447 = vmatmul.bf16.gmra.mxu0 %v863
    %v6448 = vpop.f32.mrf.mxu0
    %v6449 = vadd.f32 %v6436, %v6448
    %v6450 = vpop.f32.mrf.mxu0
    %6451 = vdwg.mxu0
    %6452 = vmatpush.bf16.xpose.msra.mxu0 0
    %6453 = vmatpush.bf16.xpose.msra.mxu0 0
    %6454 = vmatpush.bf16.xpose.msra.mxu0 0
    %6455 = vmatpush.bf16.xpose.msra.mxu0 0
    %6456 = vmatpush.bf16.xpose.msra.mxu0 %v3593
    %6457 = vmatpush.bf16.xpose.msra.mxu0 %v3417
    %6458 = vmatpush.bf16.xpose.msra.mxu0 %v3241
    %6459 = vmatpush.bf16.xpose.msra.mxu0 %v3065
    %6460 = vmatmul.bf16.gmra.mxu0 %v864
    %v6461 = vpop.f32.mrf.mxu0
    %v6462 = vadd.f32 %v6449, %v6461
    %v6463 = vpop.f32.mrf.mxu0
    %6464 = vdwg.mxu0
    %6465 = vmatpush.bf16.xpose.msra.mxu0 0
    %6466 = vmatpush.bf16.xpose.msra.mxu0 0
    %6467 = vmatpush.bf16.xpose.msra.mxu0 0
    %6468 = vmatpush.bf16.xpose.msra.mxu0 0
    %6469 = vmatpush.bf16.xpose.msra.mxu0 %v3594
    %6470 = vmatpush.bf16.xpose.msra.mxu0 %v3418
    %6471 = vmatpush.bf16.xpose.msra.mxu0 %v3242
    %6472 = vmatpush.bf16.xpose.msra.mxu0 %v3066
    %6473 = vmatmul.bf16.gmra.mxu0 %v865
    %v6474 = vpop.f32.mrf.mxu0
    %v6475 = vadd.f32 %v6462, %v6474
    %v6476 = vpop.f32.mrf.mxu0
    %6477 = vdwg.mxu0
    %6478 = vmatpush.bf16.xpose.msra.mxu0 0
    %6479 = vmatpush.bf16.xpose.msra.mxu0 0
    %6480 = vmatpush.bf16.xpose.msra.mxu0 0
    %6481 = vmatpush.bf16.xpose.msra.mxu0 0
    %6482 = vmatpush.bf16.xpose.msra.mxu0 %v3595
    %6483 = vmatpush.bf16.xpose.msra.mxu0 %v3419
    %6484 = vmatpush.bf16.xpose.msra.mxu0 %v3243
    %6485 = vmatpush.bf16.xpose.msra.mxu0 %v3067
    %6486 = vmatmul.bf16.gmra.mxu0 %v866
    %v6487 = vpop.f32.mrf.mxu0
    %v6488 = vadd.f32 %v6475, %v6487
    %v6489 = vpop.f32.mrf.mxu0
    %6490 = vdwg.mxu0
    %6491 = vmatpush.bf16.xpose.msra.mxu0 0
    %6492 = vmatpush.bf16.xpose.msra.mxu0 0
    %6493 = vmatpush.bf16.xpose.msra.mxu0 0
    %6494 = vmatpush.bf16.xpose.msra.mxu0 0
    %6495 = vmatpush.bf16.xpose.msra.mxu0 %v3596
    %6496 = vmatpush.bf16.xpose.msra.mxu0 %v3420
    %6497 = vmatpush.bf16.xpose.msra.mxu0 %v3244
    %6498 = vmatpush.bf16.xpose.msra.mxu0 %v3068
    %6499 = vmatmul.bf16.gmra.mxu0 %v867
    %v6500 = vpop.f32.mrf.mxu0
    %v6501 = vadd.f32 %v6488, %v6500
    %v6502 = vpop.f32.mrf.mxu0
    %6503 = vdwg.mxu0
    %6504 = vmatpush.bf16.xpose.msra.mxu0 0
    %6505 = vmatpush.bf16.xpose.msra.mxu0 0
    %6506 = vmatpush.bf16.xpose.msra.mxu0 0
    %6507 = vmatpush.bf16.xpose.msra.mxu0 0
    %6508 = vmatpush.bf16.xpose.msra.mxu0 %v3597
    %6509 = vmatpush.bf16.xpose.msra.mxu0 %v3421
    %6510 = vmatpush.bf16.xpose.msra.mxu0 %v3245
    %6511 = vmatpush.bf16.xpose.msra.mxu0 %v3069
    %6512 = vmatmul.bf16.gmra.mxu0 %v870
    %v6513 = vpop.f32.mrf.mxu0
    %v6514 = vadd.f32 %v6501, %v6513
    %v6515 = vpop.f32.mrf.mxu0
    %6516 = vdwg.mxu0
    %6517 = vmatpush.bf16.xpose.msra.mxu0 0
    %6518 = vmatpush.bf16.xpose.msra.mxu0 0
    %6519 = vmatpush.bf16.xpose.msra.mxu0 0
    %6520 = vmatpush.bf16.xpose.msra.mxu0 0
    %6521 = vmatpush.bf16.xpose.msra.mxu0 %v3598
    %6522 = vmatpush.bf16.xpose.msra.mxu0 %v3422
    %6523 = vmatpush.bf16.xpose.msra.mxu0 %v3246
    %6524 = vmatpush.bf16.xpose.msra.mxu0 %v3070
    %6525 = vmatmul.bf16.gmra.mxu0 %v871
    %v6526 = vpop.f32.mrf.mxu0
    %v6527 = vadd.f32 %v6514, %v6526
    %v6528 = vpop.f32.mrf.mxu0
    %6529 = vdwg.mxu0
    %6530 = vmatpush.bf16.xpose.msra.mxu0 0
    %6531 = vmatpush.bf16.xpose.msra.mxu0 0
    %6532 = vmatpush.bf16.xpose.msra.mxu0 0
    %6533 = vmatpush.bf16.xpose.msra.mxu0 0
    %6534 = vmatpush.bf16.xpose.msra.mxu0 %v3599
    %6535 = vmatpush.bf16.xpose.msra.mxu0 %v3423
    %6536 = vmatpush.bf16.xpose.msra.mxu0 %v3247
    %6537 = vmatpush.bf16.xpose.msra.mxu0 %v3071
    %6538 = vmatmul.bf16.gmra.mxu0 %v872
    %v6539 = vpop.f32.mrf.mxu0
    %v6540 = vadd.f32 %v6527, %v6539
    %v6541 = vpop.f32.mrf.mxu0
    %6542 = vdwg.mxu0
    %6543 = vmatpush.bf16.xpose.msra.mxu0 0
    %6544 = vmatpush.bf16.xpose.msra.mxu0 0
    %6545 = vmatpush.bf16.xpose.msra.mxu0 0
    %6546 = vmatpush.bf16.xpose.msra.mxu0 0
    %6547 = vmatpush.bf16.xpose.msra.mxu0 %v3600
    %6548 = vmatpush.bf16.xpose.msra.mxu0 %v3424
    %6549 = vmatpush.bf16.xpose.msra.mxu0 %v3248
    %6550 = vmatpush.bf16.xpose.msra.mxu0 %v3072
    %6551 = vmatmul.bf16.gmra.mxu0 %v873
    %v6552 = vpop.f32.mrf.mxu0
    %v6553 = vadd.f32 %v6540, %v6552
    %v6554 = vpop.f32.mrf.mxu0
    %6555 = vdwg.mxu0
    %6556 = vmatpush.bf16.xpose.msra.mxu0 0
    %6557 = vmatpush.bf16.xpose.msra.mxu0 0
    %6558 = vmatpush.bf16.xpose.msra.mxu0 0
    %6559 = vmatpush.bf16.xpose.msra.mxu0 0
    %6560 = vmatpush.bf16.xpose.msra.mxu0 %v3601
    %6561 = vmatpush.bf16.xpose.msra.mxu0 %v3425
    %6562 = vmatpush.bf16.xpose.msra.mxu0 %v3249
    %6563 = vmatpush.bf16.xpose.msra.mxu0 %v3073
    %6564 = vmatmul.bf16.gmra.mxu0 %v874
    %v6565 = vpop.f32.mrf.mxu0
    %v6566 = vadd.f32 %v6553, %v6565
    %v6567 = vpop.f32.mrf.mxu0
    %6568 = vdwg.mxu0
    %6569 = vmatpush.bf16.xpose.msra.mxu0 0
    %6570 = vmatpush.bf16.xpose.msra.mxu0 0
    %6571 = vmatpush.bf16.xpose.msra.mxu0 0
    %6572 = vmatpush.bf16.xpose.msra.mxu0 0
    %6573 = vmatpush.bf16.xpose.msra.mxu0 %v3602
    %6574 = vmatpush.bf16.xpose.msra.mxu0 %v3426
    %6575 = vmatpush.bf16.xpose.msra.mxu0 %v3250
    %6576 = vmatpush.bf16.xpose.msra.mxu0 %v3074
    %6577 = vmatmul.bf16.gmra.mxu0 %v875
    %v6578 = vpop.f32.mrf.mxu0
    %v6579 = vadd.f32 %v6566, %v6578
    %v6580 = vpop.f32.mrf.mxu0
    %6581 = vdwg.mxu0
    %6582 = vmatpush.bf16.xpose.msra.mxu0 0
    %6583 = vmatpush.bf16.xpose.msra.mxu0 0
    %6584 = vmatpush.bf16.xpose.msra.mxu0 0
    %6585 = vmatpush.bf16.xpose.msra.mxu0 0
    %6586 = vmatpush.bf16.xpose.msra.mxu0 %v3603
    %6587 = vmatpush.bf16.xpose.msra.mxu0 %v3427
    %6588 = vmatpush.bf16.xpose.msra.mxu0 %v3251
    %6589 = vmatpush.bf16.xpose.msra.mxu0 %v3075
    %6590 = vmatmul.bf16.gmra.mxu0 %v876
    %v6591 = vpop.f32.mrf.mxu0
    %v6592 = vadd.f32 %v6579, %v6591
    %v6593 = vpop.f32.mrf.mxu0
    %6594 = vdwg.mxu0
    %6595 = vmatpush.bf16.xpose.msra.mxu0 0
    %6596 = vmatpush.bf16.xpose.msra.mxu0 0
    %6597 = vmatpush.bf16.xpose.msra.mxu0 0
    %6598 = vmatpush.bf16.xpose.msra.mxu0 0
    %6599 = vmatpush.bf16.xpose.msra.mxu0 %v4318
    %6600 = vmatpush.bf16.xpose.msra.mxu0 %v4315
    %6601 = vmatpush.bf16.xpose.msra.mxu0 %v4312
    %6602 = vmatpush.bf16.xpose.msra.mxu0 %v4309
    %6603 = vmatmul.bf16.gmra.mxu0 %v4306
    %v6604 = vpop.f32.mrf.mxu0
    %v6605 = vadd.f32 %v6592, %v6604
    %v6606 = vpop.f32.mrf.mxu0
    %6607 = vdwg.mxu0
    %v6608 = vmax.f32 %v6605, 0.0
    %vm6609 = vcmask 435200
    %6610 = vst.msk [vmem:[#allocation2] sm:$0x3] %vm6609, %v6608
    // Predicated region
    $region14: #{ln_grating_forward.1} parent=1 // pred_check
      _
    $region15: #{ln_grating_forward.1} parent=1 // pred_check_branch
      %6612 = sbr.rel (0) target = $region17
    $region16: #{ln_grating_forward.1} parent=1 // pred_region
      %6614 = vsyncadd [#allocation3], 0
      %s6616 = sshll.u32 [#allocation2], 4
      %s6617 = int_to_ptr.vmem [resolvable:$true] %s6616
      %s6618 = sshll.u32 %s3, 4
      %s6619 = int_to_ptr.hbm [resolvable:$true] %s6618
      %6621 = dma.vmem_to_hbm [thread:$0]  %s6617, 32, %s6619, [#allocation3]
    $region17: #{ln_grating_forward.1} parent=1 // pred_fallthru
      _
    // Predicated region
    $region18: #{ln_grating_forward.1} parent=1 // pred_check
      _
    $region19: #{ln_grating_forward.1} parent=1 // pred_check_branch
      %6623 = sbr.rel (0) target = $region21
    $region20: #{ln_grating_forward.1} parent=1 // pred_region
      %6625 = dma.done [#allocation3], 32
    $region21: #{ln_grating_forward.1} parent=1 // pred_fallthru
      _
    %6626 = vsyncpa [#allocation3], 1

</llo_original>
